<compile_context>
chip_gen: v7x
topology: tpu7x:2x2x1
jax: 0.10.0
libtpu: 0.0.40
codegen_flags: <defaults>
</compile_context>

<pallas_src>
import functools
import math

import jax
import jax.numpy as jnp
from jax.experimental import pallas as pl
from jax.experimental.pallas import tpu as pltpu

# Matmul (MXU) operand dtype; accumulation and all elementwise math stay float32.
MM_DTYPE = jnp.bfloat16


# --------------------------------------------------------------------------
# In-kernel helpers (traced inside the fused kernel)
# --------------------------------------------------------------------------
def _padding_mask(x, pad_value):
    """mask[t, n, 0] = 1.0 iff ALL x[t, n, :] != pad_value.

    Matches the reference `(x != padValue).all(-1).float()` exactly, including the
    field/doc levels where the sentinel is the -1.0 written by `x*m - (1-m)`.
    """
    return jnp.min(jnp.where(x != pad_value, 1.0, 0.0), axis=2, keepdims=True)


def _bigru_level(x, mask, wih, whh, bi, bhn, H, after, merge):
    """Bidirectional 1-layer GRU + direction merge + optional after-linears (ReLU)
    + masking (x*m - (1-m)) + max-pool over time.

    x    : (T, N, D) time-major inputs (float32)
    mask : (T, N, 1) float {0,1} or None
    wih  : (D, 6H) bf16, columns [r_f r_b z_f z_b n_f n_b]
    whh  : (2H, 6H) bf16, rows [h_f | h_b], same column layout (block structured)
    bi   : (1, 6H) f32  (b_ih with the r/z parts of b_hh pre-folded in)
    bhn  : (1, 2H) f32  (b_hh for the n gate, applied inside r*(...))
    Returns pooled features (N, H) float32.
    """
    T, N, D = x.shape
    H2, H4, H6 = 2 * H, 4 * H, 6 * H

    # Hoisted input projection: one MXU matmul for both directions, all timesteps.
    gi = jnp.dot(x.reshape(T * N, D).astype(MM_DTYPE), wih,
                 preferred_element_type=jnp.float32) + bi
    gi = gi.reshape(T, N, H6)

    # Per-step input gates with the backward direction's columns time-reversed.
    # This is a lane select between steps s and T-1-s, built OFF the recurrent
    # dependency chain (it does not touch h).
    fwd4 = (jax.lax.broadcasted_iota(jnp.int32, (1, H4), 1) % H2) < H
    fwd2 = jax.lax.broadcasted_iota(jnp.int32, (1, H2), 1) < H
    gis_sig = [jnp.where(fwd4, gi[s, :, :H4], gi[T - 1 - s, :, :H4]) for s in range(T)]
    gis_n = [jnp.where(fwd2, gi[s, :, H4:], gi[T - 1 - s, :, H4:]) for s in range(T)]

    # Fully-unrolled recurrence. Carry h = [h_f | h_b]; one fused (N,2H)x(2H,6H)
    # MXU matmul per step, ONE sigmoid over 4H, ONE tanh over 2H, no concats.
    h = jnp.zeros((N, H2), jnp.float32)
    hs = []
    for s in range(T):
        gh = jnp.dot(h.astype(MM_DTYPE), whh, preferred_element_type=jnp.float32)
        sig = jax.nn.sigmoid(gh[:, :H4] + gis_sig[s])          # [r_f r_b z_f z_b]
        r, z = sig[:, :H2], sig[:, H2:]
        n = jnp.tanh(gis_n[s] + r * (gh[:, H4:] + bhn))
        h = z * (h - n) + n                                    # == (1-z)*n + z*h
        hs.append(h)

    # Direction merge: out_f(t) = hs[t][:, :H], out_b(t) = hs[T-1-t][:, H:].
    if merge == "avg":
        merged = [(hs[t][:, :H] + hs[T - 1 - t][:, H:]) * 0.5 for t in range(T)]
    else:  # 'max'
        merged = [jnp.maximum(hs[t][:, :H], hs[T - 1 - t][:, H:]) for t in range(T)]

    # after-features linears (phrase level only) as one (T*N, H) matmul per layer.
    if after:
        feat = jnp.concatenate(merged, axis=0)                 # (T*N, H)
        for (w, b) in after:
            feat = jnp.maximum(
                jnp.dot(feat.astype(MM_DTYPE), w,
                        preferred_element_type=jnp.float32) + b, 0.0)
        merged = [feat[t * N:(t + 1) * N] for t in range(T)]

    # mask (reference order: AFTER the after-layers) + max-pool over time,
    # without materializing a (T, N, H) tensor.
    pooled = None
    for t in range(T):
        row = merged[t]
        if mask is not None:
            m = mask[t]                                        # (N, 1)
            row = row * m - (1.0 - m)
        pooled = row if pooled is None else jnp.maximum(pooled, row)
    return pooled


# --------------------------------------------------------------------------
# The fused kernel: one grid step = one block of whole documents
# --------------------------------------------------------------------------
def _fused_forward_kernel(*refs, dims, n_after, n_hidden, masking, merge, out_dim):
    L, P, F, Hp, Hf, Hd = dims
    it = iter(refs)
    x_ref = next(it)
    p_g = [next(it)[...] for _ in range(4)]                     # phrase GRU (packed)
    after = [(next(it)[...], next(it)[...]) for _ in range(n_after)]
    f_g = [next(it)[...] for _ in range(4)]                     # field GRU (packed)
    d_g = [next(it)[...] for _ in range(4)]                     # doc GRU (packed)
    hidden = [(next(it)[...], next(it)[...]) for _ in range(n_hidden)]
    ow = next(it)[...]
    ob = next(it)[...]
    out_ref = next(it)

    x5 = x_ref[...]                        # (L, P, F, bblk, V): time-major, doc-minor
    bblk, V = x5.shape[3], x5.shape[4]

    # ---- phrase level: batch order (p, f, d), time = word index l ----------
    x = x5.reshape(L, P * F * bblk, V)
    mask = _padding_mask(x, 0.0) if masking else None
    x = _bigru_level(x, mask, *p_g, Hp, after, merge)           # (P*F*bblk, Hp)

    # ---- field level: batch (f, d), time = phrase p (pure reshape) ---------
    x = x.reshape(P, F * bblk, Hp)
    mask = _padding_mask(x, -1.0) if masking else None
    x = _bigru_level(x, mask, *f_g, Hf, [], merge)              # (F*bblk, Hf)

    # ---- doc level: batch d, time = field f (pure reshape) -----------------
    x = x.reshape(F, bblk, Hf)
    mask = _padding_mask(x, -1.0) if masking else None
    x = _bigru_level(x, mask, *d_g, Hd, [], merge)              # (bblk, Hd)

    # ---- head: hidden linears + out layer (+ sigmoid for outDim == 1) ------
    for (w, b) in hidden:
        x = jnp.maximum(
            jnp.dot(x.astype(MM_DTYPE), w, preferred_element_type=jnp.float32) + b, 0.0)
    y = jnp.dot(x.astype(MM_DTYPE), ow, preferred_element_type=jnp.float32) + ob
    if out_dim == 1:
        y = jax.nn.sigmoid(y)
    out_ref[...] = y
    # TODO(synk): nn.Dropout layers are configured with p=0.0 (inference identity); not modeled.


# --------------------------------------------------------------------------
# Parameter init (PyTorch-style uniform ranges) + packing for the fused kernel
# --------------------------------------------------------------------------
def _gru_dir_raw(keys, D, H):
    k = 1.0 / math.sqrt(H)
    u = lambda kk, shape: jax.random.uniform(kk, shape, jnp.float32, -k, k)
    return (u(keys[0], (3 * H, D)), u(keys[1], (3 * H, H)),
            u(keys[2], (3 * H,)), u(keys[3], (3 * H,)))


def gru_params_packed(key, D, H):
    """Pack PyTorch-layout bidirectional GRU weights for the fused kernel.

    Column layout (H-wide blocks): [r_f, r_b, z_f, z_b, n_f, n_b].  Returns
    (wih (D,6H) bf16, whh (2H,6H) bf16, bi (1,6H) f32, bhn (1,2H) f32) with the
    r/z parts of b_hh folded into bi (exact for GRU semantics).
    """
    ks = jax.random.split(key, 8)
    wih_f, whh_f, bih_f, bhh_f = _gru_dir_raw(ks[0:4], D, H)
    wih_b, whh_b, bih_b, bhh_b = _gru_dir_raw(ks[4:8], D, H)
    gw = lambda w, i: w[i * H:(i + 1) * H].T       # (in_dim, H) gate block
    gb = lambda b, i: b[i * H:(i + 1) * H]
    wih = jnp.concatenate([gw(wih_f, 0), gw(wih_b, 0), gw(wih_f, 1),
                           gw(wih_b, 1), gw(wih_f, 2), gw(wih_b, 2)], axis=1)
    zH = jnp.zeros((H, H), jnp.float32)
    whh = jnp.concatenate(
        [jnp.concatenate([gw(whh_f, 0), zH, gw(whh_f, 1), zH, gw(whh_f, 2), zH], axis=1),
         jnp.concatenate([zH, gw(whh_b, 0), zH, gw(whh_b, 1), zH, gw(whh_b, 2)], axis=1)],
        axis=0)                                    # (2H, 6H), rows = [h_f | h_b]
    bi = jnp.concatenate([gb(bih_f, 0) + gb(bhh_f, 0), gb(bih_b, 0) + gb(bhh_b, 0),
                          gb(bih_f, 1) + gb(bhh_f, 1), gb(bih_b, 1) + gb(bhh_b, 1),
                          gb(bih_f, 2), gb(bih_b, 2)]).reshape(1, 6 * H)
    bhn = jnp.concatenate([gb(bhh_f, 2), gb(bhh_b, 2)]).reshape(1, 2 * H)
    return (wih.astype(MM_DTYPE), whh.astype(MM_DTYPE), bi, bhn)


def linear_params(key, D, O):
    k = 1.0 / math.sqrt(D)
    k1, k2 = jax.random.split(key)
    w = jax.random.uniform(k1, (O, D), jnp.float32, -k, k)
    b = jax.random.uniform(k2, (O,), jnp.float32, -k, k)
    return (w.T.astype(MM_DTYPE), b.reshape(1, O))


def init_params(key, conf):
    keys = jax.random.split(key, 6)
    if conf["hiddenLayers"] > 0:
        hidden_dim = conf["hiddenDim"] if conf["hiddenDim"] is not None else conf["outDim"]
    else:
        hidden_dim = conf["docFeaturesDim"]
    return {
        "phrase_gru": gru_params_packed(keys[0], conf["vecLen"], conf["phraseFeaturesDim"]),
        "field_gru": gru_params_packed(keys[1], conf["phraseFeaturesDim"], conf["fieldFeaturesDim"]),
        "doc_gru": gru_params_packed(keys[2], conf["fieldFeaturesDim"], conf["docFeaturesDim"]),
        "after": [linear_params(k, conf["phraseFeaturesDim"], conf["phraseFeaturesDim"])
                  for k in jax.random.split(keys[3], conf["afterFeaturesLayers"])]
                 if conf["afterFeaturesLayers"] > 0 else [],
        "hidden": [linear_params(k, conf["docFeaturesDim"], hidden_dim)
                   for k in jax.random.split(keys[4], conf["hiddenLayers"])]
                  if conf["hiddenLayers"] > 0 else [],
        "out": linear_params(keys[5], hidden_dim, conf["outDim"]),
    }


# --------------------------------------------------------------------------
# Forward pass: pallas_call with a parallel 1-D grid over documents
# --------------------------------------------------------------------------
def _pick_doc_block(B, F, P):
    """Docs per grid step: aim for >=256 rows per recurrent matmul, respect the
    Mosaic sublane rule (block dim is a multiple of 8 or the full extent) and
    require it to divide B."""
    want = max(1, -(-256 // (F * P)))
    if want >= B:
        return B
    d = 8 * (-(-want // 8))
    while d < B:
        if B % d == 0:
            return d
        d += 8
    return B


def _resident_spec(shape):
    nd = len(shape)
    return pl.BlockSpec(shape, lambda i, _nd=nd: (0,) * _nd)   # constant -> fetched once


def _vmem_limit_bytes(bblk, conf):
    L, P, F, V = conf["phraseLen"], conf["numPhrases"], conf["numFields"], conf["vecLen"]
    Hp = conf["phraseFeaturesDim"]
    n1 = bblk * F * P
    x_blk = 2 * L * P * F * bblk * V * 4                       # double-buffered x block
    work = L * n1 * (6 * Hp + 6 * Hp + 2 * Hp + 2 * Hp) * 4    # gi + gi_steps + hs + feat
    est = x_blk + work + (4 << 20)
    return int(min(max(2 * est, 16 << 20), 48 << 20))


def forward(params, x, conf):
    B = x.shape[0]
    L, P, F, V = conf["phraseLen"], conf["numPhrases"], conf["numFields"], conf["vecLen"]
    Hp, Hf, Hd = conf["phraseFeaturesDim"], conf["fieldFeaturesDim"], conf["docFeaturesDim"]

    # Time-major, document-minor layout (L, P, F, B, V): free leading-axis per-step
    # slices in every level and pure-reshape level transitions inside the kernel.
    x_tm = jnp.transpose(x, (3, 2, 1, 0, 4))

    bblk = _pick_doc_block(B, F, P)
    assert B % bblk == 0
    grid = (B // bblk,)

    weights = []
    weights += list(params["phrase_gru"])
    for wb in params["after"]:
        weights += list(wb)
    weights += list(params["field_gru"])
    weights += list(params["doc_gru"])
    for wb in params["hidden"]:
        weights += list(wb)
    weights += list(params["out"])

    in_specs = [pl.BlockSpec((L, P, F, bblk, V), lambda i: (0, 0, 0, i, 0))]
    in_specs += [_resident_spec(w.shape) for w in weights]
    # TODO(synk): the many tiny bias/weight arrays could be consolidated into fewer
    # concatenated VMEM inputs (or SMEM) to cut DMA-descriptor count; minor.

    kernel = functools.partial(
        _fused_forward_kernel,
        dims=(L, P, F, Hp, Hf, Hd),
        n_after=len(params["after"]),
        n_hidden=len(params["hidden"]),
        masking=bool(conf["masking"]),
        merge=conf["bidirectionalMerge"],
        out_dim=conf["outDim"],
    )
    return pl.pallas_call(
        kernel,
        out_shape=jax.ShapeDtypeStruct((B, conf["outDim"]), jnp.float32),
        grid=grid,
        in_specs=in_specs,
        out_specs=pl.BlockSpec((bblk, conf["outDim"]), lambda i: (i, 0)),
        compiler_params=pltpu.CompilerParams(
            dimension_semantics=("parallel",),       # docs independent -> megacore/v7x sharding
            vmem_limit_bytes=_vmem_limit_bytes(bblk, conf)),
    )(x_tm, *weights)


if __name__ == "__main__":
    conf = dict(
        rnnType="GRU", vecLen=16, phraseLen=8, numPhrases=4, numFields=2,
        phraseFeaturesDim=32, fieldFeaturesDim=32, docFeaturesDim=32,
        phraseFeaturesLayers=1, fieldFeaturesLayers=1, docFeaturesLayers=1,
        bidirectionalMerge="avg", masking=True,
        afterFeaturesLayers=1, hiddenLayers=1, hiddenDim=16, outDim=1,
        phraseDropout=0.0, fieldDropout=0.0, docDropout=0.0, featuresDropout=0.0,
    )

    key = jax.random.PRNGKey(0)
    pkey, xkey = jax.random.split(key)
    params = init_params(pkey, conf)

    B = 2  # documents
    x = jax.random.normal(
        xkey,
        (B, conf["numFields"], conf["numPhrases"], conf["phraseLen"], conf["vecLen"]),
        jnp.float32,
    )
    # zero out one whole phrase per doc to exercise the masking path end-to-end
    x = x.at[:, 0, -1, :, :].set(0.0)

    fwd = jax.jit(lambda p, xin: forward(p, xin, conf))
    out = fwd(params, x)
    out = jax.block_until_ready(out)
    assert out.shape == (B, conf["outDim"]), out.shape
    assert bool(jnp.all(jnp.isfinite(out)))
    assert bool(jnp.all((out >= 0.0) & (out <= 1.0)))
    print("KERNEL_OK")
</pallas_src>

<mosaic_0001>
module attributes {stable_mosaic.version = 11 : i64} {
  func.func @_fused_forward_kernel(%arg0: i32, %arg1: memref<8x4x2x2x16xf32, #tpu.memory_space<vmem>>, %arg2: memref<16x192xbf16, #tpu.memory_space<vmem>>, %arg3: memref<64x192xbf16, #tpu.memory_space<vmem>>, %arg4: memref<1x192xf32, #tpu.memory_space<vmem>>, %arg5: memref<1x64xf32, #tpu.memory_space<vmem>>, %arg6: memref<32x32xbf16, #tpu.memory_space<vmem>>, %arg7: memref<1x32xf32, #tpu.memory_space<vmem>>, %arg8: memref<32x192xbf16, #tpu.memory_space<vmem>>, %arg9: memref<64x192xbf16, #tpu.memory_space<vmem>>, %arg10: memref<1x192xf32, #tpu.memory_space<vmem>>, %arg11: memref<1x64xf32, #tpu.memory_space<vmem>>, %arg12: memref<32x192xbf16, #tpu.memory_space<vmem>>, %arg13: memref<64x192xbf16, #tpu.memory_space<vmem>>, %arg14: memref<1x192xf32, #tpu.memory_space<vmem>>, %arg15: memref<1x64xf32, #tpu.memory_space<vmem>>, %arg16: memref<32x16xbf16, #tpu.memory_space<vmem>>, %arg17: memref<1x16xf32, #tpu.memory_space<vmem>>, %arg18: memref<16x1xbf16, #tpu.memory_space<vmem>>, %arg19: memref<1x1xf32, #tpu.memory_space<vmem>>, %arg20: memref<2x1xf32, #tpu.memory_space<vmem>>) attributes {dimension_semantics = [#tpu.dimension_semantics<parallel>], iteration_bounds = array<i64: 1>, scalar_prefetch = 0 : i64, scratch_operands = 0 : i64, tpu.core_type = #tpu.core_type<tc>, window_params = [{transform_indices = @transform_0, window_bounds = array<i64: 8, 4, 2, 2, 16>}, {pipeline_mode = #tpu.pipeline_mode<synchronous>, transform_indices = @transform_1, window_bounds = array<i64: 16, 192>}, {pipeline_mode = #tpu.pipeline_mode<synchronous>, transform_indices = @transform_2, window_bounds = array<i64: 64, 192>}, {pipeline_mode = #tpu.pipeline_mode<synchronous>, transform_indices = @transform_3, window_bounds = array<i64: 1, 192>}, {pipeline_mode = #tpu.pipeline_mode<synchronous>, transform_indices = @transform_4, window_bounds = array<i64: 1, 64>}, {pipeline_mode = #tpu.pipeline_mode<synchronous>, transform_indices = @transform_5, window_bounds = array<i64: 32, 32>}, {pipeline_mode = #tpu.pipeline_mode<synchronous>, transform_indices = @transform_6, window_bounds = array<i64: 1, 32>}, {pipeline_mode = #tpu.pipeline_mode<synchronous>, transform_indices = @transform_7, window_bounds = array<i64: 32, 192>}, {pipeline_mode = #tpu.pipeline_mode<synchronous>, transform_indices = @transform_8, window_bounds = array<i64: 64, 192>}, {pipeline_mode = #tpu.pipeline_mode<synchronous>, transform_indices = @transform_9, window_bounds = array<i64: 1, 192>}, {pipeline_mode = #tpu.pipeline_mode<synchronous>, transform_indices = @transform_10, window_bounds = array<i64: 1, 64>}, {pipeline_mode = #tpu.pipeline_mode<synchronous>, transform_indices = @transform_11, window_bounds = array<i64: 32, 192>}, {pipeline_mode = #tpu.pipeline_mode<synchronous>, transform_indices = @transform_12, window_bounds = array<i64: 64, 192>}, {pipeline_mode = #tpu.pipeline_mode<synchronous>, transform_indices = @transform_13, window_bounds = array<i64: 1, 192>}, {pipeline_mode = #tpu.pipeline_mode<synchronous>, transform_indices = @transform_14, window_bounds = array<i64: 1, 64>}, {pipeline_mode = #tpu.pipeline_mode<synchronous>, transform_indices = @transform_15, window_bounds = array<i64: 32, 16>}, {pipeline_mode = #tpu.pipeline_mode<synchronous>, transform_indices = @transform_16, window_bounds = array<i64: 1, 16>}, {pipeline_mode = #tpu.pipeline_mode<synchronous>, transform_indices = @transform_17, window_bounds = array<i64: 16, 1>}, {pipeline_mode = #tpu.pipeline_mode<synchronous>, transform_indices = @transform_18, window_bounds = array<i64: 1, 1>}, {transform_indices = @transform_19, window_bounds = array<i64: 2, 1>}]} {
    %c0 = arith.constant 0 : index
    %c0_0 = arith.constant 0 : index
    %0 = vector.load %arg2[%c0, %c0_0] : memref<16x192xbf16, #tpu.memory_space<vmem>>, vector<16x192xbf16>
    %c0_1 = arith.constant 0 : index
    %c0_2 = arith.constant 0 : index
    %1 = vector.load %arg3[%c0_1, %c0_2] : memref<64x192xbf16, #tpu.memory_space<vmem>>, vector<64x192xbf16>
    %c0_3 = arith.constant 0 : index
    %c0_4 = arith.constant 0 : index
    %2 = vector.load %arg4[%c0_3, %c0_4] : memref<1x192xf32, #tpu.memory_space<vmem>>, vector<1x192xf32>
    %c0_5 = arith.constant 0 : index
    %c0_6 = arith.constant 0 : index
    %3 = vector.load %arg5[%c0_5, %c0_6] : memref<1x64xf32, #tpu.memory_space<vmem>>, vector<1x64xf32>
    %c0_7 = arith.constant 0 : index
    %c0_8 = arith.constant 0 : index
    %4 = vector.load %arg6[%c0_7, %c0_8] : memref<32x32xbf16, #tpu.memory_space<vmem>>, vector<32x32xbf16>
    %c0_9 = arith.constant 0 : index
    %c0_10 = arith.constant 0 : index
    %5 = vector.load %arg7[%c0_9, %c0_10] : memref<1x32xf32, #tpu.memory_space<vmem>>, vector<1x32xf32>
    %c0_11 = arith.constant 0 : index
    %c0_12 = arith.constant 0 : index
    %6 = vector.load %arg8[%c0_11, %c0_12] : memref<32x192xbf16, #tpu.memory_space<vmem>>, vector<32x192xbf16>
    %c0_13 = arith.constant 0 : index
    %c0_14 = arith.constant 0 : index
    %7 = vector.load %arg9[%c0_13, %c0_14] : memref<64x192xbf16, #tpu.memory_space<vmem>>, vector<64x192xbf16>
    %c0_15 = arith.constant 0 : index
    %c0_16 = arith.constant 0 : index
    %8 = vector.load %arg10[%c0_15, %c0_16] : memref<1x192xf32, #tpu.memory_space<vmem>>, vector<1x192xf32>
    %c0_17 = arith.constant 0 : index
    %c0_18 = arith.constant 0 : index
    %9 = vector.load %arg11[%c0_17, %c0_18] : memref<1x64xf32, #tpu.memory_space<vmem>>, vector<1x64xf32>
    %c0_19 = arith.constant 0 : index
    %c0_20 = arith.constant 0 : index
    %10 = vector.load %arg12[%c0_19, %c0_20] : memref<32x192xbf16, #tpu.memory_space<vmem>>, vector<32x192xbf16>
    %c0_21 = arith.constant 0 : index
    %c0_22 = arith.constant 0 : index
    %11 = vector.load %arg13[%c0_21, %c0_22] : memref<64x192xbf16, #tpu.memory_space<vmem>>, vector<64x192xbf16>
    %c0_23 = arith.constant 0 : index
    %c0_24 = arith.constant 0 : index
    %12 = vector.load %arg14[%c0_23, %c0_24] : memref<1x192xf32, #tpu.memory_space<vmem>>, vector<1x192xf32>
    %c0_25 = arith.constant 0 : index
    %c0_26 = arith.constant 0 : index
    %13 = vector.load %arg15[%c0_25, %c0_26] : memref<1x64xf32, #tpu.memory_space<vmem>>, vector<1x64xf32>
    %c0_27 = arith.constant 0 : index
    %c0_28 = arith.constant 0 : index
    %14 = vector.load %arg16[%c0_27, %c0_28] : memref<32x16xbf16, #tpu.memory_space<vmem>>, vector<32x16xbf16>
    %c0_29 = arith.constant 0 : index
    %c0_30 = arith.constant 0 : index
    %15 = vector.load %arg17[%c0_29, %c0_30] : memref<1x16xf32, #tpu.memory_space<vmem>>, vector<1x16xf32>
    %c0_31 = arith.constant 0 : index
    %c0_32 = arith.constant 0 : index
    %16 = vector.load %arg18[%c0_31, %c0_32] : memref<16x1xbf16, #tpu.memory_space<vmem>>, vector<16x1xbf16>
    %c0_33 = arith.constant 0 : index
    %c0_34 = arith.constant 0 : index
    %17 = vector.load %arg19[%c0_33, %c0_34] : memref<1x1xf32, #tpu.memory_space<vmem>>, vector<1x1xf32>
    %c0_35 = arith.constant 0 : index
    %c0_36 = arith.constant 0 : index
    %c0_37 = arith.constant 0 : index
    %c0_38 = arith.constant 0 : index
    %c0_39 = arith.constant 0 : index
    %18 = vector.load %arg1[%c0_35, %c0_36, %c0_37, %c0_38, %c0_39] : memref<8x4x2x2x16xf32, #tpu.memory_space<vmem>>, vector<8x4x2x2x16xf32>
    %19 = vector.shape_cast %18 : vector<8x4x2x2x16xf32> to vector<8x16x16xf32>
    %cst = arith.constant 0.000000e+00 : f32
    %20 = vector.broadcast %cst : f32 to vector<8x16x16xf32>
    %21 = arith.cmpf one, %19, %20 : vector<8x16x16xf32>
    %cst_40 = arith.constant 1.000000e+00 : f32
    %cst_41 = arith.constant 0.000000e+00 : f32
    %22 = vector.broadcast %cst_40 : f32 to vector<8x16x16xf32>
    %23 = vector.broadcast %cst_41 : f32 to vector<8x16x16xf32>
    %24 = arith.select %21, %22, %23 : vector<8x16x16xi1>, vector<8x16x16xf32>
    %cst_42 = arith.constant dense<0x7F800000> : vector<8x16xf32>
    %25 = vector.multi_reduction <minimumf>, %24, %cst_42 [2] : vector<8x16x16xf32> to vector<8x16xf32>
    %26 = vector.shape_cast %25 : vector<8x16xf32> to vector<8x16x1xf32>
    %27 = vector.shape_cast %19 : vector<8x16x16xf32> to vector<128x16xf32>
    %28 = arith.truncf %27 : vector<128x16xf32> to vector<128x16xbf16>
    %cst_43 = arith.constant dense<0.000000e+00> : vector<128x192xf32>
    %29 = tpu.matmul %28, %0, %cst_43 {dimension_numbers = #tpu.dot_dimension_numbers<[1], [0], [0], [1], [0, 0, 1, 1], [], []>} : vector<128x16xbf16>, vector<16x192xbf16>, vector<128x192xf32> -> vector<128x192xf32>
    %30 = vector.broadcast %2 : vector<1x192xf32> to vector<128x192xf32>
    %31 = arith.addf %29, %30 : vector<128x192xf32>
    %32 = vector.shape_cast %31 : vector<128x192xf32> to vector<8x16x192xf32>
    %33 = tpu.iota {dimensions = array<i32: 1>} : vector<1x128xi32>
    %c64_i32 = arith.constant 64 : i32
    %c0_i32 = arith.constant 0 : i32
    %34 = arith.cmpi eq, %c64_i32, %c0_i32 : i32
    %c1_i32 = arith.constant 1 : i32
    %35 = arith.select %34, %c1_i32, %c64_i32 : i32
    %36 = vector.broadcast %35 : i32 to vector<1x128xi32>
    %37 = arith.remsi %33, %36 : vector<1x128xi32>
    %c0_i32_44 = arith.constant 0 : i32
    %38 = vector.broadcast %c0_i32_44 : i32 to vector<1x128xi32>
    %39 = arith.cmpi ne, %37, %38 : vector<1x128xi32>
    %c0_i32_45 = arith.constant 0 : i32
    %40 = vector.broadcast %c0_i32_45 : i32 to vector<1x128xi32>
    %41 = arith.cmpi slt, %37, %40 : vector<1x128xi32>
    %c0_i32_46 = arith.constant 0 : i32
    %42 = arith.cmpi slt, %35, %c0_i32_46 : i32
    %43 = vector.broadcast %42 : i1 to vector<1x128xi1>
    %44 = vector.broadcast %43 : vector<1x128xi1> to vector<1x128xi1>
    %45 = arith.xori %41, %44 : vector<1x128xi1>
    %46 = arith.andi %45, %39 : vector<1x128xi1>
    %47 = vector.broadcast %35 : i32 to vector<1x128xi32>
    %48 = arith.addi %37, %47 : vector<1x128xi32>
    %49 = arith.select %46, %48, %37 : vector<1x128xi1>, vector<1x128xi32>
    %c32_i32 = arith.constant 32 : i32
    %50 = vector.broadcast %c32_i32 : i32 to vector<1x128xi32>
    %51 = arith.cmpi slt, %49, %50 : vector<1x128xi32>
    %52 = tpu.iota {dimensions = array<i32: 1>} : vector<1x64xi32>
    %c32_i32_47 = arith.constant 32 : i32
    %53 = vector.broadcast %c32_i32_47 : i32 to vector<1x64xi32>
    %54 = arith.cmpi slt, %52, %53 : vector<1x64xi32>
    %55 = vector.extract_strided_slice %32 {offsets = [0, 0, 0], sizes = [1, 16, 128], strides = [1, 1, 1]} : vector<8x16x192xf32> to vector<1x16x128xf32>
    %56 = vector.shape_cast %55 : vector<1x16x128xf32> to vector<16x128xf32>
    %57 = vector.extract_strided_slice %32 {offsets = [7, 0, 0], sizes = [1, 16, 128], strides = [1, 1, 1]} : vector<8x16x192xf32> to vector<1x16x128xf32>
    %58 = vector.shape_cast %57 : vector<1x16x128xf32> to vector<16x128xf32>
    %59 = vector.shape_cast %51 : vector<1x128xi1> to vector<1x128xi1>
    %60 = vector.broadcast %59 : vector<1x128xi1> to vector<16x128xi1>
    %61 = arith.select %60, %56, %58 : vector<16x128xi1>, vector<16x128xf32>
    %62 = vector.extract_strided_slice %32 {offsets = [1, 0, 0], sizes = [1, 16, 128], strides = [1, 1, 1]} : vector<8x16x192xf32> to vector<1x16x128xf32>
    %63 = vector.shape_cast %62 : vector<1x16x128xf32> to vector<16x128xf32>
    %64 = vector.extract_strided_slice %32 {offsets = [6, 0, 0], sizes = [1, 16, 128], strides = [1, 1, 1]} : vector<8x16x192xf32> to vector<1x16x128xf32>
    %65 = vector.shape_cast %64 : vector<1x16x128xf32> to vector<16x128xf32>
    %66 = vector.shape_cast %51 : vector<1x128xi1> to vector<1x128xi1>
    %67 = vector.broadcast %66 : vector<1x128xi1> to vector<16x128xi1>
    %68 = arith.select %67, %63, %65 : vector<16x128xi1>, vector<16x128xf32>
    %69 = vector.extract_strided_slice %32 {offsets = [2, 0, 0], sizes = [1, 16, 128], strides = [1, 1, 1]} : vector<8x16x192xf32> to vector<1x16x128xf32>
    %70 = vector.shape_cast %69 : vector<1x16x128xf32> to vector<16x128xf32>
    %71 = vector.extract_strided_slice %32 {offsets = [5, 0, 0], sizes = [1, 16, 128], strides = [1, 1, 1]} : vector<8x16x192xf32> to vector<1x16x128xf32>
    %72 = vector.shape_cast %71 : vector<1x16x128xf32> to vector<16x128xf32>
    %73 = vector.shape_cast %51 : vector<1x128xi1> to vector<1x128xi1>
    %74 = vector.broadcast %73 : vector<1x128xi1> to vector<16x128xi1>
    %75 = arith.select %74, %70, %72 : vector<16x128xi1>, vector<16x128xf32>
    %76 = vector.extract_strided_slice %32 {offsets = [3, 0, 0], sizes = [1, 16, 128], strides = [1, 1, 1]} : vector<8x16x192xf32> to vector<1x16x128xf32>
    %77 = vector.shape_cast %76 : vector<1x16x128xf32> to vector<16x128xf32>
    %78 = vector.extract_strided_slice %32 {offsets = [4, 0, 0], sizes = [1, 16, 128], strides = [1, 1, 1]} : vector<8x16x192xf32> to vector<1x16x128xf32>
    %79 = vector.shape_cast %78 : vector<1x16x128xf32> to vector<16x128xf32>
    %80 = vector.shape_cast %51 : vector<1x128xi1> to vector<1x128xi1>
    %81 = vector.broadcast %80 : vector<1x128xi1> to vector<16x128xi1>
    %82 = arith.select %81, %77, %79 : vector<16x128xi1>, vector<16x128xf32>
    %83 = vector.extract_strided_slice %32 {offsets = [4, 0, 0], sizes = [1, 16, 128], strides = [1, 1, 1]} : vector<8x16x192xf32> to vector<1x16x128xf32>
    %84 = vector.shape_cast %83 : vector<1x16x128xf32> to vector<16x128xf32>
    %85 = vector.extract_strided_slice %32 {offsets = [3, 0, 0], sizes = [1, 16, 128], strides = [1, 1, 1]} : vector<8x16x192xf32> to vector<1x16x128xf32>
    %86 = vector.shape_cast %85 : vector<1x16x128xf32> to vector<16x128xf32>
    %87 = vector.shape_cast %51 : vector<1x128xi1> to vector<1x128xi1>
    %88 = vector.broadcast %87 : vector<1x128xi1> to vector<16x128xi1>
    %89 = arith.select %88, %84, %86 : vector<16x128xi1>, vector<16x128xf32>
    %90 = vector.extract_strided_slice %32 {offsets = [5, 0, 0], sizes = [1, 16, 128], strides = [1, 1, 1]} : vector<8x16x192xf32> to vector<1x16x128xf32>
    %91 = vector.shape_cast %90 : vector<1x16x128xf32> to vector<16x128xf32>
    %92 = vector.extract_strided_slice %32 {offsets = [2, 0, 0], sizes = [1, 16, 128], strides = [1, 1, 1]} : vector<8x16x192xf32> to vector<1x16x128xf32>
    %93 = vector.shape_cast %92 : vector<1x16x128xf32> to vector<16x128xf32>
    %94 = vector.shape_cast %51 : vector<1x128xi1> to vector<1x128xi1>
    %95 = vector.broadcast %94 : vector<1x128xi1> to vector<16x128xi1>
    %96 = arith.select %95, %91, %93 : vector<16x128xi1>, vector<16x128xf32>
    %97 = vector.extract_strided_slice %32 {offsets = [6, 0, 0], sizes = [1, 16, 128], strides = [1, 1, 1]} : vector<8x16x192xf32> to vector<1x16x128xf32>
    %98 = vector.shape_cast %97 : vector<1x16x128xf32> to vector<16x128xf32>
    %99 = vector.extract_strided_slice %32 {offsets = [1, 0, 0], sizes = [1, 16, 128], strides = [1, 1, 1]} : vector<8x16x192xf32> to vector<1x16x128xf32>
    %100 = vector.shape_cast %99 : vector<1x16x128xf32> to vector<16x128xf32>
    %101 = vector.shape_cast %51 : vector<1x128xi1> to vector<1x128xi1>
    %102 = vector.broadcast %101 : vector<1x128xi1> to vector<16x128xi1>
    %103 = arith.select %102, %98, %100 : vector<16x128xi1>, vector<16x128xf32>
    %104 = vector.extract_strided_slice %32 {offsets = [7, 0, 0], sizes = [1, 16, 128], strides = [1, 1, 1]} : vector<8x16x192xf32> to vector<1x16x128xf32>
    %105 = vector.shape_cast %104 : vector<1x16x128xf32> to vector<16x128xf32>
    %106 = vector.extract_strided_slice %32 {offsets = [0, 0, 0], sizes = [1, 16, 128], strides = [1, 1, 1]} : vector<8x16x192xf32> to vector<1x16x128xf32>
    %107 = vector.shape_cast %106 : vector<1x16x128xf32> to vector<16x128xf32>
    %108 = vector.shape_cast %51 : vector<1x128xi1> to vector<1x128xi1>
    %109 = vector.broadcast %108 : vector<1x128xi1> to vector<16x128xi1>
    %110 = arith.select %109, %105, %107 : vector<16x128xi1>, vector<16x128xf32>
    %111 = vector.extract_strided_slice %32 {offsets = [0, 0, 128], sizes = [1, 16, 64], strides = [1, 1, 1]} : vector<8x16x192xf32> to vector<1x16x64xf32>
    %112 = vector.shape_cast %111 : vector<1x16x64xf32> to vector<16x64xf32>
    %113 = vector.extract_strided_slice %32 {offsets = [7, 0, 128], sizes = [1, 16, 64], strides = [1, 1, 1]} : vector<8x16x192xf32> to vector<1x16x64xf32>
    %114 = vector.shape_cast %113 : vector<1x16x64xf32> to vector<16x64xf32>
    %115 = vector.shape_cast %54 : vector<1x64xi1> to vector<1x64xi1>
    %116 = vector.broadcast %115 : vector<1x64xi1> to vector<16x64xi1>
    %117 = arith.select %116, %112, %114 : vector<16x64xi1>, vector<16x64xf32>
    %118 = vector.extract_strided_slice %32 {offsets = [1, 0, 128], sizes = [1, 16, 64], strides = [1, 1, 1]} : vector<8x16x192xf32> to vector<1x16x64xf32>
    %119 = vector.shape_cast %118 : vector<1x16x64xf32> to vector<16x64xf32>
    %120 = vector.extract_strided_slice %32 {offsets = [6, 0, 128], sizes = [1, 16, 64], strides = [1, 1, 1]} : vector<8x16x192xf32> to vector<1x16x64xf32>
    %121 = vector.shape_cast %120 : vector<1x16x64xf32> to vector<16x64xf32>
    %122 = vector.shape_cast %54 : vector<1x64xi1> to vector<1x64xi1>
    %123 = vector.broadcast %122 : vector<1x64xi1> to vector<16x64xi1>
    %124 = arith.select %123, %119, %121 : vector<16x64xi1>, vector<16x64xf32>
    %125 = vector.extract_strided_slice %32 {offsets = [2, 0, 128], sizes = [1, 16, 64], strides = [1, 1, 1]} : vector<8x16x192xf32> to vector<1x16x64xf32>
    %126 = vector.shape_cast %125 : vector<1x16x64xf32> to vector<16x64xf32>
    %127 = vector.extract_strided_slice %32 {offsets = [5, 0, 128], sizes = [1, 16, 64], strides = [1, 1, 1]} : vector<8x16x192xf32> to vector<1x16x64xf32>
    %128 = vector.shape_cast %127 : vector<1x16x64xf32> to vector<16x64xf32>
    %129 = vector.shape_cast %54 : vector<1x64xi1> to vector<1x64xi1>
    %130 = vector.broadcast %129 : vector<1x64xi1> to vector<16x64xi1>
    %131 = arith.select %130, %126, %128 : vector<16x64xi1>, vector<16x64xf32>
    %132 = vector.extract_strided_slice %32 {offsets = [3, 0, 128], sizes = [1, 16, 64], strides = [1, 1, 1]} : vector<8x16x192xf32> to vector<1x16x64xf32>
    %133 = vector.shape_cast %132 : vector<1x16x64xf32> to vector<16x64xf32>
    %134 = vector.extract_strided_slice %32 {offsets = [4, 0, 128], sizes = [1, 16, 64], strides = [1, 1, 1]} : vector<8x16x192xf32> to vector<1x16x64xf32>
    %135 = vector.shape_cast %134 : vector<1x16x64xf32> to vector<16x64xf32>
    %136 = vector.shape_cast %54 : vector<1x64xi1> to vector<1x64xi1>
    %137 = vector.broadcast %136 : vector<1x64xi1> to vector<16x64xi1>
    %138 = arith.select %137, %133, %135 : vector<16x64xi1>, vector<16x64xf32>
    %139 = vector.extract_strided_slice %32 {offsets = [4, 0, 128], sizes = [1, 16, 64], strides = [1, 1, 1]} : vector<8x16x192xf32> to vector<1x16x64xf32>
    %140 = vector.shape_cast %139 : vector<1x16x64xf32> to vector<16x64xf32>
    %141 = vector.extract_strided_slice %32 {offsets = [3, 0, 128], sizes = [1, 16, 64], strides = [1, 1, 1]} : vector<8x16x192xf32> to vector<1x16x64xf32>
    %142 = vector.shape_cast %141 : vector<1x16x64xf32> to vector<16x64xf32>
    %143 = vector.shape_cast %54 : vector<1x64xi1> to vector<1x64xi1>
    %144 = vector.broadcast %143 : vector<1x64xi1> to vector<16x64xi1>
    %145 = arith.select %144, %140, %142 : vector<16x64xi1>, vector<16x64xf32>
    %146 = vector.extract_strided_slice %32 {offsets = [5, 0, 128], sizes = [1, 16, 64], strides = [1, 1, 1]} : vector<8x16x192xf32> to vector<1x16x64xf32>
    %147 = vector.shape_cast %146 : vector<1x16x64xf32> to vector<16x64xf32>
    %148 = vector.extract_strided_slice %32 {offsets = [2, 0, 128], sizes = [1, 16, 64], strides = [1, 1, 1]} : vector<8x16x192xf32> to vector<1x16x64xf32>
    %149 = vector.shape_cast %148 : vector<1x16x64xf32> to vector<16x64xf32>
    %150 = vector.shape_cast %54 : vector<1x64xi1> to vector<1x64xi1>
    %151 = vector.broadcast %150 : vector<1x64xi1> to vector<16x64xi1>
    %152 = arith.select %151, %147, %149 : vector<16x64xi1>, vector<16x64xf32>
    %153 = vector.extract_strided_slice %32 {offsets = [6, 0, 128], sizes = [1, 16, 64], strides = [1, 1, 1]} : vector<8x16x192xf32> to vector<1x16x64xf32>
    %154 = vector.shape_cast %153 : vector<1x16x64xf32> to vector<16x64xf32>
    %155 = vector.extract_strided_slice %32 {offsets = [1, 0, 128], sizes = [1, 16, 64], strides = [1, 1, 1]} : vector<8x16x192xf32> to vector<1x16x64xf32>
    %156 = vector.shape_cast %155 : vector<1x16x64xf32> to vector<16x64xf32>
    %157 = vector.shape_cast %54 : vector<1x64xi1> to vector<1x64xi1>
    %158 = vector.broadcast %157 : vector<1x64xi1> to vector<16x64xi1>
    %159 = arith.select %158, %154, %156 : vector<16x64xi1>, vector<16x64xf32>
    %160 = vector.extract_strided_slice %32 {offsets = [7, 0, 128], sizes = [1, 16, 64], strides = [1, 1, 1]} : vector<8x16x192xf32> to vector<1x16x64xf32>
    %161 = vector.shape_cast %160 : vector<1x16x64xf32> to vector<16x64xf32>
    %162 = vector.extract_strided_slice %32 {offsets = [0, 0, 128], sizes = [1, 16, 64], strides = [1, 1, 1]} : vector<8x16x192xf32> to vector<1x16x64xf32>
    %163 = vector.shape_cast %162 : vector<1x16x64xf32> to vector<16x64xf32>
    %164 = vector.shape_cast %54 : vector<1x64xi1> to vector<1x64xi1>
    %165 = vector.broadcast %164 : vector<1x64xi1> to vector<16x64xi1>
    %166 = arith.select %165, %161, %163 : vector<16x64xi1>, vector<16x64xf32>
    %cst_48 = arith.constant 0.000000e+00 : f32
    %167 = vector.broadcast %cst_48 : f32 to vector<16x64xf32>
    %168 = arith.truncf %167 : vector<16x64xf32> to vector<16x64xbf16>
    %cst_49 = arith.constant dense<0.000000e+00> : vector<16x192xf32>
    %169 = tpu.matmul %168, %1, %cst_49 {dimension_numbers = #tpu.dot_dimension_numbers<[1], [0], [0], [1], [0, 0, 1, 1], [], []>} : vector<16x64xbf16>, vector<64x192xbf16>, vector<16x192xf32> -> vector<16x192xf32>
    %170 = vector.extract_strided_slice %169 {offsets = [0, 0], sizes = [16, 128], strides = [1, 1]} : vector<16x192xf32> to vector<16x128xf32>
    %171 = arith.addf %170, %61 : vector<16x128xf32>
    %172 = arith.negf %171 : vector<16x128xf32>
    %173 = math.exp %172 : vector<16x128xf32>
    %cst_50 = arith.constant 1.000000e+00 : f32
    %174 = vector.broadcast %cst_50 : f32 to vector<16x128xf32>
    %175 = arith.addf %174, %173 : vector<16x128xf32>
    %176 = arith.divf %174, %175 : vector<16x128xf32>
    %177 = vector.extract_strided_slice %176 {offsets = [0, 0], sizes = [16, 64], strides = [1, 1]} : vector<16x128xf32> to vector<16x64xf32>
    %178 = vector.extract_strided_slice %176 {offsets = [0, 64], sizes = [16, 64], strides = [1, 1]} : vector<16x128xf32> to vector<16x64xf32>
    %179 = vector.extract_strided_slice %169 {offsets = [0, 128], sizes = [16, 64], strides = [1, 1]} : vector<16x192xf32> to vector<16x64xf32>
    %180 = vector.broadcast %3 : vector<1x64xf32> to vector<16x64xf32>
    %181 = arith.addf %179, %180 : vector<16x64xf32>
    %182 = arith.mulf %177, %181 : vector<16x64xf32>
    %183 = arith.addf %117, %182 : vector<16x64xf32>
    %184 = math.tanh %183 : vector<16x64xf32>
    %185 = arith.subf %167, %184 : vector<16x64xf32>
    %186 = arith.mulf %178, %185 : vector<16x64xf32>
    %187 = arith.addf %186, %184 : vector<16x64xf32>
    %188 = arith.truncf %187 : vector<16x64xf32> to vector<16x64xbf16>
    %cst_51 = arith.constant dense<0.000000e+00> : vector<16x192xf32>
    %189 = tpu.matmul %188, %1, %cst_51 {dimension_numbers = #tpu.dot_dimension_numbers<[1], [0], [0], [1], [0, 0, 1, 1], [], []>} : vector<16x64xbf16>, vector<64x192xbf16>, vector<16x192xf32> -> vector<16x192xf32>
    %190 = vector.extract_strided_slice %189 {offsets = [0, 0], sizes = [16, 128], strides = [1, 1]} : vector<16x192xf32> to vector<16x128xf32>
    %191 = arith.addf %190, %68 : vector<16x128xf32>
    %192 = arith.negf %191 : vector<16x128xf32>
    %193 = math.exp %192 : vector<16x128xf32>
    %cst_52 = arith.constant 1.000000e+00 : f32
    %194 = vector.broadcast %cst_52 : f32 to vector<16x128xf32>
    %195 = arith.addf %194, %193 : vector<16x128xf32>
    %196 = arith.divf %194, %195 : vector<16x128xf32>
    %197 = vector.extract_strided_slice %196 {offsets = [0, 0], sizes = [16, 64], strides = [1, 1]} : vector<16x128xf32> to vector<16x64xf32>
    %198 = vector.extract_strided_slice %196 {offsets = [0, 64], sizes = [16, 64], strides = [1, 1]} : vector<16x128xf32> to vector<16x64xf32>
    %199 = vector.extract_strided_slice %189 {offsets = [0, 128], sizes = [16, 64], strides = [1, 1]} : vector<16x192xf32> to vector<16x64xf32>
    %200 = vector.broadcast %3 : vector<1x64xf32> to vector<16x64xf32>
    %201 = arith.addf %199, %200 : vector<16x64xf32>
    %202 = arith.mulf %197, %201 : vector<16x64xf32>
    %203 = arith.addf %124, %202 : vector<16x64xf32>
    %204 = math.tanh %203 : vector<16x64xf32>
    %205 = arith.subf %187, %204 : vector<16x64xf32>
    %206 = arith.mulf %198, %205 : vector<16x64xf32>
    %207 = arith.addf %206, %204 : vector<16x64xf32>
    %208 = arith.truncf %207 : vector<16x64xf32> to vector<16x64xbf16>
    %cst_53 = arith.constant dense<0.000000e+00> : vector<16x192xf32>
    %209 = tpu.matmul %208, %1, %cst_53 {dimension_numbers = #tpu.dot_dimension_numbers<[1], [0], [0], [1], [0, 0, 1, 1], [], []>} : vector<16x64xbf16>, vector<64x192xbf16>, vector<16x192xf32> -> vector<16x192xf32>
    %210 = vector.extract_strided_slice %209 {offsets = [0, 0], sizes = [16, 128], strides = [1, 1]} : vector<16x192xf32> to vector<16x128xf32>
    %211 = arith.addf %210, %75 : vector<16x128xf32>
    %212 = arith.negf %211 : vector<16x128xf32>
    %213 = math.exp %212 : vector<16x128xf32>
    %cst_54 = arith.constant 1.000000e+00 : f32
    %214 = vector.broadcast %cst_54 : f32 to vector<16x128xf32>
    %215 = arith.addf %214, %213 : vector<16x128xf32>
    %216 = arith.divf %214, %215 : vector<16x128xf32>
    %217 = vector.extract_strided_slice %216 {offsets = [0, 0], sizes = [16, 64], strides = [1, 1]} : vector<16x128xf32> to vector<16x64xf32>
    %218 = vector.extract_strided_slice %216 {offsets = [0, 64], sizes = [16, 64], strides = [1, 1]} : vector<16x128xf32> to vector<16x64xf32>
    %219 = vector.extract_strided_slice %209 {offsets = [0, 128], sizes = [16, 64], strides = [1, 1]} : vector<16x192xf32> to vector<16x64xf32>
    %220 = vector.broadcast %3 : vector<1x64xf32> to vector<16x64xf32>
    %221 = arith.addf %219, %220 : vector<16x64xf32>
    %222 = arith.mulf %217, %221 : vector<16x64xf32>
    %223 = arith.addf %131, %222 : vector<16x64xf32>
    %224 = math.tanh %223 : vector<16x64xf32>
    %225 = arith.subf %207, %224 : vector<16x64xf32>
    %226 = arith.mulf %218, %225 : vector<16x64xf32>
    %227 = arith.addf %226, %224 : vector<16x64xf32>
    %228 = arith.truncf %227 : vector<16x64xf32> to vector<16x64xbf16>
    %cst_55 = arith.constant dense<0.000000e+00> : vector<16x192xf32>
    %229 = tpu.matmul %228, %1, %cst_55 {dimension_numbers = #tpu.dot_dimension_numbers<[1], [0], [0], [1], [0, 0, 1, 1], [], []>} : vector<16x64xbf16>, vector<64x192xbf16>, vector<16x192xf32> -> vector<16x192xf32>
    %230 = vector.extract_strided_slice %229 {offsets = [0, 0], sizes = [16, 128], strides = [1, 1]} : vector<16x192xf32> to vector<16x128xf32>
    %231 = arith.addf %230, %82 : vector<16x128xf32>
    %232 = arith.negf %231 : vector<16x128xf32>
    %233 = math.exp %232 : vector<16x128xf32>
    %cst_56 = arith.constant 1.000000e+00 : f32
    %234 = vector.broadcast %cst_56 : f32 to vector<16x128xf32>
    %235 = arith.addf %234, %233 : vector<16x128xf32>
    %236 = arith.divf %234, %235 : vector<16x128xf32>
    %237 = vector.extract_strided_slice %236 {offsets = [0, 0], sizes = [16, 64], strides = [1, 1]} : vector<16x128xf32> to vector<16x64xf32>
    %238 = vector.extract_strided_slice %236 {offsets = [0, 64], sizes = [16, 64], strides = [1, 1]} : vector<16x128xf32> to vector<16x64xf32>
    %239 = vector.extract_strided_slice %229 {offsets = [0, 128], sizes = [16, 64], strides = [1, 1]} : vector<16x192xf32> to vector<16x64xf32>
    %240 = vector.broadcast %3 : vector<1x64xf32> to vector<16x64xf32>
    %241 = arith.addf %239, %240 : vector<16x64xf32>
    %242 = arith.mulf %237, %241 : vector<16x64xf32>
    %243 = arith.addf %138, %242 : vector<16x64xf32>
    %244 = math.tanh %243 : vector<16x64xf32>
    %245 = arith.subf %227, %244 : vector<16x64xf32>
    %246 = arith.mulf %238, %245 : vector<16x64xf32>
    %247 = arith.addf %246, %244 : vector<16x64xf32>
    %248 = arith.truncf %247 : vector<16x64xf32> to vector<16x64xbf16>
    %cst_57 = arith.constant dense<0.000000e+00> : vector<16x192xf32>
    %249 = tpu.matmul %248, %1, %cst_57 {dimension_numbers = #tpu.dot_dimension_numbers<[1], [0], [0], [1], [0, 0, 1, 1], [], []>} : vector<16x64xbf16>, vector<64x192xbf16>, vector<16x192xf32> -> vector<16x192xf32>
    %250 = vector.extract_strided_slice %249 {offsets = [0, 0], sizes = [16, 128], strides = [1, 1]} : vector<16x192xf32> to vector<16x128xf32>
    %251 = arith.addf %250, %89 : vector<16x128xf32>
    %252 = arith.negf %251 : vector<16x128xf32>
    %253 = math.exp %252 : vector<16x128xf32>
    %cst_58 = arith.constant 1.000000e+00 : f32
    %254 = vector.broadcast %cst_58 : f32 to vector<16x128xf32>
    %255 = arith.addf %254, %253 : vector<16x128xf32>
    %256 = arith.divf %254, %255 : vector<16x128xf32>
    %257 = vector.extract_strided_slice %256 {offsets = [0, 0], sizes = [16, 64], strides = [1, 1]} : vector<16x128xf32> to vector<16x64xf32>
    %258 = vector.extract_strided_slice %256 {offsets = [0, 64], sizes = [16, 64], strides = [1, 1]} : vector<16x128xf32> to vector<16x64xf32>
    %259 = vector.extract_strided_slice %249 {offsets = [0, 128], sizes = [16, 64], strides = [1, 1]} : vector<16x192xf32> to vector<16x64xf32>
    %260 = vector.broadcast %3 : vector<1x64xf32> to vector<16x64xf32>
    %261 = arith.addf %259, %260 : vector<16x64xf32>
    %262 = arith.mulf %257, %261 : vector<16x64xf32>
    %263 = arith.addf %145, %262 : vector<16x64xf32>
    %264 = math.tanh %263 : vector<16x64xf32>
    %265 = arith.subf %247, %264 : vector<16x64xf32>
    %266 = arith.mulf %258, %265 : vector<16x64xf32>
    %267 = arith.addf %266, %264 : vector<16x64xf32>
    %268 = arith.truncf %267 : vector<16x64xf32> to vector<16x64xbf16>
    %cst_59 = arith.constant dense<0.000000e+00> : vector<16x192xf32>
    %269 = tpu.matmul %268, %1, %cst_59 {dimension_numbers = #tpu.dot_dimension_numbers<[1], [0], [0], [1], [0, 0, 1, 1], [], []>} : vector<16x64xbf16>, vector<64x192xbf16>, vector<16x192xf32> -> vector<16x192xf32>
    %270 = vector.extract_strided_slice %269 {offsets = [0, 0], sizes = [16, 128], strides = [1, 1]} : vector<16x192xf32> to vector<16x128xf32>
    %271 = arith.addf %270, %96 : vector<16x128xf32>
    %272 = arith.negf %271 : vector<16x128xf32>
    %273 = math.exp %272 : vector<16x128xf32>
    %cst_60 = arith.constant 1.000000e+00 : f32
    %274 = vector.broadcast %cst_60 : f32 to vector<16x128xf32>
    %275 = arith.addf %274, %273 : vector<16x128xf32>
    %276 = arith.divf %274, %275 : vector<16x128xf32>
    %277 = vector.extract_strided_slice %276 {offsets = [0, 0], sizes = [16, 64], strides = [1, 1]} : vector<16x128xf32> to vector<16x64xf32>
    %278 = vector.extract_strided_slice %276 {offsets = [0, 64], sizes = [16, 64], strides = [1, 1]} : vector<16x128xf32> to vector<16x64xf32>
    %279 = vector.extract_strided_slice %269 {offsets = [0, 128], sizes = [16, 64], strides = [1, 1]} : vector<16x192xf32> to vector<16x64xf32>
    %280 = vector.broadcast %3 : vector<1x64xf32> to vector<16x64xf32>
    %281 = arith.addf %279, %280 : vector<16x64xf32>
    %282 = arith.mulf %277, %281 : vector<16x64xf32>
    %283 = arith.addf %152, %282 : vector<16x64xf32>
    %284 = math.tanh %283 : vector<16x64xf32>
    %285 = arith.subf %267, %284 : vector<16x64xf32>
    %286 = arith.mulf %278, %285 : vector<16x64xf32>
    %287 = arith.addf %286, %284 : vector<16x64xf32>
    %288 = arith.truncf %287 : vector<16x64xf32> to vector<16x64xbf16>
    %cst_61 = arith.constant dense<0.000000e+00> : vector<16x192xf32>
    %289 = tpu.matmul %288, %1, %cst_61 {dimension_numbers = #tpu.dot_dimension_numbers<[1], [0], [0], [1], [0, 0, 1, 1], [], []>} : vector<16x64xbf16>, vector<64x192xbf16>, vector<16x192xf32> -> vector<16x192xf32>
    %290 = vector.extract_strided_slice %289 {offsets = [0, 0], sizes = [16, 128], strides = [1, 1]} : vector<16x192xf32> to vector<16x128xf32>
    %291 = arith.addf %290, %103 : vector<16x128xf32>
    %292 = arith.negf %291 : vector<16x128xf32>
    %293 = math.exp %292 : vector<16x128xf32>
    %cst_62 = arith.constant 1.000000e+00 : f32
    %294 = vector.broadcast %cst_62 : f32 to vector<16x128xf32>
    %295 = arith.addf %294, %293 : vector<16x128xf32>
    %296 = arith.divf %294, %295 : vector<16x128xf32>
    %297 = vector.extract_strided_slice %296 {offsets = [0, 0], sizes = [16, 64], strides = [1, 1]} : vector<16x128xf32> to vector<16x64xf32>
    %298 = vector.extract_strided_slice %296 {offsets = [0, 64], sizes = [16, 64], strides = [1, 1]} : vector<16x128xf32> to vector<16x64xf32>
    %299 = vector.extract_strided_slice %289 {offsets = [0, 128], sizes = [16, 64], strides = [1, 1]} : vector<16x192xf32> to vector<16x64xf32>
    %300 = vector.broadcast %3 : vector<1x64xf32> to vector<16x64xf32>
    %301 = arith.addf %299, %300 : vector<16x64xf32>
    %302 = arith.mulf %297, %301 : vector<16x64xf32>
    %303 = arith.addf %159, %302 : vector<16x64xf32>
    %304 = math.tanh %303 : vector<16x64xf32>
    %305 = arith.subf %287, %304 : vector<16x64xf32>
    %306 = arith.mulf %298, %305 : vector<16x64xf32>
    %307 = arith.addf %306, %304 : vector<16x64xf32>
    %308 = arith.truncf %307 : vector<16x64xf32> to vector<16x64xbf16>
    %cst_63 = arith.constant dense<0.000000e+00> : vector<16x192xf32>
    %309 = tpu.matmul %308, %1, %cst_63 {dimension_numbers = #tpu.dot_dimension_numbers<[1], [0], [0], [1], [0, 0, 1, 1], [], []>} : vector<16x64xbf16>, vector<64x192xbf16>, vector<16x192xf32> -> vector<16x192xf32>
    %310 = vector.extract_strided_slice %309 {offsets = [0, 0], sizes = [16, 128], strides = [1, 1]} : vector<16x192xf32> to vector<16x128xf32>
    %311 = arith.addf %310, %110 : vector<16x128xf32>
    %312 = arith.negf %311 : vector<16x128xf32>
    %313 = math.exp %312 : vector<16x128xf32>
    %cst_64 = arith.constant 1.000000e+00 : f32
    %314 = vector.broadcast %cst_64 : f32 to vector<16x128xf32>
    %315 = arith.addf %314, %313 : vector<16x128xf32>
    %316 = arith.divf %314, %315 : vector<16x128xf32>
    %317 = vector.extract_strided_slice %316 {offsets = [0, 0], sizes = [16, 64], strides = [1, 1]} : vector<16x128xf32> to vector<16x64xf32>
    %318 = vector.extract_strided_slice %316 {offsets = [0, 64], sizes = [16, 64], strides = [1, 1]} : vector<16x128xf32> to vector<16x64xf32>
    %319 = vector.extract_strided_slice %309 {offsets = [0, 128], sizes = [16, 64], strides = [1, 1]} : vector<16x192xf32> to vector<16x64xf32>
    %320 = vector.broadcast %3 : vector<1x64xf32> to vector<16x64xf32>
    %321 = arith.addf %319, %320 : vector<16x64xf32>
    %322 = arith.mulf %317, %321 : vector<16x64xf32>
    %323 = arith.addf %166, %322 : vector<16x64xf32>
    %324 = math.tanh %323 : vector<16x64xf32>
    %325 = arith.subf %307, %324 : vector<16x64xf32>
    %326 = arith.mulf %318, %325 : vector<16x64xf32>
    %327 = arith.addf %326, %324 : vector<16x64xf32>
    %328 = vector.extract_strided_slice %187 {offsets = [0, 0], sizes = [16, 32], strides = [1, 1]} : vector<16x64xf32> to vector<16x32xf32>
    %329 = vector.extract_strided_slice %327 {offsets = [0, 32], sizes = [16, 32], strides = [1, 1]} : vector<16x64xf32> to vector<16x32xf32>
    %330 = arith.addf %328, %329 : vector<16x32xf32>
    %cst_65 = arith.constant 5.000000e-01 : f32
    %331 = vector.broadcast %cst_65 : f32 to vector<16x32xf32>
    %332 = arith.mulf %330, %331 : vector<16x32xf32>
    %333 = vector.extract_strided_slice %207 {offsets = [0, 0], sizes = [16, 32], strides = [1, 1]} : vector<16x64xf32> to vector<16x32xf32>
    %334 = vector.extract_strided_slice %307 {offsets = [0, 32], sizes = [16, 32], strides = [1, 1]} : vector<16x64xf32> to vector<16x32xf32>
    %335 = arith.addf %333, %334 : vector<16x32xf32>
    %cst_66 = arith.constant 5.000000e-01 : f32
    %336 = vector.broadcast %cst_66 : f32 to vector<16x32xf32>
    %337 = arith.mulf %335, %336 : vector<16x32xf32>
    %338 = vector.extract_strided_slice %227 {offsets = [0, 0], sizes = [16, 32], strides = [1, 1]} : vector<16x64xf32> to vector<16x32xf32>
    %339 = vector.extract_strided_slice %287 {offsets = [0, 32], sizes = [16, 32], strides = [1, 1]} : vector<16x64xf32> to vector<16x32xf32>
    %340 = arith.addf %338, %339 : vector<16x32xf32>
    %cst_67 = arith.constant 5.000000e-01 : f32
    %341 = vector.broadcast %cst_67 : f32 to vector<16x32xf32>
    %342 = arith.mulf %340, %341 : vector<16x32xf32>
    %343 = vector.extract_strided_slice %247 {offsets = [0, 0], sizes = [16, 32], strides = [1, 1]} : vector<16x64xf32> to vector<16x32xf32>
    %344 = vector.extract_strided_slice %267 {offsets = [0, 32], sizes = [16, 32], strides = [1, 1]} : vector<16x64xf32> to vector<16x32xf32>
    %345 = arith.addf %343, %344 : vector<16x32xf32>
    %cst_68 = arith.constant 5.000000e-01 : f32
    %346 = vector.broadcast %cst_68 : f32 to vector<16x32xf32>
    %347 = arith.mulf %345, %346 : vector<16x32xf32>
    %348 = vector.extract_strided_slice %267 {offsets = [0, 0], sizes = [16, 32], strides = [1, 1]} : vector<16x64xf32> to vector<16x32xf32>
    %349 = vector.extract_strided_slice %247 {offsets = [0, 32], sizes = [16, 32], strides = [1, 1]} : vector<16x64xf32> to vector<16x32xf32>
    %350 = arith.addf %348, %349 : vector<16x32xf32>
    %cst_69 = arith.constant 5.000000e-01 : f32
    %351 = vector.broadcast %cst_69 : f32 to vector<16x32xf32>
    %352 = arith.mulf %350, %351 : vector<16x32xf32>
    %353 = vector.extract_strided_slice %287 {offsets = [0, 0], sizes = [16, 32], strides = [1, 1]} : vector<16x64xf32> to vector<16x32xf32>
    %354 = vector.extract_strided_slice %227 {offsets = [0, 32], sizes = [16, 32], strides = [1, 1]} : vector<16x64xf32> to vector<16x32xf32>
    %355 = arith.addf %353, %354 : vector<16x32xf32>
    %cst_70 = arith.constant 5.000000e-01 : f32
    %356 = vector.broadcast %cst_70 : f32 to vector<16x32xf32>
    %357 = arith.mulf %355, %356 : vector<16x32xf32>
    %358 = vector.extract_strided_slice %307 {offsets = [0, 0], sizes = [16, 32], strides = [1, 1]} : vector<16x64xf32> to vector<16x32xf32>
    %359 = vector.extract_strided_slice %207 {offsets = [0, 32], sizes = [16, 32], strides = [1, 1]} : vector<16x64xf32> to vector<16x32xf32>
    %360 = arith.addf %358, %359 : vector<16x32xf32>
    %cst_71 = arith.constant 5.000000e-01 : f32
    %361 = vector.broadcast %cst_71 : f32 to vector<16x32xf32>
    %362 = arith.mulf %360, %361 : vector<16x32xf32>
    %363 = vector.extract_strided_slice %327 {offsets = [0, 0], sizes = [16, 32], strides = [1, 1]} : vector<16x64xf32> to vector<16x32xf32>
    %364 = vector.extract_strided_slice %187 {offsets = [0, 32], sizes = [16, 32], strides = [1, 1]} : vector<16x64xf32> to vector<16x32xf32>
    %365 = arith.addf %363, %364 : vector<16x32xf32>
    %cst_72 = arith.constant 5.000000e-01 : f32
    %366 = vector.broadcast %cst_72 : f32 to vector<16x32xf32>
    %367 = arith.mulf %365, %366 : vector<16x32xf32>
    %368 = tpu.concatenate %332, %337, %342, %347, %352, %357, %362, %367 in 0 : vector<16x32xf32>, vector<16x32xf32>, vector<16x32xf32>, vector<16x32xf32>, vector<16x32xf32>, vector<16x32xf32>, vector<16x32xf32>, vector<16x32xf32> -> vector<128x32xf32>
    %369 = arith.truncf %368 : vector<128x32xf32> to vector<128x32xbf16>
    %cst_73 = arith.constant dense<0.000000e+00> : vector<128x32xf32>
    %370 = tpu.matmul %369, %4, %cst_73 {dimension_numbers = #tpu.dot_dimension_numbers<[1], [0], [0], [1], [0, 0, 1, 1], [], []>} : vector<128x32xbf16>, vector<32x32xbf16>, vector<128x32xf32> -> vector<128x32xf32>
    %371 = vector.broadcast %5 : vector<1x32xf32> to vector<128x32xf32>
    %372 = arith.addf %370, %371 : vector<128x32xf32>
    %cst_74 = arith.constant 0.000000e+00 : f32
    %373 = vector.broadcast %cst_74 : f32 to vector<128x32xf32>
    %374 = arith.maximumf %372, %373 : vector<128x32xf32>
    %375 = vector.extract_strided_slice %374 {offsets = [0, 0], sizes = [16, 32], strides = [1, 1]} : vector<128x32xf32> to vector<16x32xf32>
    %376 = vector.extract_strided_slice %374 {offsets = [16, 0], sizes = [16, 32], strides = [1, 1]} : vector<128x32xf32> to vector<16x32xf32>
    %377 = vector.extract_strided_slice %374 {offsets = [32, 0], sizes = [16, 32], strides = [1, 1]} : vector<128x32xf32> to vector<16x32xf32>
    %378 = vector.extract_strided_slice %374 {offsets = [48, 0], sizes = [16, 32], strides = [1, 1]} : vector<128x32xf32> to vector<16x32xf32>
    %379 = vector.extract_strided_slice %374 {offsets = [64, 0], sizes = [16, 32], strides = [1, 1]} : vector<128x32xf32> to vector<16x32xf32>
    %380 = vector.extract_strided_slice %374 {offsets = [80, 0], sizes = [16, 32], strides = [1, 1]} : vector<128x32xf32> to vector<16x32xf32>
    %381 = vector.extract_strided_slice %374 {offsets = [96, 0], sizes = [16, 32], strides = [1, 1]} : vector<128x32xf32> to vector<16x32xf32>
    %382 = vector.extract_strided_slice %374 {offsets = [112, 0], sizes = [16, 32], strides = [1, 1]} : vector<128x32xf32> to vector<16x32xf32>
    %383 = vector.extract_strided_slice %26 {offsets = [0, 0, 0], sizes = [1, 16, 1], strides = [1, 1, 1]} : vector<8x16x1xf32> to vector<1x16x1xf32>
    %384 = vector.shape_cast %383 : vector<1x16x1xf32> to vector<16x1xf32>
    %385 = vector.broadcast %384 : vector<16x1xf32> to vector<16x32xf32>
    %386 = arith.mulf %375, %385 : vector<16x32xf32>
    %cst_75 = arith.constant 1.000000e+00 : f32
    %387 = vector.broadcast %cst_75 : f32 to vector<16x1xf32>
    %388 = arith.subf %387, %384 : vector<16x1xf32>
    %389 = vector.broadcast %388 : vector<16x1xf32> to vector<16x32xf32>
    %390 = arith.subf %386, %389 : vector<16x32xf32>
    %391 = vector.extract_strided_slice %26 {offsets = [1, 0, 0], sizes = [1, 16, 1], strides = [1, 1, 1]} : vector<8x16x1xf32> to vector<1x16x1xf32>
    %392 = vector.shape_cast %391 : vector<1x16x1xf32> to vector<16x1xf32>
    %393 = vector.broadcast %392 : vector<16x1xf32> to vector<16x32xf32>
    %394 = arith.mulf %376, %393 : vector<16x32xf32>
    %cst_76 = arith.constant 1.000000e+00 : f32
    %395 = vector.broadcast %cst_76 : f32 to vector<16x1xf32>
    %396 = arith.subf %395, %392 : vector<16x1xf32>
    %397 = vector.broadcast %396 : vector<16x1xf32> to vector<16x32xf32>
    %398 = arith.subf %394, %397 : vector<16x32xf32>
    %399 = arith.maximumf %390, %398 : vector<16x32xf32>
    %400 = vector.extract_strided_slice %26 {offsets = [2, 0, 0], sizes = [1, 16, 1], strides = [1, 1, 1]} : vector<8x16x1xf32> to vector<1x16x1xf32>
    %401 = vector.shape_cast %400 : vector<1x16x1xf32> to vector<16x1xf32>
    %402 = vector.broadcast %401 : vector<16x1xf32> to vector<16x32xf32>
    %403 = arith.mulf %377, %402 : vector<16x32xf32>
    %cst_77 = arith.constant 1.000000e+00 : f32
    %404 = vector.broadcast %cst_77 : f32 to vector<16x1xf32>
    %405 = arith.subf %404, %401 : vector<16x1xf32>
    %406 = vector.broadcast %405 : vector<16x1xf32> to vector<16x32xf32>
    %407 = arith.subf %403, %406 : vector<16x32xf32>
    %408 = arith.maximumf %399, %407 : vector<16x32xf32>
    %409 = vector.extract_strided_slice %26 {offsets = [3, 0, 0], sizes = [1, 16, 1], strides = [1, 1, 1]} : vector<8x16x1xf32> to vector<1x16x1xf32>
    %410 = vector.shape_cast %409 : vector<1x16x1xf32> to vector<16x1xf32>
    %411 = vector.broadcast %410 : vector<16x1xf32> to vector<16x32xf32>
    %412 = arith.mulf %378, %411 : vector<16x32xf32>
    %cst_78 = arith.constant 1.000000e+00 : f32
    %413 = vector.broadcast %cst_78 : f32 to vector<16x1xf32>
    %414 = arith.subf %413, %410 : vector<16x1xf32>
    %415 = vector.broadcast %414 : vector<16x1xf32> to vector<16x32xf32>
    %416 = arith.subf %412, %415 : vector<16x32xf32>
    %417 = arith.maximumf %408, %416 : vector<16x32xf32>
    %418 = vector.extract_strided_slice %26 {offsets = [4, 0, 0], sizes = [1, 16, 1], strides = [1, 1, 1]} : vector<8x16x1xf32> to vector<1x16x1xf32>
    %419 = vector.shape_cast %418 : vector<1x16x1xf32> to vector<16x1xf32>
    %420 = vector.broadcast %419 : vector<16x1xf32> to vector<16x32xf32>
    %421 = arith.mulf %379, %420 : vector<16x32xf32>
    %cst_79 = arith.constant 1.000000e+00 : f32
    %422 = vector.broadcast %cst_79 : f32 to vector<16x1xf32>
    %423 = arith.subf %422, %419 : vector<16x1xf32>
    %424 = vector.broadcast %423 : vector<16x1xf32> to vector<16x32xf32>
    %425 = arith.subf %421, %424 : vector<16x32xf32>
    %426 = arith.maximumf %417, %425 : vector<16x32xf32>
    %427 = vector.extract_strided_slice %26 {offsets = [5, 0, 0], sizes = [1, 16, 1], strides = [1, 1, 1]} : vector<8x16x1xf32> to vector<1x16x1xf32>
    %428 = vector.shape_cast %427 : vector<1x16x1xf32> to vector<16x1xf32>
    %429 = vector.broadcast %428 : vector<16x1xf32> to vector<16x32xf32>
    %430 = arith.mulf %380, %429 : vector<16x32xf32>
    %cst_80 = arith.constant 1.000000e+00 : f32
    %431 = vector.broadcast %cst_80 : f32 to vector<16x1xf32>
    %432 = arith.subf %431, %428 : vector<16x1xf32>
    %433 = vector.broadcast %432 : vector<16x1xf32> to vector<16x32xf32>
    %434 = arith.subf %430, %433 : vector<16x32xf32>
    %435 = arith.maximumf %426, %434 : vector<16x32xf32>
    %436 = vector.extract_strided_slice %26 {offsets = [6, 0, 0], sizes = [1, 16, 1], strides = [1, 1, 1]} : vector<8x16x1xf32> to vector<1x16x1xf32>
    %437 = vector.shape_cast %436 : vector<1x16x1xf32> to vector<16x1xf32>
    %438 = vector.broadcast %437 : vector<16x1xf32> to vector<16x32xf32>
    %439 = arith.mulf %381, %438 : vector<16x32xf32>
    %cst_81 = arith.constant 1.000000e+00 : f32
    %440 = vector.broadcast %cst_81 : f32 to vector<16x1xf32>
    %441 = arith.subf %440, %437 : vector<16x1xf32>
    %442 = vector.broadcast %441 : vector<16x1xf32> to vector<16x32xf32>
    %443 = arith.subf %439, %442 : vector<16x32xf32>
    %444 = arith.maximumf %435, %443 : vector<16x32xf32>
    %445 = vector.extract_strided_slice %26 {offsets = [7, 0, 0], sizes = [1, 16, 1], strides = [1, 1, 1]} : vector<8x16x1xf32> to vector<1x16x1xf32>
    %446 = vector.shape_cast %445 : vector<1x16x1xf32> to vector<16x1xf32>
    %447 = vector.broadcast %446 : vector<16x1xf32> to vector<16x32xf32>
    %448 = arith.mulf %382, %447 : vector<16x32xf32>
    %cst_82 = arith.constant 1.000000e+00 : f32
    %449 = vector.broadcast %cst_82 : f32 to vector<16x1xf32>
    %450 = arith.subf %449, %446 : vector<16x1xf32>
    %451 = vector.broadcast %450 : vector<16x1xf32> to vector<16x32xf32>
    %452 = arith.subf %448, %451 : vector<16x32xf32>
    %453 = arith.maximumf %444, %452 : vector<16x32xf32>
    %454 = vector.shape_cast %453 : vector<16x32xf32> to vector<4x4x32xf32>
    %cst_83 = arith.constant -1.000000e+00 : f32
    %455 = vector.broadcast %cst_83 : f32 to vector<4x4x32xf32>
    %456 = arith.cmpf one, %454, %455 : vector<4x4x32xf32>
    %cst_84 = arith.constant 1.000000e+00 : f32
    %cst_85 = arith.constant 0.000000e+00 : f32
    %457 = vector.broadcast %cst_84 : f32 to vector<4x4x32xf32>
    %458 = vector.broadcast %cst_85 : f32 to vector<4x4x32xf32>
    %459 = arith.select %456, %457, %458 : vector<4x4x32xi1>, vector<4x4x32xf32>
    %cst_86 = arith.constant dense<0x7F800000> : vector<4x4xf32>
    %460 = vector.multi_reduction <minimumf>, %459, %cst_86 [2] : vector<4x4x32xf32> to vector<4x4xf32>
    %461 = vector.shape_cast %460 : vector<4x4xf32> to vector<4x4x1xf32>
    %462 = vector.shape_cast %454 : vector<4x4x32xf32> to vector<16x32xf32>
    %463 = arith.truncf %462 : vector<16x32xf32> to vector<16x32xbf16>
    %cst_87 = arith.constant dense<0.000000e+00> : vector<16x192xf32>
    %464 = tpu.matmul %463, %6, %cst_87 {dimension_numbers = #tpu.dot_dimension_numbers<[1], [0], [0], [1], [0, 0, 1, 1], [], []>} : vector<16x32xbf16>, vector<32x192xbf16>, vector<16x192xf32> -> vector<16x192xf32>
    %465 = vector.broadcast %8 : vector<1x192xf32> to vector<16x192xf32>
    %466 = arith.addf %464, %465 : vector<16x192xf32>
    %467 = vector.shape_cast %466 : vector<16x192xf32> to vector<4x4x192xf32>
    %468 = tpu.iota {dimensions = array<i32: 1>} : vector<1x128xi32>
    %c64_i32_88 = arith.constant 64 : i32
    %c0_i32_89 = arith.constant 0 : i32
    %469 = arith.cmpi eq, %c64_i32_88, %c0_i32_89 : i32
    %c1_i32_90 = arith.constant 1 : i32
    %470 = arith.select %469, %c1_i32_90, %c64_i32_88 : i32
    %471 = vector.broadcast %470 : i32 to vector<1x128xi32>
    %472 = arith.remsi %468, %471 : vector<1x128xi32>
    %c0_i32_91 = arith.constant 0 : i32
    %473 = vector.broadcast %c0_i32_91 : i32 to vector<1x128xi32>
    %474 = arith.cmpi ne, %472, %473 : vector<1x128xi32>
    %c0_i32_92 = arith.constant 0 : i32
    %475 = vector.broadcast %c0_i32_92 : i32 to vector<1x128xi32>
    %476 = arith.cmpi slt, %472, %475 : vector<1x128xi32>
    %c0_i32_93 = arith.constant 0 : i32
    %477 = arith.cmpi slt, %470, %c0_i32_93 : i32
    %478 = vector.broadcast %477 : i1 to vector<1x128xi1>
    %479 = vector.broadcast %478 : vector<1x128xi1> to vector<1x128xi1>
    %480 = arith.xori %476, %479 : vector<1x128xi1>
    %481 = arith.andi %480, %474 : vector<1x128xi1>
    %482 = vector.broadcast %470 : i32 to vector<1x128xi32>
    %483 = arith.addi %472, %482 : vector<1x128xi32>
    %484 = arith.select %481, %483, %472 : vector<1x128xi1>, vector<1x128xi32>
    %c32_i32_94 = arith.constant 32 : i32
    %485 = vector.broadcast %c32_i32_94 : i32 to vector<1x128xi32>
    %486 = arith.cmpi slt, %484, %485 : vector<1x128xi32>
    %487 = tpu.iota {dimensions = array<i32: 1>} : vector<1x64xi32>
    %c32_i32_95 = arith.constant 32 : i32
    %488 = vector.broadcast %c32_i32_95 : i32 to vector<1x64xi32>
    %489 = arith.cmpi slt, %487, %488 : vector<1x64xi32>
    %490 = vector.extract_strided_slice %467 {offsets = [0, 0, 0], sizes = [1, 4, 128], strides = [1, 1, 1]} : vector<4x4x192xf32> to vector<1x4x128xf32>
    %491 = vector.shape_cast %490 : vector<1x4x128xf32> to vector<4x128xf32>
    %492 = vector.extract_strided_slice %467 {offsets = [3, 0, 0], sizes = [1, 4, 128], strides = [1, 1, 1]} : vector<4x4x192xf32> to vector<1x4x128xf32>
    %493 = vector.shape_cast %492 : vector<1x4x128xf32> to vector<4x128xf32>
    %494 = vector.shape_cast %486 : vector<1x128xi1> to vector<1x128xi1>
    %495 = vector.broadcast %494 : vector<1x128xi1> to vector<4x128xi1>
    %496 = arith.select %495, %491, %493 : vector<4x128xi1>, vector<4x128xf32>
    %497 = vector.extract_strided_slice %467 {offsets = [1, 0, 0], sizes = [1, 4, 128], strides = [1, 1, 1]} : vector<4x4x192xf32> to vector<1x4x128xf32>
    %498 = vector.shape_cast %497 : vector<1x4x128xf32> to vector<4x128xf32>
    %499 = vector.extract_strided_slice %467 {offsets = [2, 0, 0], sizes = [1, 4, 128], strides = [1, 1, 1]} : vector<4x4x192xf32> to vector<1x4x128xf32>
    %500 = vector.shape_cast %499 : vector<1x4x128xf32> to vector<4x128xf32>
    %501 = vector.shape_cast %486 : vector<1x128xi1> to vector<1x128xi1>
    %502 = vector.broadcast %501 : vector<1x128xi1> to vector<4x128xi1>
    %503 = arith.select %502, %498, %500 : vector<4x128xi1>, vector<4x128xf32>
    %504 = vector.extract_strided_slice %467 {offsets = [2, 0, 0], sizes = [1, 4, 128], strides = [1, 1, 1]} : vector<4x4x192xf32> to vector<1x4x128xf32>
    %505 = vector.shape_cast %504 : vector<1x4x128xf32> to vector<4x128xf32>
    %506 = vector.extract_strided_slice %467 {offsets = [1, 0, 0], sizes = [1, 4, 128], strides = [1, 1, 1]} : vector<4x4x192xf32> to vector<1x4x128xf32>
    %507 = vector.shape_cast %506 : vector<1x4x128xf32> to vector<4x128xf32>
    %508 = vector.shape_cast %486 : vector<1x128xi1> to vector<1x128xi1>
    %509 = vector.broadcast %508 : vector<1x128xi1> to vector<4x128xi1>
    %510 = arith.select %509, %505, %507 : vector<4x128xi1>, vector<4x128xf32>
    %511 = vector.extract_strided_slice %467 {offsets = [3, 0, 0], sizes = [1, 4, 128], strides = [1, 1, 1]} : vector<4x4x192xf32> to vector<1x4x128xf32>
    %512 = vector.shape_cast %511 : vector<1x4x128xf32> to vector<4x128xf32>
    %513 = vector.extract_strided_slice %467 {offsets = [0, 0, 0], sizes = [1, 4, 128], strides = [1, 1, 1]} : vector<4x4x192xf32> to vector<1x4x128xf32>
    %514 = vector.shape_cast %513 : vector<1x4x128xf32> to vector<4x128xf32>
    %515 = vector.shape_cast %486 : vector<1x128xi1> to vector<1x128xi1>
    %516 = vector.broadcast %515 : vector<1x128xi1> to vector<4x128xi1>
    %517 = arith.select %516, %512, %514 : vector<4x128xi1>, vector<4x128xf32>
    %518 = vector.extract_strided_slice %467 {offsets = [0, 0, 128], sizes = [1, 4, 64], strides = [1, 1, 1]} : vector<4x4x192xf32> to vector<1x4x64xf32>
    %519 = vector.shape_cast %518 : vector<1x4x64xf32> to vector<4x64xf32>
    %520 = vector.extract_strided_slice %467 {offsets = [3, 0, 128], sizes = [1, 4, 64], strides = [1, 1, 1]} : vector<4x4x192xf32> to vector<1x4x64xf32>
    %521 = vector.shape_cast %520 : vector<1x4x64xf32> to vector<4x64xf32>
    %522 = vector.shape_cast %489 : vector<1x64xi1> to vector<1x64xi1>
    %523 = vector.broadcast %522 : vector<1x64xi1> to vector<4x64xi1>
    %524 = arith.select %523, %519, %521 : vector<4x64xi1>, vector<4x64xf32>
    %525 = vector.extract_strided_slice %467 {offsets = [1, 0, 128], sizes = [1, 4, 64], strides = [1, 1, 1]} : vector<4x4x192xf32> to vector<1x4x64xf32>
    %526 = vector.shape_cast %525 : vector<1x4x64xf32> to vector<4x64xf32>
    %527 = vector.extract_strided_slice %467 {offsets = [2, 0, 128], sizes = [1, 4, 64], strides = [1, 1, 1]} : vector<4x4x192xf32> to vector<1x4x64xf32>
    %528 = vector.shape_cast %527 : vector<1x4x64xf32> to vector<4x64xf32>
    %529 = vector.shape_cast %489 : vector<1x64xi1> to vector<1x64xi1>
    %530 = vector.broadcast %529 : vector<1x64xi1> to vector<4x64xi1>
    %531 = arith.select %530, %526, %528 : vector<4x64xi1>, vector<4x64xf32>
    %532 = vector.extract_strided_slice %467 {offsets = [2, 0, 128], sizes = [1, 4, 64], strides = [1, 1, 1]} : vector<4x4x192xf32> to vector<1x4x64xf32>
    %533 = vector.shape_cast %532 : vector<1x4x64xf32> to vector<4x64xf32>
    %534 = vector.extract_strided_slice %467 {offsets = [1, 0, 128], sizes = [1, 4, 64], strides = [1, 1, 1]} : vector<4x4x192xf32> to vector<1x4x64xf32>
    %535 = vector.shape_cast %534 : vector<1x4x64xf32> to vector<4x64xf32>
    %536 = vector.shape_cast %489 : vector<1x64xi1> to vector<1x64xi1>
    %537 = vector.broadcast %536 : vector<1x64xi1> to vector<4x64xi1>
    %538 = arith.select %537, %533, %535 : vector<4x64xi1>, vector<4x64xf32>
    %539 = vector.extract_strided_slice %467 {offsets = [3, 0, 128], sizes = [1, 4, 64], strides = [1, 1, 1]} : vector<4x4x192xf32> to vector<1x4x64xf32>
    %540 = vector.shape_cast %539 : vector<1x4x64xf32> to vector<4x64xf32>
    %541 = vector.extract_strided_slice %467 {offsets = [0, 0, 128], sizes = [1, 4, 64], strides = [1, 1, 1]} : vector<4x4x192xf32> to vector<1x4x64xf32>
    %542 = vector.shape_cast %541 : vector<1x4x64xf32> to vector<4x64xf32>
    %543 = vector.shape_cast %489 : vector<1x64xi1> to vector<1x64xi1>
    %544 = vector.broadcast %543 : vector<1x64xi1> to vector<4x64xi1>
    %545 = arith.select %544, %540, %542 : vector<4x64xi1>, vector<4x64xf32>
    %cst_96 = arith.constant 0.000000e+00 : f32
    %546 = vector.broadcast %cst_96 : f32 to vector<4x64xf32>
    %547 = arith.truncf %546 : vector<4x64xf32> to vector<4x64xbf16>
    %cst_97 = arith.constant dense<0.000000e+00> : vector<4x192xf32>
    %548 = tpu.matmul %547, %7, %cst_97 {dimension_numbers = #tpu.dot_dimension_numbers<[1], [0], [0], [1], [0, 0, 1, 1], [], []>} : vector<4x64xbf16>, vector<64x192xbf16>, vector<4x192xf32> -> vector<4x192xf32>
    %549 = vector.extract_strided_slice %548 {offsets = [0, 0], sizes = [4, 128], strides = [1, 1]} : vector<4x192xf32> to vector<4x128xf32>
    %550 = arith.addf %549, %496 : vector<4x128xf32>
    %551 = arith.negf %550 : vector<4x128xf32>
    %552 = math.exp %551 : vector<4x128xf32>
    %cst_98 = arith.constant 1.000000e+00 : f32
    %553 = vector.broadcast %cst_98 : f32 to vector<4x128xf32>
    %554 = arith.addf %553, %552 : vector<4x128xf32>
    %555 = arith.divf %553, %554 : vector<4x128xf32>
    %556 = vector.extract_strided_slice %555 {offsets = [0, 0], sizes = [4, 64], strides = [1, 1]} : vector<4x128xf32> to vector<4x64xf32>
    %557 = vector.extract_strided_slice %555 {offsets = [0, 64], sizes = [4, 64], strides = [1, 1]} : vector<4x128xf32> to vector<4x64xf32>
    %558 = vector.extract_strided_slice %548 {offsets = [0, 128], sizes = [4, 64], strides = [1, 1]} : vector<4x192xf32> to vector<4x64xf32>
    %559 = vector.broadcast %9 : vector<1x64xf32> to vector<4x64xf32>
    %560 = arith.addf %558, %559 : vector<4x64xf32>
    %561 = arith.mulf %556, %560 : vector<4x64xf32>
    %562 = arith.addf %524, %561 : vector<4x64xf32>
    %563 = math.tanh %562 : vector<4x64xf32>
    %564 = arith.subf %546, %563 : vector<4x64xf32>
    %565 = arith.mulf %557, %564 : vector<4x64xf32>
    %566 = arith.addf %565, %563 : vector<4x64xf32>
    %567 = arith.truncf %566 : vector<4x64xf32> to vector<4x64xbf16>
    %cst_99 = arith.constant dense<0.000000e+00> : vector<4x192xf32>
    %568 = tpu.matmul %567, %7, %cst_99 {dimension_numbers = #tpu.dot_dimension_numbers<[1], [0], [0], [1], [0, 0, 1, 1], [], []>} : vector<4x64xbf16>, vector<64x192xbf16>, vector<4x192xf32> -> vector<4x192xf32>
    %569 = vector.extract_strided_slice %568 {offsets = [0, 0], sizes = [4, 128], strides = [1, 1]} : vector<4x192xf32> to vector<4x128xf32>
    %570 = arith.addf %569, %503 : vector<4x128xf32>
    %571 = arith.negf %570 : vector<4x128xf32>
    %572 = math.exp %571 : vector<4x128xf32>
    %cst_100 = arith.constant 1.000000e+00 : f32
    %573 = vector.broadcast %cst_100 : f32 to vector<4x128xf32>
    %574 = arith.addf %573, %572 : vector<4x128xf32>
    %575 = arith.divf %573, %574 : vector<4x128xf32>
    %576 = vector.extract_strided_slice %575 {offsets = [0, 0], sizes = [4, 64], strides = [1, 1]} : vector<4x128xf32> to vector<4x64xf32>
    %577 = vector.extract_strided_slice %575 {offsets = [0, 64], sizes = [4, 64], strides = [1, 1]} : vector<4x128xf32> to vector<4x64xf32>
    %578 = vector.extract_strided_slice %568 {offsets = [0, 128], sizes = [4, 64], strides = [1, 1]} : vector<4x192xf32> to vector<4x64xf32>
    %579 = vector.broadcast %9 : vector<1x64xf32> to vector<4x64xf32>
    %580 = arith.addf %578, %579 : vector<4x64xf32>
    %581 = arith.mulf %576, %580 : vector<4x64xf32>
    %582 = arith.addf %531, %581 : vector<4x64xf32>
    %583 = math.tanh %582 : vector<4x64xf32>
    %584 = arith.subf %566, %583 : vector<4x64xf32>
    %585 = arith.mulf %577, %584 : vector<4x64xf32>
    %586 = arith.addf %585, %583 : vector<4x64xf32>
    %587 = arith.truncf %586 : vector<4x64xf32> to vector<4x64xbf16>
    %cst_101 = arith.constant dense<0.000000e+00> : vector<4x192xf32>
    %588 = tpu.matmul %587, %7, %cst_101 {dimension_numbers = #tpu.dot_dimension_numbers<[1], [0], [0], [1], [0, 0, 1, 1], [], []>} : vector<4x64xbf16>, vector<64x192xbf16>, vector<4x192xf32> -> vector<4x192xf32>
    %589 = vector.extract_strided_slice %588 {offsets = [0, 0], sizes = [4, 128], strides = [1, 1]} : vector<4x192xf32> to vector<4x128xf32>
    %590 = arith.addf %589, %510 : vector<4x128xf32>
    %591 = arith.negf %590 : vector<4x128xf32>
    %592 = math.exp %591 : vector<4x128xf32>
    %cst_102 = arith.constant 1.000000e+00 : f32
    %593 = vector.broadcast %cst_102 : f32 to vector<4x128xf32>
    %594 = arith.addf %593, %592 : vector<4x128xf32>
    %595 = arith.divf %593, %594 : vector<4x128xf32>
    %596 = vector.extract_strided_slice %595 {offsets = [0, 0], sizes = [4, 64], strides = [1, 1]} : vector<4x128xf32> to vector<4x64xf32>
    %597 = vector.extract_strided_slice %595 {offsets = [0, 64], sizes = [4, 64], strides = [1, 1]} : vector<4x128xf32> to vector<4x64xf32>
    %598 = vector.extract_strided_slice %588 {offsets = [0, 128], sizes = [4, 64], strides = [1, 1]} : vector<4x192xf32> to vector<4x64xf32>
    %599 = vector.broadcast %9 : vector<1x64xf32> to vector<4x64xf32>
    %600 = arith.addf %598, %599 : vector<4x64xf32>
    %601 = arith.mulf %596, %600 : vector<4x64xf32>
    %602 = arith.addf %538, %601 : vector<4x64xf32>
    %603 = math.tanh %602 : vector<4x64xf32>
    %604 = arith.subf %586, %603 : vector<4x64xf32>
    %605 = arith.mulf %597, %604 : vector<4x64xf32>
    %606 = arith.addf %605, %603 : vector<4x64xf32>
    %607 = arith.truncf %606 : vector<4x64xf32> to vector<4x64xbf16>
    %cst_103 = arith.constant dense<0.000000e+00> : vector<4x192xf32>
    %608 = tpu.matmul %607, %7, %cst_103 {dimension_numbers = #tpu.dot_dimension_numbers<[1], [0], [0], [1], [0, 0, 1, 1], [], []>} : vector<4x64xbf16>, vector<64x192xbf16>, vector<4x192xf32> -> vector<4x192xf32>
    %609 = vector.extract_strided_slice %608 {offsets = [0, 0], sizes = [4, 128], strides = [1, 1]} : vector<4x192xf32> to vector<4x128xf32>
    %610 = arith.addf %609, %517 : vector<4x128xf32>
    %611 = arith.negf %610 : vector<4x128xf32>
    %612 = math.exp %611 : vector<4x128xf32>
    %cst_104 = arith.constant 1.000000e+00 : f32
    %613 = vector.broadcast %cst_104 : f32 to vector<4x128xf32>
    %614 = arith.addf %613, %612 : vector<4x128xf32>
    %615 = arith.divf %613, %614 : vector<4x128xf32>
    %616 = vector.extract_strided_slice %615 {offsets = [0, 0], sizes = [4, 64], strides = [1, 1]} : vector<4x128xf32> to vector<4x64xf32>
    %617 = vector.extract_strided_slice %615 {offsets = [0, 64], sizes = [4, 64], strides = [1, 1]} : vector<4x128xf32> to vector<4x64xf32>
    %618 = vector.extract_strided_slice %608 {offsets = [0, 128], sizes = [4, 64], strides = [1, 1]} : vector<4x192xf32> to vector<4x64xf32>
    %619 = vector.broadcast %9 : vector<1x64xf32> to vector<4x64xf32>
    %620 = arith.addf %618, %619 : vector<4x64xf32>
    %621 = arith.mulf %616, %620 : vector<4x64xf32>
    %622 = arith.addf %545, %621 : vector<4x64xf32>
    %623 = math.tanh %622 : vector<4x64xf32>
    %624 = arith.subf %606, %623 : vector<4x64xf32>
    %625 = arith.mulf %617, %624 : vector<4x64xf32>
    %626 = arith.addf %625, %623 : vector<4x64xf32>
    %627 = vector.extract_strided_slice %566 {offsets = [0, 0], sizes = [4, 32], strides = [1, 1]} : vector<4x64xf32> to vector<4x32xf32>
    %628 = vector.extract_strided_slice %626 {offsets = [0, 32], sizes = [4, 32], strides = [1, 1]} : vector<4x64xf32> to vector<4x32xf32>
    %629 = arith.addf %627, %628 : vector<4x32xf32>
    %cst_105 = arith.constant 5.000000e-01 : f32
    %630 = vector.broadcast %cst_105 : f32 to vector<4x32xf32>
    %631 = arith.mulf %629, %630 : vector<4x32xf32>
    %632 = vector.extract_strided_slice %586 {offsets = [0, 0], sizes = [4, 32], strides = [1, 1]} : vector<4x64xf32> to vector<4x32xf32>
    %633 = vector.extract_strided_slice %606 {offsets = [0, 32], sizes = [4, 32], strides = [1, 1]} : vector<4x64xf32> to vector<4x32xf32>
    %634 = arith.addf %632, %633 : vector<4x32xf32>
    %cst_106 = arith.constant 5.000000e-01 : f32
    %635 = vector.broadcast %cst_106 : f32 to vector<4x32xf32>
    %636 = arith.mulf %634, %635 : vector<4x32xf32>
    %637 = vector.extract_strided_slice %606 {offsets = [0, 0], sizes = [4, 32], strides = [1, 1]} : vector<4x64xf32> to vector<4x32xf32>
    %638 = vector.extract_strided_slice %586 {offsets = [0, 32], sizes = [4, 32], strides = [1, 1]} : vector<4x64xf32> to vector<4x32xf32>
    %639 = arith.addf %637, %638 : vector<4x32xf32>
    %cst_107 = arith.constant 5.000000e-01 : f32
    %640 = vector.broadcast %cst_107 : f32 to vector<4x32xf32>
    %641 = arith.mulf %639, %640 : vector<4x32xf32>
    %642 = vector.extract_strided_slice %626 {offsets = [0, 0], sizes = [4, 32], strides = [1, 1]} : vector<4x64xf32> to vector<4x32xf32>
    %643 = vector.extract_strided_slice %566 {offsets = [0, 32], sizes = [4, 32], strides = [1, 1]} : vector<4x64xf32> to vector<4x32xf32>
    %644 = arith.addf %642, %643 : vector<4x32xf32>
    %cst_108 = arith.constant 5.000000e-01 : f32
    %645 = vector.broadcast %cst_108 : f32 to vector<4x32xf32>
    %646 = arith.mulf %644, %645 : vector<4x32xf32>
    %647 = vector.extract_strided_slice %461 {offsets = [0, 0, 0], sizes = [1, 4, 1], strides = [1, 1, 1]} : vector<4x4x1xf32> to vector<1x4x1xf32>
    %648 = vector.shape_cast %647 : vector<1x4x1xf32> to vector<4x1xf32>
    %649 = vector.broadcast %648 : vector<4x1xf32> to vector<4x32xf32>
    %650 = arith.mulf %631, %649 : vector<4x32xf32>
    %cst_109 = arith.constant 1.000000e+00 : f32
    %651 = vector.broadcast %cst_109 : f32 to vector<4x1xf32>
    %652 = arith.subf %651, %648 : vector<4x1xf32>
    %653 = vector.broadcast %652 : vector<4x1xf32> to vector<4x32xf32>
    %654 = arith.subf %650, %653 : vector<4x32xf32>
    %655 = vector.extract_strided_slice %461 {offsets = [1, 0, 0], sizes = [1, 4, 1], strides = [1, 1, 1]} : vector<4x4x1xf32> to vector<1x4x1xf32>
    %656 = vector.shape_cast %655 : vector<1x4x1xf32> to vector<4x1xf32>
    %657 = vector.broadcast %656 : vector<4x1xf32> to vector<4x32xf32>
    %658 = arith.mulf %636, %657 : vector<4x32xf32>
    %cst_110 = arith.constant 1.000000e+00 : f32
    %659 = vector.broadcast %cst_110 : f32 to vector<4x1xf32>
    %660 = arith.subf %659, %656 : vector<4x1xf32>
    %661 = vector.broadcast %660 : vector<4x1xf32> to vector<4x32xf32>
    %662 = arith.subf %658, %661 : vector<4x32xf32>
    %663 = arith.maximumf %654, %662 : vector<4x32xf32>
    %664 = vector.extract_strided_slice %461 {offsets = [2, 0, 0], sizes = [1, 4, 1], strides = [1, 1, 1]} : vector<4x4x1xf32> to vector<1x4x1xf32>
    %665 = vector.shape_cast %664 : vector<1x4x1xf32> to vector<4x1xf32>
    %666 = vector.broadcast %665 : vector<4x1xf32> to vector<4x32xf32>
    %667 = arith.mulf %641, %666 : vector<4x32xf32>
    %cst_111 = arith.constant 1.000000e+00 : f32
    %668 = vector.broadcast %cst_111 : f32 to vector<4x1xf32>
    %669 = arith.subf %668, %665 : vector<4x1xf32>
    %670 = vector.broadcast %669 : vector<4x1xf32> to vector<4x32xf32>
    %671 = arith.subf %667, %670 : vector<4x32xf32>
    %672 = arith.maximumf %663, %671 : vector<4x32xf32>
    %673 = vector.extract_strided_slice %461 {offsets = [3, 0, 0], sizes = [1, 4, 1], strides = [1, 1, 1]} : vector<4x4x1xf32> to vector<1x4x1xf32>
    %674 = vector.shape_cast %673 : vector<1x4x1xf32> to vector<4x1xf32>
    %675 = vector.broadcast %674 : vector<4x1xf32> to vector<4x32xf32>
    %676 = arith.mulf %646, %675 : vector<4x32xf32>
    %cst_112 = arith.constant 1.000000e+00 : f32
    %677 = vector.broadcast %cst_112 : f32 to vector<4x1xf32>
    %678 = arith.subf %677, %674 : vector<4x1xf32>
    %679 = vector.broadcast %678 : vector<4x1xf32> to vector<4x32xf32>
    %680 = arith.subf %676, %679 : vector<4x32xf32>
    %681 = arith.maximumf %672, %680 : vector<4x32xf32>
    %682 = vector.shape_cast %681 : vector<4x32xf32> to vector<2x2x32xf32>
    %cst_113 = arith.constant -1.000000e+00 : f32
    %683 = vector.broadcast %cst_113 : f32 to vector<2x2x32xf32>
    %684 = arith.cmpf one, %682, %683 : vector<2x2x32xf32>
    %cst_114 = arith.constant 1.000000e+00 : f32
    %cst_115 = arith.constant 0.000000e+00 : f32
    %685 = vector.broadcast %cst_114 : f32 to vector<2x2x32xf32>
    %686 = vector.broadcast %cst_115 : f32 to vector<2x2x32xf32>
    %687 = arith.select %684, %685, %686 : vector<2x2x32xi1>, vector<2x2x32xf32>
    %cst_116 = arith.constant dense<0x7F800000> : vector<2x2xf32>
    %688 = vector.multi_reduction <minimumf>, %687, %cst_116 [2] : vector<2x2x32xf32> to vector<2x2xf32>
    %689 = vector.shape_cast %688 : vector<2x2xf32> to vector<2x2x1xf32>
    %690 = vector.shape_cast %682 : vector<2x2x32xf32> to vector<4x32xf32>
    %691 = arith.truncf %690 : vector<4x32xf32> to vector<4x32xbf16>
    %cst_117 = arith.constant dense<0.000000e+00> : vector<4x192xf32>
    %692 = tpu.matmul %691, %10, %cst_117 {dimension_numbers = #tpu.dot_dimension_numbers<[1], [0], [0], [1], [0, 0, 1, 1], [], []>} : vector<4x32xbf16>, vector<32x192xbf16>, vector<4x192xf32> -> vector<4x192xf32>
    %693 = vector.broadcast %12 : vector<1x192xf32> to vector<4x192xf32>
    %694 = arith.addf %692, %693 : vector<4x192xf32>
    %695 = vector.shape_cast %694 : vector<4x192xf32> to vector<2x2x192xf32>
    %696 = tpu.iota {dimensions = array<i32: 1>} : vector<1x128xi32>
    %c64_i32_118 = arith.constant 64 : i32
    %c0_i32_119 = arith.constant 0 : i32
    %697 = arith.cmpi eq, %c64_i32_118, %c0_i32_119 : i32
    %c1_i32_120 = arith.constant 1 : i32
    %698 = arith.select %697, %c1_i32_120, %c64_i32_118 : i32
    %699 = vector.broadcast %698 : i32 to vector<1x128xi32>
    %700 = arith.remsi %696, %699 : vector<1x128xi32>
    %c0_i32_121 = arith.constant 0 : i32
    %701 = vector.broadcast %c0_i32_121 : i32 to vector<1x128xi32>
    %702 = arith.cmpi ne, %700, %701 : vector<1x128xi32>
    %c0_i32_122 = arith.constant 0 : i32
    %703 = vector.broadcast %c0_i32_122 : i32 to vector<1x128xi32>
    %704 = arith.cmpi slt, %700, %703 : vector<1x128xi32>
    %c0_i32_123 = arith.constant 0 : i32
    %705 = arith.cmpi slt, %698, %c0_i32_123 : i32
    %706 = vector.broadcast %705 : i1 to vector<1x128xi1>
    %707 = vector.broadcast %706 : vector<1x128xi1> to vector<1x128xi1>
    %708 = arith.xori %704, %707 : vector<1x128xi1>
    %709 = arith.andi %708, %702 : vector<1x128xi1>
    %710 = vector.broadcast %698 : i32 to vector<1x128xi32>
    %711 = arith.addi %700, %710 : vector<1x128xi32>
    %712 = arith.select %709, %711, %700 : vector<1x128xi1>, vector<1x128xi32>
    %c32_i32_124 = arith.constant 32 : i32
    %713 = vector.broadcast %c32_i32_124 : i32 to vector<1x128xi32>
    %714 = arith.cmpi slt, %712, %713 : vector<1x128xi32>
    %715 = tpu.iota {dimensions = array<i32: 1>} : vector<1x64xi32>
    %c32_i32_125 = arith.constant 32 : i32
    %716 = vector.broadcast %c32_i32_125 : i32 to vector<1x64xi32>
    %717 = arith.cmpi slt, %715, %716 : vector<1x64xi32>
    %718 = vector.extract_strided_slice %695 {offsets = [0, 0, 0], sizes = [1, 2, 128], strides = [1, 1, 1]} : vector<2x2x192xf32> to vector<1x2x128xf32>
    %719 = vector.shape_cast %718 : vector<1x2x128xf32> to vector<2x128xf32>
    %720 = vector.extract_strided_slice %695 {offsets = [1, 0, 0], sizes = [1, 2, 128], strides = [1, 1, 1]} : vector<2x2x192xf32> to vector<1x2x128xf32>
    %721 = vector.shape_cast %720 : vector<1x2x128xf32> to vector<2x128xf32>
    %722 = vector.shape_cast %714 : vector<1x128xi1> to vector<1x128xi1>
    %723 = vector.broadcast %722 : vector<1x128xi1> to vector<2x128xi1>
    %724 = arith.select %723, %719, %721 : vector<2x128xi1>, vector<2x128xf32>
    %725 = vector.extract_strided_slice %695 {offsets = [1, 0, 0], sizes = [1, 2, 128], strides = [1, 1, 1]} : vector<2x2x192xf32> to vector<1x2x128xf32>
    %726 = vector.shape_cast %725 : vector<1x2x128xf32> to vector<2x128xf32>
    %727 = vector.extract_strided_slice %695 {offsets = [0, 0, 0], sizes = [1, 2, 128], strides = [1, 1, 1]} : vector<2x2x192xf32> to vector<1x2x128xf32>
    %728 = vector.shape_cast %727 : vector<1x2x128xf32> to vector<2x128xf32>
    %729 = vector.shape_cast %714 : vector<1x128xi1> to vector<1x128xi1>
    %730 = vector.broadcast %729 : vector<1x128xi1> to vector<2x128xi1>
    %731 = arith.select %730, %726, %728 : vector<2x128xi1>, vector<2x128xf32>
    %732 = vector.extract_strided_slice %695 {offsets = [0, 0, 128], sizes = [1, 2, 64], strides = [1, 1, 1]} : vector<2x2x192xf32> to vector<1x2x64xf32>
    %733 = vector.shape_cast %732 : vector<1x2x64xf32> to vector<2x64xf32>
    %734 = vector.extract_strided_slice %695 {offsets = [1, 0, 128], sizes = [1, 2, 64], strides = [1, 1, 1]} : vector<2x2x192xf32> to vector<1x2x64xf32>
    %735 = vector.shape_cast %734 : vector<1x2x64xf32> to vector<2x64xf32>
    %736 = vector.shape_cast %717 : vector<1x64xi1> to vector<1x64xi1>
    %737 = vector.broadcast %736 : vector<1x64xi1> to vector<2x64xi1>
    %738 = arith.select %737, %733, %735 : vector<2x64xi1>, vector<2x64xf32>
    %739 = vector.extract_strided_slice %695 {offsets = [1, 0, 128], sizes = [1, 2, 64], strides = [1, 1, 1]} : vector<2x2x192xf32> to vector<1x2x64xf32>
    %740 = vector.shape_cast %739 : vector<1x2x64xf32> to vector<2x64xf32>
    %741 = vector.extract_strided_slice %695 {offsets = [0, 0, 128], sizes = [1, 2, 64], strides = [1, 1, 1]} : vector<2x2x192xf32> to vector<1x2x64xf32>
    %742 = vector.shape_cast %741 : vector<1x2x64xf32> to vector<2x64xf32>
    %743 = vector.shape_cast %717 : vector<1x64xi1> to vector<1x64xi1>
    %744 = vector.broadcast %743 : vector<1x64xi1> to vector<2x64xi1>
    %745 = arith.select %744, %740, %742 : vector<2x64xi1>, vector<2x64xf32>
    %cst_126 = arith.constant 0.000000e+00 : f32
    %746 = vector.broadcast %cst_126 : f32 to vector<2x64xf32>
    %747 = arith.truncf %746 : vector<2x64xf32> to vector<2x64xbf16>
    %cst_127 = arith.constant dense<0.000000e+00> : vector<2x192xf32>
    %748 = tpu.matmul %747, %11, %cst_127 {dimension_numbers = #tpu.dot_dimension_numbers<[1], [0], [0], [1], [0, 0, 1, 1], [], []>} : vector<2x64xbf16>, vector<64x192xbf16>, vector<2x192xf32> -> vector<2x192xf32>
    %749 = vector.extract_strided_slice %748 {offsets = [0, 0], sizes = [2, 128], strides = [1, 1]} : vector<2x192xf32> to vector<2x128xf32>
    %750 = arith.addf %749, %724 : vector<2x128xf32>
    %751 = arith.negf %750 : vector<2x128xf32>
    %752 = math.exp %751 : vector<2x128xf32>
    %cst_128 = arith.constant 1.000000e+00 : f32
    %753 = vector.broadcast %cst_128 : f32 to vector<2x128xf32>
    %754 = arith.addf %753, %752 : vector<2x128xf32>
    %755 = arith.divf %753, %754 : vector<2x128xf32>
    %756 = vector.extract_strided_slice %755 {offsets = [0, 0], sizes = [2, 64], strides = [1, 1]} : vector<2x128xf32> to vector<2x64xf32>
    %757 = vector.extract_strided_slice %755 {offsets = [0, 64], sizes = [2, 64], strides = [1, 1]} : vector<2x128xf32> to vector<2x64xf32>
    %758 = vector.extract_strided_slice %748 {offsets = [0, 128], sizes = [2, 64], strides = [1, 1]} : vector<2x192xf32> to vector<2x64xf32>
    %759 = vector.broadcast %13 : vector<1x64xf32> to vector<2x64xf32>
    %760 = arith.addf %758, %759 : vector<2x64xf32>
    %761 = arith.mulf %756, %760 : vector<2x64xf32>
    %762 = arith.addf %738, %761 : vector<2x64xf32>
    %763 = math.tanh %762 : vector<2x64xf32>
    %764 = arith.subf %746, %763 : vector<2x64xf32>
    %765 = arith.mulf %757, %764 : vector<2x64xf32>
    %766 = arith.addf %765, %763 : vector<2x64xf32>
    %767 = arith.truncf %766 : vector<2x64xf32> to vector<2x64xbf16>
    %cst_129 = arith.constant dense<0.000000e+00> : vector<2x192xf32>
    %768 = tpu.matmul %767, %11, %cst_129 {dimension_numbers = #tpu.dot_dimension_numbers<[1], [0], [0], [1], [0, 0, 1, 1], [], []>} : vector<2x64xbf16>, vector<64x192xbf16>, vector<2x192xf32> -> vector<2x192xf32>
    %769 = vector.extract_strided_slice %768 {offsets = [0, 0], sizes = [2, 128], strides = [1, 1]} : vector<2x192xf32> to vector<2x128xf32>
    %770 = arith.addf %769, %731 : vector<2x128xf32>
    %771 = arith.negf %770 : vector<2x128xf32>
    %772 = math.exp %771 : vector<2x128xf32>
    %cst_130 = arith.constant 1.000000e+00 : f32
    %773 = vector.broadcast %cst_130 : f32 to vector<2x128xf32>
    %774 = arith.addf %773, %772 : vector<2x128xf32>
    %775 = arith.divf %773, %774 : vector<2x128xf32>
    %776 = vector.extract_strided_slice %775 {offsets = [0, 0], sizes = [2, 64], strides = [1, 1]} : vector<2x128xf32> to vector<2x64xf32>
    %777 = vector.extract_strided_slice %775 {offsets = [0, 64], sizes = [2, 64], strides = [1, 1]} : vector<2x128xf32> to vector<2x64xf32>
    %778 = vector.extract_strided_slice %768 {offsets = [0, 128], sizes = [2, 64], strides = [1, 1]} : vector<2x192xf32> to vector<2x64xf32>
    %779 = vector.broadcast %13 : vector<1x64xf32> to vector<2x64xf32>
    %780 = arith.addf %778, %779 : vector<2x64xf32>
    %781 = arith.mulf %776, %780 : vector<2x64xf32>
    %782 = arith.addf %745, %781 : vector<2x64xf32>
    %783 = math.tanh %782 : vector<2x64xf32>
    %784 = arith.subf %766, %783 : vector<2x64xf32>
    %785 = arith.mulf %777, %784 : vector<2x64xf32>
    %786 = arith.addf %785, %783 : vector<2x64xf32>
    %787 = vector.extract_strided_slice %766 {offsets = [0, 0], sizes = [2, 32], strides = [1, 1]} : vector<2x64xf32> to vector<2x32xf32>
    %788 = vector.extract_strided_slice %786 {offsets = [0, 32], sizes = [2, 32], strides = [1, 1]} : vector<2x64xf32> to vector<2x32xf32>
    %789 = arith.addf %787, %788 : vector<2x32xf32>
    %cst_131 = arith.constant 5.000000e-01 : f32
    %790 = vector.broadcast %cst_131 : f32 to vector<2x32xf32>
    %791 = arith.mulf %789, %790 : vector<2x32xf32>
    %792 = vector.extract_strided_slice %786 {offsets = [0, 0], sizes = [2, 32], strides = [1, 1]} : vector<2x64xf32> to vector<2x32xf32>
    %793 = vector.extract_strided_slice %766 {offsets = [0, 32], sizes = [2, 32], strides = [1, 1]} : vector<2x64xf32> to vector<2x32xf32>
    %794 = arith.addf %792, %793 : vector<2x32xf32>
    %cst_132 = arith.constant 5.000000e-01 : f32
    %795 = vector.broadcast %cst_132 : f32 to vector<2x32xf32>
    %796 = arith.mulf %794, %795 : vector<2x32xf32>
    %797 = vector.extract_strided_slice %689 {offsets = [0, 0, 0], sizes = [1, 2, 1], strides = [1, 1, 1]} : vector<2x2x1xf32> to vector<1x2x1xf32>
    %798 = vector.shape_cast %797 : vector<1x2x1xf32> to vector<2x1xf32>
    %799 = vector.broadcast %798 : vector<2x1xf32> to vector<2x32xf32>
    %800 = arith.mulf %791, %799 : vector<2x32xf32>
    %cst_133 = arith.constant 1.000000e+00 : f32
    %801 = vector.broadcast %cst_133 : f32 to vector<2x1xf32>
    %802 = arith.subf %801, %798 : vector<2x1xf32>
    %803 = vector.broadcast %802 : vector<2x1xf32> to vector<2x32xf32>
    %804 = arith.subf %800, %803 : vector<2x32xf32>
    %805 = vector.extract_strided_slice %689 {offsets = [1, 0, 0], sizes = [1, 2, 1], strides = [1, 1, 1]} : vector<2x2x1xf32> to vector<1x2x1xf32>
    %806 = vector.shape_cast %805 : vector<1x2x1xf32> to vector<2x1xf32>
    %807 = vector.broadcast %806 : vector<2x1xf32> to vector<2x32xf32>
    %808 = arith.mulf %796, %807 : vector<2x32xf32>
    %cst_134 = arith.constant 1.000000e+00 : f32
    %809 = vector.broadcast %cst_134 : f32 to vector<2x1xf32>
    %810 = arith.subf %809, %806 : vector<2x1xf32>
    %811 = vector.broadcast %810 : vector<2x1xf32> to vector<2x32xf32>
    %812 = arith.subf %808, %811 : vector<2x32xf32>
    %813 = arith.maximumf %804, %812 : vector<2x32xf32>
    %814 = arith.truncf %813 : vector<2x32xf32> to vector<2x32xbf16>
    %cst_135 = arith.constant dense<0.000000e+00> : vector<2x16xf32>
    %815 = tpu.matmul %814, %14, %cst_135 {dimension_numbers = #tpu.dot_dimension_numbers<[1], [0], [0], [1], [0, 0, 1, 1], [], []>} : vector<2x32xbf16>, vector<32x16xbf16>, vector<2x16xf32> -> vector<2x16xf32>
    %816 = vector.broadcast %15 : vector<1x16xf32> to vector<2x16xf32>
    %817 = arith.addf %815, %816 : vector<2x16xf32>
    %cst_136 = arith.constant 0.000000e+00 : f32
    %818 = vector.broadcast %cst_136 : f32 to vector<2x16xf32>
    %819 = arith.maximumf %817, %818 : vector<2x16xf32>
    %820 = arith.truncf %819 : vector<2x16xf32> to vector<2x16xbf16>
    %cst_137 = arith.constant dense<0.000000e+00> : vector<2x1xf32>
    %821 = tpu.matmul %820, %16, %cst_137 {dimension_numbers = #tpu.dot_dimension_numbers<[1], [0], [0], [1], [0, 0, 1, 1], [], []>} : vector<2x16xbf16>, vector<16x1xbf16>, vector<2x1xf32> -> vector<2x1xf32>
    %822 = vector.broadcast %17 : vector<1x1xf32> to vector<2x1xf32>
    %823 = arith.addf %821, %822 : vector<2x1xf32>
    %824 = arith.negf %823 : vector<2x1xf32>
    %825 = math.exp %824 : vector<2x1xf32>
    %cst_138 = arith.constant 1.000000e+00 : f32
    %826 = vector.broadcast %cst_138 : f32 to vector<2x1xf32>
    %827 = arith.addf %826, %825 : vector<2x1xf32>
    %828 = arith.divf %826, %827 : vector<2x1xf32>
    %c0_139 = arith.constant 0 : index
    %c0_140 = arith.constant 0 : index
    %829 = vector.load %arg20[%c0_139, %c0_140] : memref<2x1xf32, #tpu.memory_space<vmem>>, vector<2x1xf32>
    tpu.vector_store %arg20[%c0_139, %c0_140], %828 {strides = array<i32>} : memref<2x1xf32, #tpu.memory_space<vmem>>, vector<2x1xf32>,
    return
  }
  func.func @transform_0(%arg0: i32) -> (i32, i32, i32, i32, i32) {
    %c0_i32 = arith.constant 0 : i32
    %c0_i32_0 = arith.constant 0 : i32
    %c0_i32_1 = arith.constant 0 : i32
    %c0_i32_2 = arith.constant 0 : i32
    %c0_i32_3 = arith.constant 0 : i32
    return %c0_i32, %c0_i32_0, %c0_i32_1, %arg0, %c0_i32_2 : i32, i32, i32, i32, i32
  }
  func.func @transform_1(%arg0: i32) -> (i32, i32) {
    %c0_i32 = arith.constant 0 : i32
    %c0_i32_0 = arith.constant 0 : i32
    %c0_i32_1 = arith.constant 0 : i32
    return %c0_i32, %c0_i32_0 : i32, i32
  }
  func.func @transform_2(%arg0: i32) -> (i32, i32) {
    %c0_i32 = arith.constant 0 : i32
    %c0_i32_0 = arith.constant 0 : i32
    %c0_i32_1 = arith.constant 0 : i32
    return %c0_i32, %c0_i32_0 : i32, i32
  }
  func.func @transform_3(%arg0: i32) -> (i32, i32) {
    %c0_i32 = arith.constant 0 : i32
    %c0_i32_0 = arith.constant 0 : i32
    %c0_i32_1 = arith.constant 0 : i32
    return %c0_i32, %c0_i32_0 : i32, i32
  }
  func.func @transform_4(%arg0: i32) -> (i32, i32) {
    %c0_i32 = arith.constant 0 : i32
    %c0_i32_0 = arith.constant 0 : i32
    %c0_i32_1 = arith.constant 0 : i32
    return %c0_i32, %c0_i32_0 : i32, i32
  }
  func.func @transform_5(%arg0: i32) -> (i32, i32) {
    %c0_i32 = arith.constant 0 : i32
    %c0_i32_0 = arith.constant 0 : i32
    %c0_i32_1 = arith.constant 0 : i32
    return %c0_i32, %c0_i32_0 : i32, i32
  }
  func.func @transform_6(%arg0: i32) -> (i32, i32) {
    %c0_i32 = arith.constant 0 : i32
    %c0_i32_0 = arith.constant 0 : i32
    %c0_i32_1 = arith.constant 0 : i32
    return %c0_i32, %c0_i32_0 : i32, i32
  }
  func.func @transform_7(%arg0: i32) -> (i32, i32) {
    %c0_i32 = arith.constant 0 : i32
    %c0_i32_0 = arith.constant 0 : i32
    %c0_i32_1 = arith.constant 0 : i32
    return %c0_i32, %c0_i32_0 : i32, i32
  }
  func.func @transform_8(%arg0: i32) -> (i32, i32) {
    %c0_i32 = arith.constant 0 : i32
    %c0_i32_0 = arith.constant 0 : i32
    %c0_i32_1 = arith.constant 0 : i32
    return %c0_i32, %c0_i32_0 : i32, i32
  }
  func.func @transform_9(%arg0: i32) -> (i32, i32) {
    %c0_i32 = arith.constant 0 : i32
    %c0_i32_0 = arith.constant 0 : i32
    %c0_i32_1 = arith.constant 0 : i32
    return %c0_i32, %c0_i32_0 : i32, i32
  }
  func.func @transform_10(%arg0: i32) -> (i32, i32) {
    %c0_i32 = arith.constant 0 : i32
    %c0_i32_0 = arith.constant 0 : i32
    %c0_i32_1 = arith.constant 0 : i32
    return %c0_i32, %c0_i32_0 : i32, i32
  }
  func.func @transform_11(%arg0: i32) -> (i32, i32) {
    %c0_i32 = arith.constant 0 : i32
    %c0_i32_0 = arith.constant 0 : i32
    %c0_i32_1 = arith.constant 0 : i32
    return %c0_i32, %c0_i32_0 : i32, i32
  }
  func.func @transform_12(%arg0: i32) -> (i32, i32) {
    %c0_i32 = arith.constant 0 : i32
    %c0_i32_0 = arith.constant 0 : i32
    %c0_i32_1 = arith.constant 0 : i32
    return %c0_i32, %c0_i32_0 : i32, i32
  }
  func.func @transform_13(%arg0: i32) -> (i32, i32) {
    %c0_i32 = arith.constant 0 : i32
    %c0_i32_0 = arith.constant 0 : i32
    %c0_i32_1 = arith.constant 0 : i32
    return %c0_i32, %c0_i32_0 : i32, i32
  }
  func.func @transform_14(%arg0: i32) -> (i32, i32) {
    %c0_i32 = arith.constant 0 : i32
    %c0_i32_0 = arith.constant 0 : i32
    %c0_i32_1 = arith.constant 0 : i32
    return %c0_i32, %c0_i32_0 : i32, i32
  }
  func.func @transform_15(%arg0: i32) -> (i32, i32) {
    %c0_i32 = arith.constant 0 : i32
    %c0_i32_0 = arith.constant 0 : i32
    %c0_i32_1 = arith.constant 0 : i32
    return %c0_i32, %c0_i32_0 : i32, i32
  }
  func.func @transform_16(%arg0: i32) -> (i32, i32) {
    %c0_i32 = arith.constant 0 : i32
    %c0_i32_0 = arith.constant 0 : i32
    %c0_i32_1 = arith.constant 0 : i32
    return %c0_i32, %c0_i32_0 : i32, i32
  }
  func.func @transform_17(%arg0: i32) -> (i32, i32) {
    %c0_i32 = arith.constant 0 : i32
    %c0_i32_0 = arith.constant 0 : i32
    %c0_i32_1 = arith.constant 0 : i32
    return %c0_i32, %c0_i32_0 : i32, i32
  }
  func.func @transform_18(%arg0: i32) -> (i32, i32) {
    %c0_i32 = arith.constant 0 : i32
    %c0_i32_0 = arith.constant 0 : i32
    %c0_i32_1 = arith.constant 0 : i32
    return %c0_i32, %c0_i32_0 : i32, i32
  }
  func.func @transform_19(%arg0: i32) -> (i32, i32) {
    %c0_i32 = arith.constant 0 : i32
    %c0_i32_0 = arith.constant 0 : i32
    return %arg0, %c0_i32 : i32, i32
  }
}

</mosaic_0001>

<llo_original>
// kernel: _lambda_.1
$region0: #{_lambda_.1}
  #allocation0 [shape = 'u32[]', space=smem, size = 0x4, offset = 0x4, fixed_abs, tag = 'smem constant byte address 0x4 - core index']
  #allocation1 [shape = 'u32[144,128]{1,0:T(1,128)}', space=vmem, size = 0x12000, scoped, tag = 'internal scratch']
  #allocation2 [shape = 'f32[1,1]{1,0:T(1,128)S(1)}', space=vmem, size = 0x200, scoped, tag = 'scoped memory for _lambda_.1']
  %s0 = inlined_call_operand.vmem [shape: f32[8,4,2,2,16], index: 0, kind: input, shape index: {}]
  %s1 = inlined_call_operand.vmem [shape: bf16[16,192], index: 1, kind: input, shape index: {}]
  %s2 = inlined_call_operand.vmem [shape: bf16[64,192], index: 2, kind: input, shape index: {}]
  %s3 = inlined_call_operand.vmem [shape: f32[1,192], index: 3, kind: input, shape index: {}]
  %s4 = inlined_call_operand.vmem [shape: f32[1,64], index: 4, kind: input, shape index: {}]
  %s5 = inlined_call_operand.vmem [shape: bf16[32,32], index: 5, kind: input, shape index: {}]
  %s6 = inlined_call_operand.hbm [shape: f32[1,32], index: 6, kind: input, shape index: {}]
  %s7 = inlined_call_operand.vmem [shape: bf16[32,192], index: 7, kind: input, shape index: {}]
  %s8 = inlined_call_operand.vmem [shape: bf16[64,192], index: 8, kind: input, shape index: {}]
  %s9 = inlined_call_operand.vmem [shape: f32[1,192], index: 9, kind: input, shape index: {}]
  %s10 = inlined_call_operand.vmem [shape: f32[1,64], index: 10, kind: input, shape index: {}]
  %s11 = inlined_call_operand.vmem [shape: bf16[32,192], index: 11, kind: input, shape index: {}]
  %s12 = inlined_call_operand.vmem [shape: bf16[64,192], index: 12, kind: input, shape index: {}]
  %s13 = inlined_call_operand.vmem [shape: f32[1,192], index: 13, kind: input, shape index: {}]
  %s14 = inlined_call_operand.vmem [shape: f32[1,64], index: 14, kind: input, shape index: {}]
  %s15 = inlined_call_operand.vmem [shape: bf16[32,16], index: 15, kind: input, shape index: {}]
  %s16 = inlined_call_operand.vmem [shape: f32[1,16], index: 16, kind: input, shape index: {}]
  %s17 = inlined_call_operand.vmem [shape: bf16[16,1], index: 17, kind: input, shape index: {}]
  %s18 = inlined_call_operand.<no memory space> [shape: f32[1,1], index: 18, kind: input, shape index: {}]
  %s19 = inlined_call_operand.vmem [shape: f32[2,1], index: 19, kind: output, shape index: {}]
  %s20 = sld [smem:[#allocation0]]
  $region90: #{_lambda_.1} parent=0
    _
  %s22 = ssub.s32 1, %s20
  %s23 = scalar_select 0, %s22, %s20
  %v24 = vstv %s18
  %25 = vst [vmem:[#allocation2] sm:$0x1] %v24
  $region1: #{_lambda_.1} parent=0
    #allocation3 [shape = 'u8[512]{0}', space=vmem, size = 0x400, scoped, tag = 'input window, operand 6, single buffered']
    #allocation4 [shape = 's32[1]{0}', space=sflag, size = 0x4, scoped, tag = 'scoped memory for _lambda_.1']
    %26 = vsyncpa [#allocation4], 0
    // Predicated region
    $region2: #{_lambda_.1} parent=1 // pred_check
      _
    $region3: #{_lambda_.1} parent=1 // pred_check_branch
      %28 = sbr.rel (0) target = $region5
    $region4: #{_lambda_.1} parent=1 // pred_region
      _
    $region5: #{_lambda_.1} parent=1 // pred_fallthru
      _
    // Predicated region
    $region6: #{_lambda_.1} parent=1 // pred_check
      _
    $region7: #{_lambda_.1} parent=1 // pred_check_branch
      %30 = sbr.rel (0) target = $region9
    $region8: #{_lambda_.1} parent=1 // pred_region
      _
    $region9: #{_lambda_.1} parent=1 // pred_fallthru
      _
    // Predicated region
    $region10: #{_lambda_.1} parent=1 // pred_check
      _
    $region11: #{_lambda_.1} parent=1 // pred_check_branch
      %32 = sbr.rel (0) target = $region13
    $region12: #{_lambda_.1} parent=1 // pred_region
      _
    $region13: #{_lambda_.1} parent=1 // pred_fallthru
      _
    // Predicated region
    $region14: #{_lambda_.1} parent=1 // pred_check
      _
    $region15: #{_lambda_.1} parent=1 // pred_check_branch
      %34 = sbr.rel (0) target = $region17
    $region16: #{_lambda_.1} parent=1 // pred_region
      _
    $region17: #{_lambda_.1} parent=1 // pred_fallthru
      _
    // Predicated region
    $region18: #{_lambda_.1} parent=1 // pred_check
      _
    $region19: #{_lambda_.1} parent=1 // pred_check_branch
      %36 = sbr.rel (0) target = $region21
    $region20: #{_lambda_.1} parent=1 // pred_region
      _
    $region21: #{_lambda_.1} parent=1 // pred_fallthru
      _
    // Predicated region
    $region22: #{_lambda_.1} parent=1 // pred_check
      _
    $region23: #{_lambda_.1} parent=1 // pred_check_branch
      %38 = sbr.rel (0) target = $region25
    $region24: #{_lambda_.1} parent=1 // pred_region
      _
    $region25: #{_lambda_.1} parent=1 // pred_fallthru
      _
    // Predicated region
    $region26: #{_lambda_.1} parent=1 // pred_check
      _
    $region27: #{_lambda_.1} parent=1 // pred_check_branch
      %40 = sbr.rel (0) target = $region29
    $region28: #{_lambda_.1} parent=1 // pred_region
      %s42 = ssub.s32 16, 16
      %43 = vsyncadd [#allocation4], %s42
      %s45 = sshll.u32 [#allocation3], 4
      %s46 = int_to_ptr.vmem [resolvable:$true] %s45
      %48 = dma.hbm_to_vmem [thread:$0]  %s6, 16, %s46, [#allocation4]
    $region29: #{_lambda_.1} parent=1 // pred_fallthru
      _
    // Predicated region
    $region30: #{_lambda_.1} parent=1 // pred_check
      _
    $region31: #{_lambda_.1} parent=1 // pred_check_branch
      %50 = sbr.rel (0) target = $region33
    $region32: #{_lambda_.1} parent=1 // pred_region
      _
    $region33: #{_lambda_.1} parent=1 // pred_fallthru
      _
    // Predicated region
    $region34: #{_lambda_.1} parent=1 // pred_check
      _
    $region35: #{_lambda_.1} parent=1 // pred_check_branch
      %52 = sbr.rel (0) target = $region37
    $region36: #{_lambda_.1} parent=1 // pred_region
      _
    $region37: #{_lambda_.1} parent=1 // pred_fallthru
      _
    // Predicated region
    $region38: #{_lambda_.1} parent=1 // pred_check
      _
    $region39: #{_lambda_.1} parent=1 // pred_check_branch
      %54 = sbr.rel (0) target = $region41
    $region40: #{_lambda_.1} parent=1 // pred_region
      _
    $region41: #{_lambda_.1} parent=1 // pred_fallthru
      _
    // Predicated region
    $region42: #{_lambda_.1} parent=1 // pred_check
      _
    $region43: #{_lambda_.1} parent=1 // pred_check_branch
      %56 = sbr.rel (0) target = $region45
    $region44: #{_lambda_.1} parent=1 // pred_region
      _
    $region45: #{_lambda_.1} parent=1 // pred_fallthru
      _
    // Predicated region
    $region46: #{_lambda_.1} parent=1 // pred_check
      _
    $region47: #{_lambda_.1} parent=1 // pred_check_branch
      %58 = sbr.rel (0) target = $region49
    $region48: #{_lambda_.1} parent=1 // pred_region
      _
    $region49: #{_lambda_.1} parent=1 // pred_fallthru
      _
    // Predicated region
    $region50: #{_lambda_.1} parent=1 // pred_check
      _
    $region51: #{_lambda_.1} parent=1 // pred_check_branch
      %60 = sbr.rel (0) target = $region53
    $region52: #{_lambda_.1} parent=1 // pred_region
      _
    $region53: #{_lambda_.1} parent=1 // pred_fallthru
      _
    // Predicated region
    $region54: #{_lambda_.1} parent=1 // pred_check
      _
    $region55: #{_lambda_.1} parent=1 // pred_check_branch
      %62 = sbr.rel (0) target = $region57
    $region56: #{_lambda_.1} parent=1 // pred_region
      _
    $region57: #{_lambda_.1} parent=1 // pred_fallthru
      _
    // Predicated region
    $region58: #{_lambda_.1} parent=1 // pred_check
      _
    $region59: #{_lambda_.1} parent=1 // pred_check_branch
      %64 = sbr.rel (0) target = $region61
    $region60: #{_lambda_.1} parent=1 // pred_region
      _
    $region61: #{_lambda_.1} parent=1 // pred_fallthru
      _
    // Predicated region
    $region62: #{_lambda_.1} parent=1 // pred_check
      _
    $region63: #{_lambda_.1} parent=1 // pred_check_branch
      %66 = sbr.rel (0) target = $region65
    $region64: #{_lambda_.1} parent=1 // pred_region
      _
    $region65: #{_lambda_.1} parent=1 // pred_fallthru
      _
    // Predicated region
    $region66: #{_lambda_.1} parent=1 // pred_check
      _
    $region67: #{_lambda_.1} parent=1 // pred_check_branch
      %68 = sbr.rel (0) target = $region69
    $region68: #{_lambda_.1} parent=1 // pred_region
      _
    $region69: #{_lambda_.1} parent=1 // pred_fallthru
      _
    // Predicated region
    $region70: #{_lambda_.1} parent=1 // pred_check
      _
    $region71: #{_lambda_.1} parent=1 // pred_check_branch
      %70 = sbr.rel (0) target = $region73
    $region72: #{_lambda_.1} parent=1 // pred_region
      _
    $region73: #{_lambda_.1} parent=1 // pred_fallthru
      _
    // Predicated region
    $region74: #{_lambda_.1} parent=1 // pred_check
      _
    $region75: #{_lambda_.1} parent=1 // pred_check_branch
      %72 = sbr.rel (0) target = $region77
    $region76: #{_lambda_.1} parent=1 // pred_region
      _
    $region77: #{_lambda_.1} parent=1 // pred_fallthru
      _
    // Predicated region
    $region78: #{_lambda_.1} parent=1 // pred_check
      _
    $region79: #{_lambda_.1} parent=1 // pred_check_branch
      %74 = sbr.rel (0) target = $region81
    $region80: #{_lambda_.1} parent=1 // pred_region
      %75 = dma.done [#allocation4], 16
    $region81: #{_lambda_.1} parent=1 // pred_fallthru
      _
    %v77 = vld [vmem:[%s1] sm:$0xff]
    %v78 = vld [vmem:[%s1 + $0x8] sm:$0xff]
    %v79 = vld [vmem:[%s2] sm:$0xff]
    %v80 = vld [vmem:[%s2 + $0x8] sm:$0xff]
    %v81 = vld [vmem:[%s2 + $0x10] sm:$0xff]
    %v82 = vld [vmem:[%s2 + $0x18] sm:$0xff]
    %v83 = vld [vmem:[%s2 + $0x20] sm:$0xff]
    %v84 = vld [vmem:[%s2 + $0x28] sm:$0xff]
    %v85 = vld [vmem:[%s2 + $0x30] sm:$0xff]
    %v86 = vld [vmem:[%s2 + $0x38] sm:$0xff]
    %v87 = vld [vmem:[%s3] sm:$0x3]
    %v88 = vld [vmem:[%s4] sm:$0x1]
    %v89 = vld [vmem:[%s5] sm:$0xf]
    %v90 = vld [vmem:[%s5 + $0x4] sm:$0xf]
    %v91 = vld [vmem:[%s5 + $0x8] sm:$0xf]
    %v92 = vld [vmem:[%s5 + $0xc] sm:$0xf]
    %v93 = vld [vmem:[#allocation3] sm:$0x1]
    %v94 = vld [vmem:[%s7] sm:$0xff]
    %v95 = vld [vmem:[%s7 + $0x8] sm:$0xff]
    %v96 = vld [vmem:[%s7 + $0x10] sm:$0xff]
    %v97 = vld [vmem:[%s7 + $0x18] sm:$0xff]
    %v98 = vld [vmem:[%s8] sm:$0xff]
    %v99 = vld [vmem:[%s8 + $0x8] sm:$0xff]
    %v100 = vld [vmem:[%s8 + $0x10] sm:$0xff]
    %v101 = vld [vmem:[%s8 + $0x18] sm:$0xff]
    %v102 = vld [vmem:[%s8 + $0x20] sm:$0xff]
    %v103 = vld [vmem:[%s8 + $0x28] sm:$0xff]
    %v104 = vld [vmem:[%s8 + $0x30] sm:$0xff]
    %v105 = vld [vmem:[%s8 + $0x38] sm:$0xff]
    %v106 = vld [vmem:[%s9] sm:$0x3]
    %v107 = vld [vmem:[%s10] sm:$0x1]
    %v108 = vld [vmem:[%s11] sm:$0xff]
    %v109 = vld [vmem:[%s11 + $0x8] sm:$0xff]
    %v110 = vld [vmem:[%s11 + $0x10] sm:$0xff]
    %v111 = vld [vmem:[%s11 + $0x18] sm:$0xff]
    %v112 = vld [vmem:[%s12] sm:$0xff]
    %v113 = vld [vmem:[%s12 + $0x8] sm:$0xff]
    %v114 = vld [vmem:[%s12 + $0x10] sm:$0xff]
    %v115 = vld [vmem:[%s12 + $0x18] sm:$0xff]
    %v116 = vld [vmem:[%s12 + $0x20] sm:$0xff]
    %v117 = vld [vmem:[%s12 + $0x28] sm:$0xff]
    %v118 = vld [vmem:[%s12 + $0x30] sm:$0xff]
    %v119 = vld [vmem:[%s12 + $0x38] sm:$0xff]
    %v120 = vld [vmem:[%s13] sm:$0x3]
    %v121 = vld [vmem:[%s14] sm:$0x1]
    %v122 = vld [vmem:[%s15] sm:$0xf]
    %v123 = vld [vmem:[%s15 + $0x4] sm:$0xf]
    %v124 = vld [vmem:[%s15 + $0x8] sm:$0xf]
    %v125 = vld [vmem:[%s15 + $0xc] sm:$0xf]
    %v126 = vld [vmem:[%s16] sm:$0x1]
    %v127 = vld [vmem:[%s17] sm:$0xf]
    %v128 = vld [vmem:[%s17 + $0x4] sm:$0xf]
    %v129 = vld [vmem:[#allocation2] sm:$0x1]
    %v130 = vld [vmem:[%s0] sm:$0x3]
    %v131 = vld [vmem:[%s0 + $0x2] sm:$0x3]
    %v132 = vld [vmem:[%s0 + $0x4] sm:$0x3]
    %v133 = vld [vmem:[%s0 + $0x6] sm:$0x3]
    %v134 = vld [vmem:[%s0 + $0x8] sm:$0x3]
    %v135 = vld [vmem:[%s0 + $0xa] sm:$0x3]
    %v136 = vld [vmem:[%s0 + $0xc] sm:$0x3]
    %v137 = vld [vmem:[%s0 + $0xe] sm:$0x3]
    %v138 = vld [vmem:[%s0 + $0x10] sm:$0x3]
    %v139 = vld [vmem:[%s0 + $0x12] sm:$0x3]
    %v140 = vld [vmem:[%s0 + $0x14] sm:$0x3]
    %v141 = vld [vmem:[%s0 + $0x16] sm:$0x3]
    %v142 = vld [vmem:[%s0 + $0x18] sm:$0x3]
    %v143 = vld [vmem:[%s0 + $0x1a] sm:$0x3]
    %v144 = vld [vmem:[%s0 + $0x1c] sm:$0x3]
    %v145 = vld [vmem:[%s0 + $0x1e] sm:$0x3]
    %v146 = vld [vmem:[%s0 + $0x20] sm:$0x3]
    %v147 = vld [vmem:[%s0 + $0x22] sm:$0x3]
    %v148 = vld [vmem:[%s0 + $0x24] sm:$0x3]
    %v149 = vld [vmem:[%s0 + $0x26] sm:$0x3]
    %v150 = vld [vmem:[%s0 + $0x28] sm:$0x3]
    %v151 = vld [vmem:[%s0 + $0x2a] sm:$0x3]
    %v152 = vld [vmem:[%s0 + $0x2c] sm:$0x3]
    %v153 = vld [vmem:[%s0 + $0x2e] sm:$0x3]
    %v154 = vld [vmem:[%s0 + $0x30] sm:$0x3]
    %v155 = vld [vmem:[%s0 + $0x32] sm:$0x3]
    %v156 = vld [vmem:[%s0 + $0x34] sm:$0x3]
    %v157 = vld [vmem:[%s0 + $0x36] sm:$0x3]
    %v158 = vld [vmem:[%s0 + $0x38] sm:$0x3]
    %v159 = vld [vmem:[%s0 + $0x3a] sm:$0x3]
    %v160 = vld [vmem:[%s0 + $0x3c] sm:$0x3]
    %v161 = vld [vmem:[%s0 + $0x3e] sm:$0x3]
    %v162 = vld [vmem:[%s0 + $0x40] sm:$0x3]
    %v163 = vld [vmem:[%s0 + $0x42] sm:$0x3]
    %v164 = vld [vmem:[%s0 + $0x44] sm:$0x3]
    %v165 = vld [vmem:[%s0 + $0x46] sm:$0x3]
    %v166 = vld [vmem:[%s0 + $0x48] sm:$0x3]
    %v167 = vld [vmem:[%s0 + $0x4a] sm:$0x3]
    %v168 = vld [vmem:[%s0 + $0x4c] sm:$0x3]
    %v169 = vld [vmem:[%s0 + $0x4e] sm:$0x3]
    %v170 = vld [vmem:[%s0 + $0x50] sm:$0x3]
    %v171 = vld [vmem:[%s0 + $0x52] sm:$0x3]
    %v172 = vld [vmem:[%s0 + $0x54] sm:$0x3]
    %v173 = vld [vmem:[%s0 + $0x56] sm:$0x3]
    %v174 = vld [vmem:[%s0 + $0x58] sm:$0x3]
    %v175 = vld [vmem:[%s0 + $0x5a] sm:$0x3]
    %v176 = vld [vmem:[%s0 + $0x5c] sm:$0x3]
    %v177 = vld [vmem:[%s0 + $0x5e] sm:$0x3]
    %v178 = vld [vmem:[%s0 + $0x60] sm:$0x3]
    %v179 = vld [vmem:[%s0 + $0x62] sm:$0x3]
    %v180 = vld [vmem:[%s0 + $0x64] sm:$0x3]
    %v181 = vld [vmem:[%s0 + $0x66] sm:$0x3]
    %v182 = vld [vmem:[%s0 + $0x68] sm:$0x3]
    %v183 = vld [vmem:[%s0 + $0x6a] sm:$0x3]
    %v184 = vld [vmem:[%s0 + $0x6c] sm:$0x3]
    %v185 = vld [vmem:[%s0 + $0x6e] sm:$0x3]
    %v186 = vld [vmem:[%s0 + $0x70] sm:$0x3]
    %v187 = vld [vmem:[%s0 + $0x72] sm:$0x3]
    %v188 = vld [vmem:[%s0 + $0x74] sm:$0x3]
    %v189 = vld [vmem:[%s0 + $0x76] sm:$0x3]
    %v190 = vld [vmem:[%s0 + $0x78] sm:$0x3]
    %v191 = vld [vmem:[%s0 + $0x7a] sm:$0x3]
    %v192 = vld [vmem:[%s0 + $0x7c] sm:$0x3]
    %v193 = vld [vmem:[%s0 + $0x7e] sm:$0x3]
    %vm194 = vcmp.ne.f32.partialorder %v130, 0.0
    %vm195 = vcmp.ne.f32.partialorder %v131, 0.0
    %vm196 = vcmp.ne.f32.partialorder %v132, 0.0
    %vm197 = vcmp.ne.f32.partialorder %v133, 0.0
    %vm198 = vcmp.ne.f32.partialorder %v134, 0.0
    %vm199 = vcmp.ne.f32.partialorder %v135, 0.0
    %vm200 = vcmp.ne.f32.partialorder %v136, 0.0
    %vm201 = vcmp.ne.f32.partialorder %v137, 0.0
    %vm202 = vcmp.ne.f32.partialorder %v138, 0.0
    %vm203 = vcmp.ne.f32.partialorder %v139, 0.0
    %vm204 = vcmp.ne.f32.partialorder %v140, 0.0
    %vm205 = vcmp.ne.f32.partialorder %v141, 0.0
    %vm206 = vcmp.ne.f32.partialorder %v142, 0.0
    %vm207 = vcmp.ne.f32.partialorder %v143, 0.0
    %vm208 = vcmp.ne.f32.partialorder %v144, 0.0
    %vm209 = vcmp.ne.f32.partialorder %v145, 0.0
    %vm210 = vcmp.ne.f32.partialorder %v146, 0.0
    %vm211 = vcmp.ne.f32.partialorder %v147, 0.0
    %vm212 = vcmp.ne.f32.partialorder %v148, 0.0
    %vm213 = vcmp.ne.f32.partialorder %v149, 0.0
    %vm214 = vcmp.ne.f32.partialorder %v150, 0.0
    %vm215 = vcmp.ne.f32.partialorder %v151, 0.0
    %vm216 = vcmp.ne.f32.partialorder %v152, 0.0
    %vm217 = vcmp.ne.f32.partialorder %v153, 0.0
    %vm218 = vcmp.ne.f32.partialorder %v154, 0.0
    %vm219 = vcmp.ne.f32.partialorder %v155, 0.0
    %vm220 = vcmp.ne.f32.partialorder %v156, 0.0
    %vm221 = vcmp.ne.f32.partialorder %v157, 0.0
    %vm222 = vcmp.ne.f32.partialorder %v158, 0.0
    %vm223 = vcmp.ne.f32.partialorder %v159, 0.0
    %vm224 = vcmp.ne.f32.partialorder %v160, 0.0
    %vm225 = vcmp.ne.f32.partialorder %v161, 0.0
    %vm226 = vcmp.ne.f32.partialorder %v162, 0.0
    %vm227 = vcmp.ne.f32.partialorder %v163, 0.0
    %vm228 = vcmp.ne.f32.partialorder %v164, 0.0
    %vm229 = vcmp.ne.f32.partialorder %v165, 0.0
    %vm230 = vcmp.ne.f32.partialorder %v166, 0.0
    %vm231 = vcmp.ne.f32.partialorder %v167, 0.0
    %vm232 = vcmp.ne.f32.partialorder %v168, 0.0
    %vm233 = vcmp.ne.f32.partialorder %v169, 0.0
    %vm234 = vcmp.ne.f32.partialorder %v170, 0.0
    %vm235 = vcmp.ne.f32.partialorder %v171, 0.0
    %vm236 = vcmp.ne.f32.partialorder %v172, 0.0
    %vm237 = vcmp.ne.f32.partialorder %v173, 0.0
    %vm238 = vcmp.ne.f32.partialorder %v174, 0.0
    %vm239 = vcmp.ne.f32.partialorder %v175, 0.0
    %vm240 = vcmp.ne.f32.partialorder %v176, 0.0
    %vm241 = vcmp.ne.f32.partialorder %v177, 0.0
    %vm242 = vcmp.ne.f32.partialorder %v178, 0.0
    %vm243 = vcmp.ne.f32.partialorder %v179, 0.0
    %vm244 = vcmp.ne.f32.partialorder %v180, 0.0
    %vm245 = vcmp.ne.f32.partialorder %v181, 0.0
    %vm246 = vcmp.ne.f32.partialorder %v182, 0.0
    %vm247 = vcmp.ne.f32.partialorder %v183, 0.0
    %vm248 = vcmp.ne.f32.partialorder %v184, 0.0
    %vm249 = vcmp.ne.f32.partialorder %v185, 0.0
    %vm250 = vcmp.ne.f32.partialorder %v186, 0.0
    %vm251 = vcmp.ne.f32.partialorder %v187, 0.0
    %vm252 = vcmp.ne.f32.partialorder %v188, 0.0
    %vm253 = vcmp.ne.f32.partialorder %v189, 0.0
    %vm254 = vcmp.ne.f32.partialorder %v190, 0.0
    %vm255 = vcmp.ne.f32.partialorder %v191, 0.0
    %vm256 = vcmp.ne.f32.partialorder %v192, 0.0
    %vm257 = vcmp.ne.f32.partialorder %v193, 0.0
    %v258 = vsel %vm194, 1.0, 0.0
    %v259 = vsel %vm195, 1.0, 0.0
    %v260 = vsel %vm196, 1.0, 0.0
    %v261 = vsel %vm197, 1.0, 0.0
    %v262 = vsel %vm198, 1.0, 0.0
    %v263 = vsel %vm199, 1.0, 0.0
    %v264 = vsel %vm200, 1.0, 0.0
    %v265 = vsel %vm201, 1.0, 0.0
    %v266 = vsel %vm202, 1.0, 0.0
    %v267 = vsel %vm203, 1.0, 0.0
    %v268 = vsel %vm204, 1.0, 0.0
    %v269 = vsel %vm205, 1.0, 0.0
    %v270 = vsel %vm206, 1.0, 0.0
    %v271 = vsel %vm207, 1.0, 0.0
    %v272 = vsel %vm208, 1.0, 0.0
    %v273 = vsel %vm209, 1.0, 0.0
    %v274 = vsel %vm210, 1.0, 0.0
    %v275 = vsel %vm211, 1.0, 0.0
    %v276 = vsel %vm212, 1.0, 0.0
    %v277 = vsel %vm213, 1.0, 0.0
    %v278 = vsel %vm214, 1.0, 0.0
    %v279 = vsel %vm215, 1.0, 0.0
    %v280 = vsel %vm216, 1.0, 0.0
    %v281 = vsel %vm217, 1.0, 0.0
    %v282 = vsel %vm218, 1.0, 0.0
    %v283 = vsel %vm219, 1.0, 0.0
    %v284 = vsel %vm220, 1.0, 0.0
    %v285 = vsel %vm221, 1.0, 0.0
    %v286 = vsel %vm222, 1.0, 0.0
    %v287 = vsel %vm223, 1.0, 0.0
    %v288 = vsel %vm224, 1.0, 0.0
    %v289 = vsel %vm225, 1.0, 0.0
    %v290 = vsel %vm226, 1.0, 0.0
    %v291 = vsel %vm227, 1.0, 0.0
    %v292 = vsel %vm228, 1.0, 0.0
    %v293 = vsel %vm229, 1.0, 0.0
    %v294 = vsel %vm230, 1.0, 0.0
    %v295 = vsel %vm231, 1.0, 0.0
    %v296 = vsel %vm232, 1.0, 0.0
    %v297 = vsel %vm233, 1.0, 0.0
    %v298 = vsel %vm234, 1.0, 0.0
    %v299 = vsel %vm235, 1.0, 0.0
    %v300 = vsel %vm236, 1.0, 0.0
    %v301 = vsel %vm237, 1.0, 0.0
    %v302 = vsel %vm238, 1.0, 0.0
    %v303 = vsel %vm239, 1.0, 0.0
    %v304 = vsel %vm240, 1.0, 0.0
    %v305 = vsel %vm241, 1.0, 0.0
    %v306 = vsel %vm242, 1.0, 0.0
    %v307 = vsel %vm243, 1.0, 0.0
    %v308 = vsel %vm244, 1.0, 0.0
    %v309 = vsel %vm245, 1.0, 0.0
    %v310 = vsel %vm246, 1.0, 0.0
    %v311 = vsel %vm247, 1.0, 0.0
    %v312 = vsel %vm248, 1.0, 0.0
    %v313 = vsel %vm249, 1.0, 0.0
    %v314 = vsel %vm250, 1.0, 0.0
    %v315 = vsel %vm251, 1.0, 0.0
    %v316 = vsel %vm252, 1.0, 0.0
    %v317 = vsel %vm253, 1.0, 0.0
    %v318 = vsel %vm254, 1.0, 0.0
    %v319 = vsel %vm255, 1.0, 0.0
    %v320 = vsel %vm256, 1.0, 0.0
    %v321 = vsel %vm257, 1.0, 0.0
    %v386 = vcombine.low %v258, %v259
    %v387 = vcombine.low %v260, %v261
    %v389 = vunpack.c.l.s4 1983009808
    %v390 = vunpack.c.0.s8 %v389
    %v391 = vlaneseq
    %v392 = vshrl.u32 %v391, 7
    %v393 = vsub.s32 %v390, %v392
    %v394 = vrot.slane %v386, %v393
    %v396 = vunpack.c.l.s4 1983009808
    %v397 = vunpack.c.0.s8 %v396
    %v398 = vlaneseq
    %v399 = vshrl.u32 %v398, 7
    %v400 = vsub.s32 %v397, %v399
    %v401 = vrot.slane %v387, %v400
    %v402 = vcombine.low %v394, %v401
    %v403 = vcombine.low %v262, %v263
    %v404 = vcombine.low %v264, %v265
    %v406 = vunpack.c.l.s4 1983009808
    %v407 = vunpack.c.0.s8 %v406
    %v408 = vlaneseq
    %v409 = vshrl.u32 %v408, 7
    %v410 = vsub.s32 %v407, %v409
    %v411 = vrot.slane %v403, %v410
    %v413 = vunpack.c.l.s4 1983009808
    %v414 = vunpack.c.0.s8 %v413
    %v415 = vlaneseq
    %v416 = vshrl.u32 %v415, 7
    %v417 = vsub.s32 %v414, %v416
    %v418 = vrot.slane %v404, %v417
    %v419 = vcombine.low %v411, %v418
    %v420 = vcombine.low %v266, %v267
    %v421 = vcombine.low %v268, %v269
    %v423 = vunpack.c.l.s4 1983009808
    %v424 = vunpack.c.0.s8 %v423
    %v425 = vlaneseq
    %v426 = vshrl.u32 %v425, 7
    %v427 = vsub.s32 %v424, %v426
    %v428 = vrot.slane %v420, %v427
    %v430 = vunpack.c.l.s4 1983009808
    %v431 = vunpack.c.0.s8 %v430
    %v432 = vlaneseq
    %v433 = vshrl.u32 %v432, 7
    %v434 = vsub.s32 %v431, %v433
    %v435 = vrot.slane %v421, %v434
    %v436 = vcombine.low %v428, %v435
    %v437 = vcombine.low %v270, %v271
    %v438 = vcombine.low %v272, %v273
    %v440 = vunpack.c.l.s4 1983009808
    %v441 = vunpack.c.0.s8 %v440
    %v442 = vlaneseq
    %v443 = vshrl.u32 %v442, 7
    %v444 = vsub.s32 %v441, %v443
    %v445 = vrot.slane %v437, %v444
    %v447 = vunpack.c.l.s4 1983009808
    %v448 = vunpack.c.0.s8 %v447
    %v449 = vlaneseq
    %v450 = vshrl.u32 %v449, 7
    %v451 = vsub.s32 %v448, %v450
    %v452 = vrot.slane %v438, %v451
    %v453 = vcombine.low %v445, %v452
    %v454 = vcombine.low %v274, %v275
    %v455 = vcombine.low %v276, %v277
    %v457 = vunpack.c.l.s4 1983009808
    %v458 = vunpack.c.0.s8 %v457
    %v459 = vlaneseq
    %v460 = vshrl.u32 %v459, 7
    %v461 = vsub.s32 %v458, %v460
    %v462 = vrot.slane %v454, %v461
    %v464 = vunpack.c.l.s4 1983009808
    %v465 = vunpack.c.0.s8 %v464
    %v466 = vlaneseq
    %v467 = vshrl.u32 %v466, 7
    %v468 = vsub.s32 %v465, %v467
    %v469 = vrot.slane %v455, %v468
    %v470 = vcombine.low %v462, %v469
    %v471 = vcombine.low %v278, %v279
    %v472 = vcombine.low %v280, %v281
    %v474 = vunpack.c.l.s4 1983009808
    %v475 = vunpack.c.0.s8 %v474
    %v476 = vlaneseq
    %v477 = vshrl.u32 %v476, 7
    %v478 = vsub.s32 %v475, %v477
    %v479 = vrot.slane %v471, %v478
    %v481 = vunpack.c.l.s4 1983009808
    %v482 = vunpack.c.0.s8 %v481
    %v483 = vlaneseq
    %v484 = vshrl.u32 %v483, 7
    %v485 = vsub.s32 %v482, %v484
    %v486 = vrot.slane %v472, %v485
    %v487 = vcombine.low %v479, %v486
    %v488 = vcombine.low %v282, %v283
    %v489 = vcombine.low %v284, %v285
    %v491 = vunpack.c.l.s4 1983009808
    %v492 = vunpack.c.0.s8 %v491
    %v493 = vlaneseq
    %v494 = vshrl.u32 %v493, 7
    %v495 = vsub.s32 %v492, %v494
    %v496 = vrot.slane %v488, %v495
    %v498 = vunpack.c.l.s4 1983009808
    %v499 = vunpack.c.0.s8 %v498
    %v500 = vlaneseq
    %v501 = vshrl.u32 %v500, 7
    %v502 = vsub.s32 %v499, %v501
    %v503 = vrot.slane %v489, %v502
    %v504 = vcombine.low %v496, %v503
    %v505 = vcombine.low %v286, %v287
    %v506 = vcombine.low %v288, %v289
    %v508 = vunpack.c.l.s4 1983009808
    %v509 = vunpack.c.0.s8 %v508
    %v510 = vlaneseq
    %v511 = vshrl.u32 %v510, 7
    %v512 = vsub.s32 %v509, %v511
    %v513 = vrot.slane %v505, %v512
    %v515 = vunpack.c.l.s4 1983009808
    %v516 = vunpack.c.0.s8 %v515
    %v517 = vlaneseq
    %v518 = vshrl.u32 %v517, 7
    %v519 = vsub.s32 %v516, %v518
    %v520 = vrot.slane %v506, %v519
    %v521 = vcombine.low %v513, %v520
    %v522 = vcombine.low %v290, %v291
    %v523 = vcombine.low %v292, %v293
    %v525 = vunpack.c.l.s4 1983009808
    %v526 = vunpack.c.0.s8 %v525
    %v527 = vlaneseq
    %v528 = vshrl.u32 %v527, 7
    %v529 = vsub.s32 %v526, %v528
    %v530 = vrot.slane %v522, %v529
    %v532 = vunpack.c.l.s4 1983009808
    %v533 = vunpack.c.0.s8 %v532
    %v534 = vlaneseq
    %v535 = vshrl.u32 %v534, 7
    %v536 = vsub.s32 %v533, %v535
    %v537 = vrot.slane %v523, %v536
    %v538 = vcombine.low %v530, %v537
    %v539 = vcombine.low %v294, %v295
    %v540 = vcombine.low %v296, %v297
    %v542 = vunpack.c.l.s4 1983009808
    %v543 = vunpack.c.0.s8 %v542
    %v544 = vlaneseq
    %v545 = vshrl.u32 %v544, 7
    %v546 = vsub.s32 %v543, %v545
    %v547 = vrot.slane %v539, %v546
    %v549 = vunpack.c.l.s4 1983009808
    %v550 = vunpack.c.0.s8 %v549
    %v551 = vlaneseq
    %v552 = vshrl.u32 %v551, 7
    %v553 = vsub.s32 %v550, %v552
    %v554 = vrot.slane %v540, %v553
    %v555 = vcombine.low %v547, %v554
    %v556 = vcombine.low %v298, %v299
    %v557 = vcombine.low %v300, %v301
    %v559 = vunpack.c.l.s4 1983009808
    %v560 = vunpack.c.0.s8 %v559
    %v561 = vlaneseq
    %v562 = vshrl.u32 %v561, 7
    %v563 = vsub.s32 %v560, %v562
    %v564 = vrot.slane %v556, %v563
    %v566 = vunpack.c.l.s4 1983009808
    %v567 = vunpack.c.0.s8 %v566
    %v568 = vlaneseq
    %v569 = vshrl.u32 %v568, 7
    %v570 = vsub.s32 %v567, %v569
    %v571 = vrot.slane %v557, %v570
    %v572 = vcombine.low %v564, %v571
    %v573 = vcombine.low %v302, %v303
    %v574 = vcombine.low %v304, %v305
    %v576 = vunpack.c.l.s4 1983009808
    %v577 = vunpack.c.0.s8 %v576
    %v578 = vlaneseq
    %v579 = vshrl.u32 %v578, 7
    %v580 = vsub.s32 %v577, %v579
    %v581 = vrot.slane %v573, %v580
    %v583 = vunpack.c.l.s4 1983009808
    %v584 = vunpack.c.0.s8 %v583
    %v585 = vlaneseq
    %v586 = vshrl.u32 %v585, 7
    %v587 = vsub.s32 %v584, %v586
    %v588 = vrot.slane %v574, %v587
    %v589 = vcombine.low %v581, %v588
    %v590 = vcombine.low %v306, %v307
    %v591 = vcombine.low %v308, %v309
    %v593 = vunpack.c.l.s4 1983009808
    %v594 = vunpack.c.0.s8 %v593
    %v595 = vlaneseq
    %v596 = vshrl.u32 %v595, 7
    %v597 = vsub.s32 %v594, %v596
    %v598 = vrot.slane %v590, %v597
    %v600 = vunpack.c.l.s4 1983009808
    %v601 = vunpack.c.0.s8 %v600
    %v602 = vlaneseq
    %v603 = vshrl.u32 %v602, 7
    %v604 = vsub.s32 %v601, %v603
    %v605 = vrot.slane %v591, %v604
    %v606 = vcombine.low %v598, %v605
    %v607 = vcombine.low %v310, %v311
    %v608 = vcombine.low %v312, %v313
    %v610 = vunpack.c.l.s4 1983009808
    %v611 = vunpack.c.0.s8 %v610
    %v612 = vlaneseq
    %v613 = vshrl.u32 %v612, 7
    %v614 = vsub.s32 %v611, %v613
    %v615 = vrot.slane %v607, %v614
    %v617 = vunpack.c.l.s4 1983009808
    %v618 = vunpack.c.0.s8 %v617
    %v619 = vlaneseq
    %v620 = vshrl.u32 %v619, 7
    %v621 = vsub.s32 %v618, %v620
    %v622 = vrot.slane %v608, %v621
    %v623 = vcombine.low %v615, %v622
    %v624 = vcombine.low %v314, %v315
    %v625 = vcombine.low %v316, %v317
    %v627 = vunpack.c.l.s4 1983009808
    %v628 = vunpack.c.0.s8 %v627
    %v629 = vlaneseq
    %v630 = vshrl.u32 %v629, 7
    %v631 = vsub.s32 %v628, %v630
    %v632 = vrot.slane %v624, %v631
    %v634 = vunpack.c.l.s4 1983009808
    %v635 = vunpack.c.0.s8 %v634
    %v636 = vlaneseq
    %v637 = vshrl.u32 %v636, 7
    %v638 = vsub.s32 %v635, %v637
    %v639 = vrot.slane %v625, %v638
    %v640 = vcombine.low %v632, %v639
    %v641 = vcombine.low %v318, %v319
    %v642 = vcombine.low %v320, %v321
    %v644 = vunpack.c.l.s4 1983009808
    %v645 = vunpack.c.0.s8 %v644
    %v646 = vlaneseq
    %v647 = vshrl.u32 %v646, 7
    %v648 = vsub.s32 %v645, %v647
    %v649 = vrot.slane %v641, %v648
    %v651 = vunpack.c.l.s4 1983009808
    %v652 = vunpack.c.0.s8 %v651
    %v653 = vlaneseq
    %v654 = vshrl.u32 %v653, 7
    %v655 = vsub.s32 %v652, %v654
    %v656 = vrot.slane %v642, %v655
    %v657 = vcombine.low %v649, %v656
    %vm674 = vcmask 130048
    %v675 = vsel %vm674, %v402, inf
    %676 = vmin.xlane.f32.xlu0 %v675
    %v677 = vpop.xlane.xlu0 %676
    %v678 = vsel %vm674, %v419, inf
    %679 = vmin.xlane.f32.xlu0 %v678
    %v680 = vpop.xlane.xlu0 %679
    %v681 = vsel %vm674, %v436, inf
    %682 = vmin.xlane.f32.xlu0 %v681
    %v683 = vpop.xlane.xlu0 %682
    %v684 = vsel %vm674, %v453, inf
    %685 = vmin.xlane.f32.xlu0 %v684
    %v686 = vpop.xlane.xlu0 %685
    %v687 = vsel %vm674, %v470, inf
    %688 = vmin.xlane.f32.xlu0 %v687
    %v689 = vpop.xlane.xlu0 %688
    %v690 = vsel %vm674, %v487, inf
    %691 = vmin.xlane.f32.xlu0 %v690
    %v692 = vpop.xlane.xlu0 %691
    %v693 = vsel %vm674, %v504, inf
    %694 = vmin.xlane.f32.xlu0 %v693
    %v695 = vpop.xlane.xlu0 %694
    %v696 = vsel %vm674, %v521, inf
    %697 = vmin.xlane.f32.xlu0 %v696
    %v698 = vpop.xlane.xlu0 %697
    %v699 = vsel %vm674, %v538, inf
    %700 = vmin.xlane.f32.xlu0 %v699
    %v701 = vpop.xlane.xlu0 %700
    %v702 = vsel %vm674, %v555, inf
    %703 = vmin.xlane.f32.xlu0 %v702
    %v704 = vpop.xlane.xlu0 %703
    %v705 = vsel %vm674, %v572, inf
    %706 = vmin.xlane.f32.xlu0 %v705
    %v707 = vpop.xlane.xlu0 %706
    %v708 = vsel %vm674, %v589, inf
    %709 = vmin.xlane.f32.xlu0 %v708
    %v710 = vpop.xlane.xlu0 %709
    %v711 = vsel %vm674, %v606, inf
    %712 = vmin.xlane.f32.xlu0 %v711
    %v713 = vpop.xlane.xlu0 %712
    %v714 = vsel %vm674, %v623, inf
    %715 = vmin.xlane.f32.xlu0 %v714
    %v716 = vpop.xlane.xlu0 %715
    %v717 = vsel %vm674, %v640, inf
    %718 = vmin.xlane.f32.xlu0 %v717
    %v719 = vpop.xlane.xlu0 %718
    %v720 = vsel %vm674, %v657, inf
    %721 = vmin.xlane.f32.xlu0 %v720
    %v722 = vpop.xlane.xlu0 %721
    %v787 = vcombine.low %v130, %v131
    %v788 = vcombine.low %v132, %v133
    %v790 = vunpack.c.l.s4 1983009808
    %v791 = vunpack.c.0.s8 %v790
    %v792 = vlaneseq
    %v793 = vshrl.u32 %v792, 7
    %v794 = vsub.s32 %v791, %v793
    %v795 = vrot.slane %v787, %v794
    %v797 = vunpack.c.l.s4 1983009808
    %v798 = vunpack.c.0.s8 %v797
    %v799 = vlaneseq
    %v800 = vshrl.u32 %v799, 7
    %v801 = vsub.s32 %v798, %v800
    %v802 = vrot.slane %v788, %v801
    %v803 = vcombine.low %v795, %v802
    %v804 = vcombine.low %v134, %v135
    %v805 = vcombine.low %v136, %v137
    %v807 = vunpack.c.l.s4 1983009808
    %v808 = vunpack.c.0.s8 %v807
    %v809 = vlaneseq
    %v810 = vshrl.u32 %v809, 7
    %v811 = vsub.s32 %v808, %v810
    %v812 = vrot.slane %v804, %v811
    %v814 = vunpack.c.l.s4 1983009808
    %v815 = vunpack.c.0.s8 %v814
    %v816 = vlaneseq
    %v817 = vshrl.u32 %v816, 7
    %v818 = vsub.s32 %v815, %v817
    %v819 = vrot.slane %v805, %v818
    %v820 = vcombine.low %v812, %v819
    %v821 = vcombine.low %v138, %v139
    %v822 = vcombine.low %v140, %v141
    %v824 = vunpack.c.l.s4 1983009808
    %v825 = vunpack.c.0.s8 %v824
    %v826 = vlaneseq
    %v827 = vshrl.u32 %v826, 7
    %v828 = vsub.s32 %v825, %v827
    %v829 = vrot.slane %v821, %v828
    %v831 = vunpack.c.l.s4 1983009808
    %v832 = vunpack.c.0.s8 %v831
    %v833 = vlaneseq
    %v834 = vshrl.u32 %v833, 7
    %v835 = vsub.s32 %v832, %v834
    %v836 = vrot.slane %v822, %v835
    %v837 = vcombine.low %v829, %v836
    %v838 = vcombine.low %v142, %v143
    %v839 = vcombine.low %v144, %v145
    %v841 = vunpack.c.l.s4 1983009808
    %v842 = vunpack.c.0.s8 %v841
    %v843 = vlaneseq
    %v844 = vshrl.u32 %v843, 7
    %v845 = vsub.s32 %v842, %v844
    %v846 = vrot.slane %v838, %v845
    %v848 = vunpack.c.l.s4 1983009808
    %v849 = vunpack.c.0.s8 %v848
    %v850 = vlaneseq
    %v851 = vshrl.u32 %v850, 7
    %v852 = vsub.s32 %v849, %v851
    %v853 = vrot.slane %v839, %v852
    %v854 = vcombine.low %v846, %v853
    %v855 = vcombine.low %v146, %v147
    %v856 = vcombine.low %v148, %v149
    %v858 = vunpack.c.l.s4 1983009808
    %v859 = vunpack.c.0.s8 %v858
    %v860 = vlaneseq
    %v861 = vshrl.u32 %v860, 7
    %v862 = vsub.s32 %v859, %v861
    %v863 = vrot.slane %v855, %v862
    %v865 = vunpack.c.l.s4 1983009808
    %v866 = vunpack.c.0.s8 %v865
    %v867 = vlaneseq
    %v868 = vshrl.u32 %v867, 7
    %v869 = vsub.s32 %v866, %v868
    %v870 = vrot.slane %v856, %v869
    %v871 = vcombine.low %v863, %v870
    %v872 = vcombine.low %v150, %v151
    %v873 = vcombine.low %v152, %v153
    %v875 = vunpack.c.l.s4 1983009808
    %v876 = vunpack.c.0.s8 %v875
    %v877 = vlaneseq
    %v878 = vshrl.u32 %v877, 7
    %v879 = vsub.s32 %v876, %v878
    %v880 = vrot.slane %v872, %v879
    %v882 = vunpack.c.l.s4 1983009808
    %v883 = vunpack.c.0.s8 %v882
    %v884 = vlaneseq
    %v885 = vshrl.u32 %v884, 7
    %v886 = vsub.s32 %v883, %v885
    %v887 = vrot.slane %v873, %v886
    %v888 = vcombine.low %v880, %v887
    %v889 = vcombine.low %v154, %v155
    %v890 = vcombine.low %v156, %v157
    %v892 = vunpack.c.l.s4 1983009808
    %v893 = vunpack.c.0.s8 %v892
    %v894 = vlaneseq
    %v895 = vshrl.u32 %v894, 7
    %v896 = vsub.s32 %v893, %v895
    %v897 = vrot.slane %v889, %v896
    %v899 = vunpack.c.l.s4 1983009808
    %v900 = vunpack.c.0.s8 %v899
    %v901 = vlaneseq
    %v902 = vshrl.u32 %v901, 7
    %v903 = vsub.s32 %v900, %v902
    %v904 = vrot.slane %v890, %v903
    %v905 = vcombine.low %v897, %v904
    %v906 = vcombine.low %v158, %v159
    %v907 = vcombine.low %v160, %v161
    %v909 = vunpack.c.l.s4 1983009808
    %v910 = vunpack.c.0.s8 %v909
    %v911 = vlaneseq
    %v912 = vshrl.u32 %v911, 7
    %v913 = vsub.s32 %v910, %v912
    %v914 = vrot.slane %v906, %v913
    %v916 = vunpack.c.l.s4 1983009808
    %v917 = vunpack.c.0.s8 %v916
    %v918 = vlaneseq
    %v919 = vshrl.u32 %v918, 7
    %v920 = vsub.s32 %v917, %v919
    %v921 = vrot.slane %v907, %v920
    %v922 = vcombine.low %v914, %v921
    %v923 = vcombine.low %v162, %v163
    %v924 = vcombine.low %v164, %v165
    %v926 = vunpack.c.l.s4 1983009808
    %v927 = vunpack.c.0.s8 %v926
    %v928 = vlaneseq
    %v929 = vshrl.u32 %v928, 7
    %v930 = vsub.s32 %v927, %v929
    %v931 = vrot.slane %v923, %v930
    %v933 = vunpack.c.l.s4 1983009808
    %v934 = vunpack.c.0.s8 %v933
    %v935 = vlaneseq
    %v936 = vshrl.u32 %v935, 7
    %v937 = vsub.s32 %v934, %v936
    %v938 = vrot.slane %v924, %v937
    %v939 = vcombine.low %v931, %v938
    %v940 = vcombine.low %v166, %v167
    %v941 = vcombine.low %v168, %v169
    %v943 = vunpack.c.l.s4 1983009808
    %v944 = vunpack.c.0.s8 %v943
    %v945 = vlaneseq
    %v946 = vshrl.u32 %v945, 7
    %v947 = vsub.s32 %v944, %v946
    %v948 = vrot.slane %v940, %v947
    %v950 = vunpack.c.l.s4 1983009808
    %v951 = vunpack.c.0.s8 %v950
    %v952 = vlaneseq
    %v953 = vshrl.u32 %v952, 7
    %v954 = vsub.s32 %v951, %v953
    %v955 = vrot.slane %v941, %v954
    %v956 = vcombine.low %v948, %v955
    %v957 = vcombine.low %v170, %v171
    %v958 = vcombine.low %v172, %v173
    %v960 = vunpack.c.l.s4 1983009808
    %v961 = vunpack.c.0.s8 %v960
    %v962 = vlaneseq
    %v963 = vshrl.u32 %v962, 7
    %v964 = vsub.s32 %v961, %v963
    %v965 = vrot.slane %v957, %v964
    %v967 = vunpack.c.l.s4 1983009808
    %v968 = vunpack.c.0.s8 %v967
    %v969 = vlaneseq
    %v970 = vshrl.u32 %v969, 7
    %v971 = vsub.s32 %v968, %v970
    %v972 = vrot.slane %v958, %v971
    %v973 = vcombine.low %v965, %v972
    %v974 = vcombine.low %v174, %v175
    %v975 = vcombine.low %v176, %v177
    %v977 = vunpack.c.l.s4 1983009808
    %v978 = vunpack.c.0.s8 %v977
    %v979 = vlaneseq
    %v980 = vshrl.u32 %v979, 7
    %v981 = vsub.s32 %v978, %v980
    %v982 = vrot.slane %v974, %v981
    %v984 = vunpack.c.l.s4 1983009808
    %v985 = vunpack.c.0.s8 %v984
    %v986 = vlaneseq
    %v987 = vshrl.u32 %v986, 7
    %v988 = vsub.s32 %v985, %v987
    %v989 = vrot.slane %v975, %v988
    %v990 = vcombine.low %v982, %v989
    %v991 = vcombine.low %v178, %v179
    %v992 = vcombine.low %v180, %v181
    %v994 = vunpack.c.l.s4 1983009808
    %v995 = vunpack.c.0.s8 %v994
    %v996 = vlaneseq
    %v997 = vshrl.u32 %v996, 7
    %v998 = vsub.s32 %v995, %v997
    %v999 = vrot.slane %v991, %v998
    %v1001 = vunpack.c.l.s4 1983009808
    %v1002 = vunpack.c.0.s8 %v1001
    %v1003 = vlaneseq
    %v1004 = vshrl.u32 %v1003, 7
    %v1005 = vsub.s32 %v1002, %v1004
    %v1006 = vrot.slane %v992, %v1005
    %v1007 = vcombine.low %v999, %v1006
    %v1008 = vcombine.low %v182, %v183
    %v1009 = vcombine.low %v184, %v185
    %v1011 = vunpack.c.l.s4 1983009808
    %v1012 = vunpack.c.0.s8 %v1011
    %v1013 = vlaneseq
    %v1014 = vshrl.u32 %v1013, 7
    %v1015 = vsub.s32 %v1012, %v1014
    %v1016 = vrot.slane %v1008, %v1015
    %v1018 = vunpack.c.l.s4 1983009808
    %v1019 = vunpack.c.0.s8 %v1018
    %v1020 = vlaneseq
    %v1021 = vshrl.u32 %v1020, 7
    %v1022 = vsub.s32 %v1019, %v1021
    %v1023 = vrot.slane %v1009, %v1022
    %v1024 = vcombine.low %v1016, %v1023
    %v1025 = vcombine.low %v186, %v187
    %v1026 = vcombine.low %v188, %v189
    %v1028 = vunpack.c.l.s4 1983009808
    %v1029 = vunpack.c.0.s8 %v1028
    %v1030 = vlaneseq
    %v1031 = vshrl.u32 %v1030, 7
    %v1032 = vsub.s32 %v1029, %v1031
    %v1033 = vrot.slane %v1025, %v1032
    %v1035 = vunpack.c.l.s4 1983009808
    %v1036 = vunpack.c.0.s8 %v1035
    %v1037 = vlaneseq
    %v1038 = vshrl.u32 %v1037, 7
    %v1039 = vsub.s32 %v1036, %v1038
    %v1040 = vrot.slane %v1026, %v1039
    %v1041 = vcombine.low %v1033, %v1040
    %v1042 = vcombine.low %v190, %v191
    %v1043 = vcombine.low %v192, %v193
    %v1045 = vunpack.c.l.s4 1983009808
    %v1046 = vunpack.c.0.s8 %v1045
    %v1047 = vlaneseq
    %v1048 = vshrl.u32 %v1047, 7
    %v1049 = vsub.s32 %v1046, %v1048
    %v1050 = vrot.slane %v1042, %v1049
    %v1052 = vunpack.c.l.s4 1983009808
    %v1053 = vunpack.c.0.s8 %v1052
    %v1054 = vlaneseq
    %v1055 = vshrl.u32 %v1054, 7
    %v1056 = vsub.s32 %v1053, %v1055
    %v1057 = vrot.slane %v1043, %v1056
    %v1058 = vcombine.low %v1050, %v1057
    %v1075 = vpack.c.bf16 %v820, %v803
    %v1076 = vpack.c.bf16 %v854, %v837
    %v1077 = vpack.c.bf16 %v888, %v871
    %v1078 = vpack.c.bf16 %v922, %v905
    %v1079 = vpack.c.bf16 %v956, %v939
    %v1080 = vpack.c.bf16 %v990, %v973
    %v1081 = vpack.c.bf16 %v1024, %v1007
    %v1082 = vpack.c.bf16 %v1058, %v1041
    %v1084 = vlaneseq
    %v1085 = vshrl.u32 %v1084, 7
    %v1086 = vsub.s32 0, %v1085
    %v1087 = vrot.slane %v87, %v1086
    %v1088 = vlaneseq
    %v1089 = vshrl.u32 %v1088, 7
    %v1090 = vsub.s32 1, %v1089
    %v1091 = vrot.slane %v87, %v1090
    %v1096 = vunpack.c.l.b16 %v77
    %v1097 = vunpack.c.h.b16 %v77
    %v1098 = vunpack.c.l.b16 %v78
    %v1099 = vunpack.c.h.b16 %v78
    %v1100 = vpack.c.b16 %v1098, %v1096
    %v1101 = vpack.c.b16 %v1099, %v1097
    %v1105 = vsel %vm674, %v1075, 0
    %v1108 = vsel %vm674, %v1076, 0
    %v1111 = vsel %vm674, %v1077, 0
    %v1114 = vsel %vm674, %v1078, 0
    %v1117 = vsel %vm674, %v1079, 0
    %v1120 = vsel %vm674, %v1080, 0
    %v1123 = vsel %vm674, %v1081, 0
    %v1126 = vsel %vm674, %v1082, 0
    %1128 = vmatprep.subr.bf16.mxu0 %v1101
    %1129 = vmatpush1.bf16.msra.mxu0 %v1100
    %1130 = vmatprep.subr.bf16.mxu0 0
    %1131 = vmatpush1.bf16.msra.mxu0 0
    %1132 = vmatprep.subr.bf16.mxu0 0
    %1133 = vmatpush1.bf16.msra.mxu0 0
    %1134 = vmatprep.subr.bf16.mxu0 0
    %1135 = vmatpush1.bf16.msra.mxu0 0
    %1136 = vmatprep.subr.bf16.mxu0 0
    %1137 = vmatpush1.bf16.msra.mxu0 0
    %1138 = vmatprep.subr.bf16.mxu0 0
    %1139 = vmatpush1.bf16.msra.mxu0 0
    %1140 = vmatprep.subr.bf16.mxu0 0
    %1141 = vmatpush1.bf16.msra.mxu0 0
    %1142 = vmatprep.subr.bf16.mxu0 0
    %1143 = vmatpush1.bf16.msra.mxu0 0
    %1144 = vmatprep.subr.bf16.mxu0 0
    %1145 = vmatpush1.bf16.msra.mxu0 0
    %1146 = vmatprep.subr.bf16.mxu0 0
    %1147 = vmatpush1.bf16.msra.mxu0 0
    %1148 = vmatprep.subr.bf16.mxu0 0
    %1149 = vmatpush1.bf16.msra.mxu0 0
    %1150 = vmatprep.subr.bf16.mxu0 0
    %1151 = vmatpush1.bf16.msra.mxu0 0
    %1152 = vmatprep.subr.bf16.mxu0 0
    %1153 = vmatpush1.bf16.msra.mxu0 0
    %1154 = vmatprep.subr.bf16.mxu0 0
    %1155 = vmatpush1.bf16.msra.mxu0 0
    %1156 = vmatprep.subr.bf16.mxu0 0
    %1157 = vmatpush1.bf16.msra.mxu0 0
    %1158 = vmatprep.subr.bf16.mxu0 0
    %1159 = vmatpush1.bf16.msra.mxu0 0
    %1160 = vmatprep.mubr.bf16.mxu0 0
    %1161 = vmatmul.mubr.bf16.gmra.mrb[0].mxu0 %v1105
    %v1162 = vpop.f32.mrb[0].mxu0
    %v1163 = vadd.f32 %v1087, %v1162
    %v1164 = vpop.f32.mrb[0].mxu0
    %v1165 = vadd.f32 %v1091, %v1164
    %v1166 = vpop.f32.mrb[0].mxu0
    %v1167 = vadd.f32 %v1087, %v1166
    %v1168 = vpop.f32.mrb[0].mxu0
    %v1169 = vadd.f32 %v1091, %v1168
    %1170 = vmatprep.mubr.bf16.mxu0 0
    %1171 = vmatmul.mubr.bf16.gmra.mrb[0].mxu0 %v1108
    %v1172 = vpop.f32.mrb[0].mxu0
    %v1173 = vadd.f32 %v1087, %v1172
    %v1174 = vpop.f32.mrb[0].mxu0
    %v1175 = vadd.f32 %v1091, %v1174
    %v1176 = vpop.f32.mrb[0].mxu0
    %v1177 = vadd.f32 %v1087, %v1176
    %v1178 = vpop.f32.mrb[0].mxu0
    %v1179 = vadd.f32 %v1091, %v1178
    %1180 = vmatprep.mubr.bf16.mxu0 0
    %1181 = vmatmul.mubr.bf16.gmra.mrb[0].mxu0 %v1111
    %v1182 = vpop.f32.mrb[0].mxu0
    %v1183 = vadd.f32 %v1087, %v1182
    %v1184 = vpop.f32.mrb[0].mxu0
    %v1185 = vadd.f32 %v1091, %v1184
    %v1186 = vpop.f32.mrb[0].mxu0
    %v1187 = vadd.f32 %v1087, %v1186
    %v1188 = vpop.f32.mrb[0].mxu0
    %v1189 = vadd.f32 %v1091, %v1188
    %1190 = vmatprep.mubr.bf16.mxu0 0
    %1191 = vmatmul.mubr.bf16.gmra.mrb[0].mxu0 %v1114
    %v1192 = vpop.f32.mrb[0].mxu0
    %v1193 = vadd.f32 %v1087, %v1192
    %v1194 = vpop.f32.mrb[0].mxu0
    %v1195 = vadd.f32 %v1091, %v1194
    %v1196 = vpop.f32.mrb[0].mxu0
    %v1197 = vadd.f32 %v1087, %v1196
    %v1198 = vpop.f32.mrb[0].mxu0
    %v1199 = vadd.f32 %v1091, %v1198
    %1200 = vmatprep.mubr.bf16.mxu0 0
    %1201 = vmatmul.mubr.bf16.gmra.mrb[0].mxu0 %v1117
    %v1202 = vpop.f32.mrb[0].mxu0
    %v1203 = vadd.f32 %v1087, %v1202
    %v1204 = vpop.f32.mrb[0].mxu0
    %v1205 = vadd.f32 %v1091, %v1204
    %v1206 = vpop.f32.mrb[0].mxu0
    %v1207 = vadd.f32 %v1087, %v1206
    %v1208 = vpop.f32.mrb[0].mxu0
    %v1209 = vadd.f32 %v1091, %v1208
    %1210 = vmatprep.mubr.bf16.mxu0 0
    %1211 = vmatmul.mubr.bf16.gmra.mrb[0].mxu0 %v1120
    %v1212 = vpop.f32.mrb[0].mxu0
    %v1213 = vadd.f32 %v1087, %v1212
    %v1214 = vpop.f32.mrb[0].mxu0
    %v1215 = vadd.f32 %v1091, %v1214
    %v1216 = vpop.f32.mrb[0].mxu0
    %v1217 = vadd.f32 %v1087, %v1216
    %v1218 = vpop.f32.mrb[0].mxu0
    %v1219 = vadd.f32 %v1091, %v1218
    %1220 = vmatprep.mubr.bf16.mxu0 0
    %1221 = vmatmul.mubr.bf16.gmra.mrb[0].mxu0 %v1123
    %v1222 = vpop.f32.mrb[0].mxu0
    %v1223 = vadd.f32 %v1087, %v1222
    %v1224 = vpop.f32.mrb[0].mxu0
    %v1225 = vadd.f32 %v1091, %v1224
    %v1226 = vpop.f32.mrb[0].mxu0
    %v1227 = vadd.f32 %v1087, %v1226
    %v1228 = vpop.f32.mrb[0].mxu0
    %v1229 = vadd.f32 %v1091, %v1228
    %1230 = vmatprep.mubr.bf16.mxu0 0
    %1231 = vmatmul.mubr.bf16.gmra.mrb[0].mxu0 %v1126
    %v1232 = vpop.f32.mrb[0].mxu0
    %v1233 = vadd.f32 %v1087, %v1232
    %v1234 = vpop.f32.mrb[0].mxu0
    %v1235 = vadd.f32 %v1091, %v1234
    %v1236 = vpop.f32.mrb[0].mxu0
    %v1237 = vadd.f32 %v1087, %v1236
    %v1238 = vpop.f32.mrb[0].mxu0
    %v1239 = vadd.f32 %v1091, %v1238
    %1240 = vdwg.mxu0
    %v1241 = vlaneseq
    %v1242 = vand.u32 %v1241, 127
    %vm1243 = vcmp.lt.s32.totalorder %v1242, 0
    %v1244 = vsub.s32 0, %v1242
    %v1245 = vsel %vm1243, %v1244, %v1242
    %v1246 = vshrl.u32 %v1245, 6
    %v1247 = vand.u32 %v1245, 63
    %v1248 = vsub.s32 0, %v1247
    %v1249 = vsel %vm1243, %v1248, %v1247
    %vm1250 = vcmp.ne.s32.totalorder %v1249, 0
    %vm1251 = vcmp.lt.s32.totalorder %v1249, 0
    %vm1252 = vmand %vm1251, %vm1250
    %v1253 = vadd.s32 %v1249, 64
    %v1254 = vsel %vm1252, %v1253, %v1249
    %vm1255 = vcmp.lt.s32.totalorder %v1254, 32
    %vm1256 = vcmp.lt.s32.totalorder %v1242, 32
    %v1257 = vsel %vm1255, 1, 0
    %vm1258 = vcmp.eq.s32.totalorder %v1257, 1
    %v1259 = vsel %vm1258, %v1163, %v1233
    %v1260 = vsel %vm1258, %v1167, %v1237
    %v1261 = vsel %vm1258, %v1173, %v1223
    %v1262 = vsel %vm1258, %v1177, %v1227
    %v1263 = vsel %vm1258, %v1183, %v1213
    %v1264 = vsel %vm1258, %v1187, %v1217
    %v1265 = vsel %vm1258, %v1193, %v1203
    %v1266 = vsel %vm1258, %v1197, %v1207
    %v1267 = vsel %vm1258, %v1203, %v1193
    %v1268 = vsel %vm1258, %v1207, %v1197
    %v1269 = vsel %vm1258, %v1213, %v1183
    %v1270 = vsel %vm1258, %v1217, %v1187
    %v1271 = vsel %vm1258, %v1223, %v1173
    %v1272 = vsel %vm1258, %v1227, %v1177
    %v1273 = vsel %vm1258, %v1233, %v1163
    %v1274 = vsel %vm1258, %v1237, %v1167
    %v1275 = vsel %vm1256, 1, 0
    %vm1276 = vcmp.eq.s32.totalorder %v1275, 1
    %v1277 = vsel %vm1276, %v1165, %v1235
    %v1278 = vsel %vm1276, %v1169, %v1239
    %v1279 = vsel %vm1276, %v1175, %v1225
    %v1280 = vsel %vm1276, %v1179, %v1229
    %v1281 = vsel %vm1276, %v1185, %v1215
    %v1282 = vsel %vm1276, %v1189, %v1219
    %v1283 = vsel %vm1276, %v1195, %v1205
    %v1284 = vsel %vm1276, %v1199, %v1209
    %v1285 = vsel %vm1276, %v1205, %v1195
    %v1286 = vsel %vm1276, %v1209, %v1199
    %v1287 = vsel %vm1276, %v1215, %v1185
    %v1288 = vsel %vm1276, %v1219, %v1189
    %v1289 = vsel %vm1276, %v1225, %v1175
    %v1290 = vsel %vm1276, %v1229, %v1179
    %v1291 = vsel %vm1276, %v1235, %v1165
    %v1292 = vsel %vm1276, %v1239, %v1169
    %v1301 = vunpack.c.l.b16 %v79
    %v1302 = vunpack.c.h.b16 %v79
    %v1303 = vunpack.c.l.b16 %v80
    %v1304 = vunpack.c.h.b16 %v80
    %v1305 = vunpack.c.l.b16 %v81
    %v1306 = vunpack.c.h.b16 %v81
    %v1307 = vunpack.c.l.b16 %v82
    %v1308 = vunpack.c.h.b16 %v82
    %v1309 = vunpack.c.l.b16 %v83
    %v1310 = vunpack.c.h.b16 %v83
    %v1311 = vunpack.c.l.b16 %v84
    %v1312 = vunpack.c.h.b16 %v84
    %v1313 = vunpack.c.l.b16 %v85
    %v1314 = vunpack.c.h.b16 %v85
    %v1315 = vunpack.c.l.b16 %v86
    %v1316 = vunpack.c.h.b16 %v86
    %v1317 = vpack.c.b16 %v1303, %v1301
    %v1318 = vpack.c.b16 %v1304, %v1302
    %v1319 = vpack.c.b16 %v1307, %v1305
    %v1320 = vpack.c.b16 %v1308, %v1306
    %v1321 = vpack.c.b16 %v1311, %v1309
    %v1322 = vpack.c.b16 %v1312, %v1310
    %v1323 = vpack.c.b16 %v1315, %v1313
    %v1324 = vpack.c.b16 %v1316, %v1314
    %vm1333 = vcmask 523264
    %v1335 = vsel %vm1333, 0, 0
    %1337 = vmatprep.subr.bf16.mxu0 %v1318
    %1338 = vmatpush1.bf16.msra.mxu0 %v1317
    %1339 = vmatprep.subr.bf16.mxu0 %v1320
    %1340 = vmatpush1.bf16.msra.mxu0 %v1319
    %1341 = vmatprep.subr.bf16.mxu0 %v1322
    %1342 = vmatpush1.bf16.msra.mxu0 %v1321
    %1343 = vmatprep.subr.bf16.mxu0 %v1324
    %1344 = vmatpush1.bf16.msra.mxu0 %v1323
    %1345 = vmatprep.subr.bf16.mxu0 0
    %1346 = vmatpush1.bf16.msra.mxu0 0
    %1347 = vmatprep.subr.bf16.mxu0 0
    %1348 = vmatpush1.bf16.msra.mxu0 0
    %1349 = vmatprep.subr.bf16.mxu0 0
    %1350 = vmatpush1.bf16.msra.mxu0 0
    %1351 = vmatprep.subr.bf16.mxu0 0
    %1352 = vmatpush1.bf16.msra.mxu0 0
    %1353 = vmatprep.subr.bf16.mxu0 0
    %1354 = vmatpush1.bf16.msra.mxu0 0
    %1355 = vmatprep.subr.bf16.mxu0 0
    %1356 = vmatpush1.bf16.msra.mxu0 0
    %1357 = vmatprep.subr.bf16.mxu0 0
    %1358 = vmatpush1.bf16.msra.mxu0 0
    %1359 = vmatprep.subr.bf16.mxu0 0
    %1360 = vmatpush1.bf16.msra.mxu0 0
    %1361 = vmatprep.subr.bf16.mxu0 0
    %1362 = vmatpush1.bf16.msra.mxu0 0
    %1363 = vmatprep.subr.bf16.mxu0 0
    %1364 = vmatpush1.bf16.msra.mxu0 0
    %1365 = vmatprep.subr.bf16.mxu0 0
    %1366 = vmatpush1.bf16.msra.mxu0 0
    %1367 = vmatprep.subr.bf16.mxu0 0
    %1368 = vmatpush1.bf16.msra.mxu0 0
    %1369 = vmatprep.mubr.bf16.mxu0 0
    %1370 = vmatmul.mubr.bf16.gmra.mrb[0].mxu0 %v1335
    %v1371 = vpop.f32.mrb[0].mxu0
    %v1372 = vadd.f32 0.0, %v1371
    %v1373 = vpop.f32.mrb[0].mxu0
    %v1374 = vadd.f32 0.0, %v1373
    %v1375 = vpop.f32.mrb[0].mxu0
    %v1376 = vadd.f32 0.0, %v1375
    %v1377 = vpop.f32.mrb[0].mxu0
    %v1378 = vadd.f32 0.0, %v1377
    %1379 = vdwg.mxu0
    %v1380 = vadd.f32 %v1372, %v1259
    %v1381 = vadd.f32 %v1376, %v1260
    %v1382 = vxor.u32 %v1380, 2147483648
    %v1383 = vxor.u32 %v1381, 2147483648
    %v1384 = vmul.f32 %v1382, 1.442695
    %v1385 = vpow.pop %v1384
    %v1386 = vmul.f32 %v1383, 1.442695
    %v1387 = vpow.pop %v1386
    %v1388 = vadd.f32 %v1385, 1.0
    %v1389 = vadd.f32 %v1387, 1.0
    %v1390 = vrcp.pop %v1388
    %v1391 = vmul.f32 1.0, %v1390
    %v1392 = vrcp.pop %v1389
    %v1393 = vmul.f32 1.0, %v1392
    %v1395 = vlaneseq
    %v1396 = vshrl.u32 %v1395, 7
    %v1397 = vsub.s32 0, %v1396
    %v1398 = vrot.slane %v88, %v1397
    %v1400 = vadd.f32 %v1374, %v1398
    %v1401 = vadd.f32 %v1378, %v1398
    %v1402 = vmul.f32 %v1391, %v1400
    %v1403 = vmul.f32 %v1393, %v1401
    %v1404 = vadd.f32 %v1277, %v1402
    %v1405 = vadd.f32 %v1278, %v1403
    %v1406 = vtanh.pop %v1404
    %v1407 = vtanh.pop %v1405
    %v1408 = vsub.f32 0.0, %v1406
    %v1409 = vsub.f32 0.0, %v1407
    %1412 = vrot.lane.b32.xlu0 %v1408, 64
    %v1413 = vpop.permute.xlu0 %1412
    %1414 = vrot.lane.b32.xlu0 %v1409, 64
    %v1415 = vpop.permute.xlu0 %1414
    %v1418 = vmul.f32 %v1391, %v1413
    %v1419 = vmul.f32 %v1393, %v1415
    %1422 = vrot.lane.b32.xlu0 %v1406, 64
    %v1423 = vpop.permute.xlu0 %1422
    %1424 = vrot.lane.b32.xlu0 %v1407, 64
    %v1425 = vpop.permute.xlu0 %1424
    %v1428 = vadd.f32 %v1418, %v1423
    %v1429 = vadd.f32 %v1419, %v1425
    %v1430 = vpack.c.bf16 %v1429, %v1428
    %1432 = vrot.lane.b32.xlu0 %v1430, 64
    %v1433 = vpop.permute.xlu0 %1432
    %v1435 = vsel %vm1333, %v1433, 0
    %1437 = vmatprep.subr.bf16.mxu0 %v1318
    %1438 = vmatpush1.bf16.msra.mxu0 %v1317
    %1439 = vmatprep.subr.bf16.mxu0 %v1320
    %1440 = vmatpush1.bf16.msra.mxu0 %v1319
    %1441 = vmatprep.subr.bf16.mxu0 %v1322
    %1442 = vmatpush1.bf16.msra.mxu0 %v1321
    %1443 = vmatprep.subr.bf16.mxu0 %v1324
    %1444 = vmatpush1.bf16.msra.mxu0 %v1323
    %1445 = vmatprep.subr.bf16.mxu0 0
    %1446 = vmatpush1.bf16.msra.mxu0 0
    %1447 = vmatprep.subr.bf16.mxu0 0
    %1448 = vmatpush1.bf16.msra.mxu0 0
    %1449 = vmatprep.subr.bf16.mxu0 0
    %1450 = vmatpush1.bf16.msra.mxu0 0
    %1451 = vmatprep.subr.bf16.mxu0 0
    %1452 = vmatpush1.bf16.msra.mxu0 0
    %1453 = vmatprep.subr.bf16.mxu0 0
    %1454 = vmatpush1.bf16.msra.mxu0 0
    %1455 = vmatprep.subr.bf16.mxu0 0
    %1456 = vmatpush1.bf16.msra.mxu0 0
    %1457 = vmatprep.subr.bf16.mxu0 0
    %1458 = vmatpush1.bf16.msra.mxu0 0
    %1459 = vmatprep.subr.bf16.mxu0 0
    %1460 = vmatpush1.bf16.msra.mxu0 0
    %1461 = vmatprep.subr.bf16.mxu0 0
    %1462 = vmatpush1.bf16.msra.mxu0 0
    %1463 = vmatprep.subr.bf16.mxu0 0
    %1464 = vmatpush1.bf16.msra.mxu0 0
    %1465 = vmatprep.subr.bf16.mxu0 0
    %1466 = vmatpush1.bf16.msra.mxu0 0
    %1467 = vmatprep.subr.bf16.mxu0 0
    %1468 = vmatpush1.bf16.msra.mxu0 0
    %1469 = vmatprep.mubr.bf16.mxu0 0
    %1470 = vmatmul.mubr.bf16.gmra.mrb[0].mxu0 %v1435
    %v1471 = vpop.f32.mrb[0].mxu0
    %v1472 = vadd.f32 0.0, %v1471
    %v1473 = vpop.f32.mrb[0].mxu0
    %v1474 = vadd.f32 0.0, %v1473
    %v1475 = vpop.f32.mrb[0].mxu0
    %v1476 = vadd.f32 0.0, %v1475
    %v1477 = vpop.f32.mrb[0].mxu0
    %v1478 = vadd.f32 0.0, %v1477
    %1479 = vdwg.mxu0
    %v1480 = vadd.f32 %v1472, %v1261
    %v1481 = vadd.f32 %v1476, %v1262
    %v1482 = vxor.u32 %v1480, 2147483648
    %v1483 = vxor.u32 %v1481, 2147483648
    %v1484 = vmul.f32 %v1482, 1.442695
    %v1485 = vpow.pop %v1484
    %v1486 = vmul.f32 %v1483, 1.442695
    %v1487 = vpow.pop %v1486
    %v1488 = vadd.f32 %v1485, 1.0
    %v1489 = vadd.f32 %v1487, 1.0
    %v1490 = vrcp.pop %v1488
    %v1491 = vmul.f32 1.0, %v1490
    %v1492 = vrcp.pop %v1489
    %v1493 = vmul.f32 1.0, %v1492
    %v1494 = vadd.f32 %v1474, %v1398
    %v1495 = vadd.f32 %v1478, %v1398
    %v1496 = vmul.f32 %v1491, %v1494
    %v1497 = vmul.f32 %v1493, %v1495
    %v1498 = vadd.f32 %v1279, %v1496
    %v1499 = vadd.f32 %v1280, %v1497
    %v1500 = vtanh.pop %v1498
    %v1501 = vtanh.pop %v1499
    %1504 = vrot.lane.b32.xlu0 %v1500, 64
    %v1505 = vpop.permute.xlu0 %1504
    %1506 = vrot.lane.b32.xlu0 %v1501, 64
    %v1507 = vpop.permute.xlu0 %1506
    %v1510 = vsub.f32 %v1428, %v1505
    %v1511 = vsub.f32 %v1429, %v1507
    %v1512 = vmul.f32 %v1491, %v1510
    %v1513 = vmul.f32 %v1493, %v1511
    %v1514 = vadd.f32 %v1512, %v1505
    %v1515 = vadd.f32 %v1513, %v1507
    %v1516 = vpack.c.bf16 %v1515, %v1514
    %1518 = vrot.lane.b32.xlu0 %v1516, 64
    %v1519 = vpop.permute.xlu0 %1518
    %v1521 = vsel %vm1333, %v1519, 0
    %1523 = vmatprep.subr.bf16.mxu0 %v1318
    %1524 = vmatpush1.bf16.msra.mxu0 %v1317
    %1525 = vmatprep.subr.bf16.mxu0 %v1320
    %1526 = vmatpush1.bf16.msra.mxu0 %v1319
    %1527 = vmatprep.subr.bf16.mxu0 %v1322
    %1528 = vmatpush1.bf16.msra.mxu0 %v1321
    %1529 = vmatprep.subr.bf16.mxu0 %v1324
    %1530 = vmatpush1.bf16.msra.mxu0 %v1323
    %1531 = vmatprep.subr.bf16.mxu0 0
    %1532 = vmatpush1.bf16.msra.mxu0 0
    %1533 = vmatprep.subr.bf16.mxu0 0
    %1534 = vmatpush1.bf16.msra.mxu0 0
    %1535 = vmatprep.subr.bf16.mxu0 0
    %1536 = vmatpush1.bf16.msra.mxu0 0
    %1537 = vmatprep.subr.bf16.mxu0 0
    %1538 = vmatpush1.bf16.msra.mxu0 0
    %1539 = vmatprep.subr.bf16.mxu0 0
    %1540 = vmatpush1.bf16.msra.mxu0 0
    %1541 = vmatprep.subr.bf16.mxu0 0
    %1542 = vmatpush1.bf16.msra.mxu0 0
    %1543 = vmatprep.subr.bf16.mxu0 0
    %1544 = vmatpush1.bf16.msra.mxu0 0
    %1545 = vmatprep.subr.bf16.mxu0 0
    %1546 = vmatpush1.bf16.msra.mxu0 0
    %1547 = vmatprep.subr.bf16.mxu0 0
    %1548 = vmatpush1.bf16.msra.mxu0 0
    %1549 = vmatprep.subr.bf16.mxu0 0
    %1550 = vmatpush1.bf16.msra.mxu0 0
    %1551 = vmatprep.subr.bf16.mxu0 0
    %1552 = vmatpush1.bf16.msra.mxu0 0
    %1553 = vmatprep.subr.bf16.mxu0 0
    %1554 = vmatpush1.bf16.msra.mxu0 0
    %1555 = vmatprep.mubr.bf16.mxu0 0
    %1556 = vmatmul.mubr.bf16.gmra.mrb[0].mxu0 %v1521
    %v1557 = vpop.f32.mrb[0].mxu0
    %v1558 = vadd.f32 0.0, %v1557
    %v1559 = vpop.f32.mrb[0].mxu0
    %v1560 = vadd.f32 0.0, %v1559
    %v1561 = vpop.f32.mrb[0].mxu0
    %v1562 = vadd.f32 0.0, %v1561
    %v1563 = vpop.f32.mrb[0].mxu0
    %v1564 = vadd.f32 0.0, %v1563
    %1565 = vdwg.mxu0
    %v1566 = vadd.f32 %v1558, %v1263
    %v1567 = vadd.f32 %v1562, %v1264
    %v1568 = vxor.u32 %v1566, 2147483648
    %v1569 = vxor.u32 %v1567, 2147483648
    %v1570 = vmul.f32 %v1568, 1.442695
    %v1571 = vpow.pop %v1570
    %v1572 = vmul.f32 %v1569, 1.442695
    %v1573 = vpow.pop %v1572
    %v1574 = vadd.f32 %v1571, 1.0
    %v1575 = vadd.f32 %v1573, 1.0
    %v1576 = vrcp.pop %v1574
    %v1577 = vmul.f32 1.0, %v1576
    %v1578 = vrcp.pop %v1575
    %v1579 = vmul.f32 1.0, %v1578
    %v1580 = vadd.f32 %v1560, %v1398
    %v1581 = vadd.f32 %v1564, %v1398
    %v1582 = vmul.f32 %v1577, %v1580
    %v1583 = vmul.f32 %v1579, %v1581
    %v1584 = vadd.f32 %v1281, %v1582
    %v1585 = vadd.f32 %v1282, %v1583
    %v1586 = vtanh.pop %v1584
    %v1587 = vtanh.pop %v1585
    %1590 = vrot.lane.b32.xlu0 %v1586, 64
    %v1591 = vpop.permute.xlu0 %1590
    %1592 = vrot.lane.b32.xlu0 %v1587, 64
    %v1593 = vpop.permute.xlu0 %1592
    %v1596 = vsub.f32 %v1514, %v1591
    %v1597 = vsub.f32 %v1515, %v1593
    %v1598 = vmul.f32 %v1577, %v1596
    %v1599 = vmul.f32 %v1579, %v1597
    %v1600 = vadd.f32 %v1598, %v1591
    %v1601 = vadd.f32 %v1599, %v1593
    %v1602 = vpack.c.bf16 %v1601, %v1600
    %1604 = vrot.lane.b32.xlu0 %v1602, 64
    %v1605 = vpop.permute.xlu0 %1604
    %v1607 = vsel %vm1333, %v1605, 0
    %1609 = vmatprep.subr.bf16.mxu0 %v1318
    %1610 = vmatpush1.bf16.msra.mxu0 %v1317
    %1611 = vmatprep.subr.bf16.mxu0 %v1320
    %1612 = vmatpush1.bf16.msra.mxu0 %v1319
    %1613 = vmatprep.subr.bf16.mxu0 %v1322
    %1614 = vmatpush1.bf16.msra.mxu0 %v1321
    %1615 = vmatprep.subr.bf16.mxu0 %v1324
    %1616 = vmatpush1.bf16.msra.mxu0 %v1323
    %1617 = vmatprep.subr.bf16.mxu0 0
    %1618 = vmatpush1.bf16.msra.mxu0 0
    %1619 = vmatprep.subr.bf16.mxu0 0
    %1620 = vmatpush1.bf16.msra.mxu0 0
    %1621 = vmatprep.subr.bf16.mxu0 0
    %1622 = vmatpush1.bf16.msra.mxu0 0
    %1623 = vmatprep.subr.bf16.mxu0 0
    %1624 = vmatpush1.bf16.msra.mxu0 0
    %1625 = vmatprep.subr.bf16.mxu0 0
    %1626 = vmatpush1.bf16.msra.mxu0 0
    %1627 = vmatprep.subr.bf16.mxu0 0
    %1628 = vmatpush1.bf16.msra.mxu0 0
    %1629 = vmatprep.subr.bf16.mxu0 0
    %1630 = vmatpush1.bf16.msra.mxu0 0
    %1631 = vmatprep.subr.bf16.mxu0 0
    %1632 = vmatpush1.bf16.msra.mxu0 0
    %1633 = vmatprep.subr.bf16.mxu0 0
    %1634 = vmatpush1.bf16.msra.mxu0 0
    %1635 = vmatprep.subr.bf16.mxu0 0
    %1636 = vmatpush1.bf16.msra.mxu0 0
    %1637 = vmatprep.subr.bf16.mxu0 0
    %1638 = vmatpush1.bf16.msra.mxu0 0
    %1639 = vmatprep.subr.bf16.mxu0 0
    %1640 = vmatpush1.bf16.msra.mxu0 0
    %1641 = vmatprep.mubr.bf16.mxu0 0
    %1642 = vmatmul.mubr.bf16.gmra.mrb[0].mxu0 %v1607
    %v1643 = vpop.f32.mrb[0].mxu0
    %v1644 = vadd.f32 0.0, %v1643
    %v1645 = vpop.f32.mrb[0].mxu0
    %v1646 = vadd.f32 0.0, %v1645
    %v1647 = vpop.f32.mrb[0].mxu0
    %v1648 = vadd.f32 0.0, %v1647
    %v1649 = vpop.f32.mrb[0].mxu0
    %v1650 = vadd.f32 0.0, %v1649
    %1651 = vdwg.mxu0
    %v1652 = vadd.f32 %v1644, %v1265
    %v1653 = vadd.f32 %v1648, %v1266
    %v1654 = vxor.u32 %v1652, 2147483648
    %v1655 = vxor.u32 %v1653, 2147483648
    %v1656 = vmul.f32 %v1654, 1.442695
    %v1657 = vpow.pop %v1656
    %v1658 = vmul.f32 %v1655, 1.442695
    %v1659 = vpow.pop %v1658
    %v1660 = vadd.f32 %v1657, 1.0
    %v1661 = vadd.f32 %v1659, 1.0
    %v1662 = vrcp.pop %v1660
    %v1663 = vmul.f32 1.0, %v1662
    %v1664 = vrcp.pop %v1661
    %v1665 = vmul.f32 1.0, %v1664
    %v1666 = vadd.f32 %v1646, %v1398
    %v1667 = vadd.f32 %v1650, %v1398
    %v1668 = vmul.f32 %v1663, %v1666
    %v1669 = vmul.f32 %v1665, %v1667
    %v1670 = vadd.f32 %v1283, %v1668
    %v1671 = vadd.f32 %v1284, %v1669
    %v1672 = vtanh.pop %v1670
    %v1673 = vtanh.pop %v1671
    %1676 = vrot.lane.b32.xlu0 %v1672, 64
    %v1677 = vpop.permute.xlu0 %1676
    %1678 = vrot.lane.b32.xlu0 %v1673, 64
    %v1679 = vpop.permute.xlu0 %1678
    %v1682 = vsub.f32 %v1600, %v1677
    %v1683 = vsub.f32 %v1601, %v1679
    %v1684 = vmul.f32 %v1663, %v1682
    %v1685 = vmul.f32 %v1665, %v1683
    %v1686 = vadd.f32 %v1684, %v1677
    %v1687 = vadd.f32 %v1685, %v1679
    %v1688 = vpack.c.bf16 %v1687, %v1686
    %1690 = vrot.lane.b32.xlu0 %v1688, 64
    %v1691 = vpop.permute.xlu0 %1690
    %v1693 = vsel %vm1333, %v1691, 0
    %1695 = vmatprep.subr.bf16.mxu0 %v1318
    %1696 = vmatpush1.bf16.msra.mxu0 %v1317
    %1697 = vmatprep.subr.bf16.mxu0 %v1320
    %1698 = vmatpush1.bf16.msra.mxu0 %v1319
    %1699 = vmatprep.subr.bf16.mxu0 %v1322
    %1700 = vmatpush1.bf16.msra.mxu0 %v1321
    %1701 = vmatprep.subr.bf16.mxu0 %v1324
    %1702 = vmatpush1.bf16.msra.mxu0 %v1323
    %1703 = vmatprep.subr.bf16.mxu0 0
    %1704 = vmatpush1.bf16.msra.mxu0 0
    %1705 = vmatprep.subr.bf16.mxu0 0
    %1706 = vmatpush1.bf16.msra.mxu0 0
    %1707 = vmatprep.subr.bf16.mxu0 0
    %1708 = vmatpush1.bf16.msra.mxu0 0
    %1709 = vmatprep.subr.bf16.mxu0 0
    %1710 = vmatpush1.bf16.msra.mxu0 0
    %1711 = vmatprep.subr.bf16.mxu0 0
    %1712 = vmatpush1.bf16.msra.mxu0 0
    %1713 = vmatprep.subr.bf16.mxu0 0
    %1714 = vmatpush1.bf16.msra.mxu0 0
    %1715 = vmatprep.subr.bf16.mxu0 0
    %1716 = vmatpush1.bf16.msra.mxu0 0
    %1717 = vmatprep.subr.bf16.mxu0 0
    %1718 = vmatpush1.bf16.msra.mxu0 0
    %1719 = vmatprep.subr.bf16.mxu0 0
    %1720 = vmatpush1.bf16.msra.mxu0 0
    %1721 = vmatprep.subr.bf16.mxu0 0
    %1722 = vmatpush1.bf16.msra.mxu0 0
    %1723 = vmatprep.subr.bf16.mxu0 0
    %1724 = vmatpush1.bf16.msra.mxu0 0
    %1725 = vmatprep.subr.bf16.mxu0 0
    %1726 = vmatpush1.bf16.msra.mxu0 0
    %1727 = vmatprep.mubr.bf16.mxu0 0
    %1728 = vmatmul.mubr.bf16.gmra.mrb[0].mxu0 %v1693
    %v1729 = vpop.f32.mrb[0].mxu0
    %v1730 = vadd.f32 0.0, %v1729
    %v1731 = vpop.f32.mrb[0].mxu0
    %v1732 = vadd.f32 0.0, %v1731
    %v1733 = vpop.f32.mrb[0].mxu0
    %v1734 = vadd.f32 0.0, %v1733
    %v1735 = vpop.f32.mrb[0].mxu0
    %v1736 = vadd.f32 0.0, %v1735
    %1737 = vdwg.mxu0
    %v1738 = vadd.f32 %v1730, %v1267
    %v1739 = vadd.f32 %v1734, %v1268
    %v1740 = vxor.u32 %v1738, 2147483648
    %v1741 = vxor.u32 %v1739, 2147483648
    %v1742 = vmul.f32 %v1740, 1.442695
    %v1743 = vpow.pop %v1742
    %v1744 = vmul.f32 %v1741, 1.442695
    %v1745 = vpow.pop %v1744
    %v1746 = vadd.f32 %v1743, 1.0
    %v1747 = vadd.f32 %v1745, 1.0
    %v1748 = vrcp.pop %v1746
    %v1749 = vmul.f32 1.0, %v1748
    %v1750 = vrcp.pop %v1747
    %v1751 = vmul.f32 1.0, %v1750
    %v1752 = vadd.f32 %v1732, %v1398
    %v1753 = vadd.f32 %v1736, %v1398
    %v1754 = vmul.f32 %v1749, %v1752
    %v1755 = vmul.f32 %v1751, %v1753
    %v1756 = vadd.f32 %v1285, %v1754
    %v1757 = vadd.f32 %v1286, %v1755
    %v1758 = vtanh.pop %v1756
    %v1759 = vtanh.pop %v1757
    %1762 = vrot.lane.b32.xlu0 %v1758, 64
    %v1763 = vpop.permute.xlu0 %1762
    %1764 = vrot.lane.b32.xlu0 %v1759, 64
    %v1765 = vpop.permute.xlu0 %1764
    %v1768 = vsub.f32 %v1686, %v1763
    %v1769 = vsub.f32 %v1687, %v1765
    %v1770 = vmul.f32 %v1749, %v1768
    %v1771 = vmul.f32 %v1751, %v1769
    %v1772 = vadd.f32 %v1770, %v1763
    %v1773 = vadd.f32 %v1771, %v1765
    %v1774 = vpack.c.bf16 %v1773, %v1772
    %1776 = vrot.lane.b32.xlu0 %v1774, 64
    %v1777 = vpop.permute.xlu0 %1776
    %v1779 = vsel %vm1333, %v1777, 0
    %1781 = vmatprep.subr.bf16.mxu0 %v1318
    %1782 = vmatpush1.bf16.msra.mxu0 %v1317
    %1783 = vmatprep.subr.bf16.mxu0 %v1320
    %1784 = vmatpush1.bf16.msra.mxu0 %v1319
    %1785 = vmatprep.subr.bf16.mxu0 %v1322
    %1786 = vmatpush1.bf16.msra.mxu0 %v1321
    %1787 = vmatprep.subr.bf16.mxu0 %v1324
    %1788 = vmatpush1.bf16.msra.mxu0 %v1323
    %1789 = vmatprep.subr.bf16.mxu0 0
    %1790 = vmatpush1.bf16.msra.mxu0 0
    %1791 = vmatprep.subr.bf16.mxu0 0
    %1792 = vmatpush1.bf16.msra.mxu0 0
    %1793 = vmatprep.subr.bf16.mxu0 0
    %1794 = vmatpush1.bf16.msra.mxu0 0
    %1795 = vmatprep.subr.bf16.mxu0 0
    %1796 = vmatpush1.bf16.msra.mxu0 0
    %1797 = vmatprep.subr.bf16.mxu0 0
    %1798 = vmatpush1.bf16.msra.mxu0 0
    %1799 = vmatprep.subr.bf16.mxu0 0
    %1800 = vmatpush1.bf16.msra.mxu0 0
    %1801 = vmatprep.subr.bf16.mxu0 0
    %1802 = vmatpush1.bf16.msra.mxu0 0
    %1803 = vmatprep.subr.bf16.mxu0 0
    %1804 = vmatpush1.bf16.msra.mxu0 0
    %1805 = vmatprep.subr.bf16.mxu0 0
    %1806 = vmatpush1.bf16.msra.mxu0 0
    %1807 = vmatprep.subr.bf16.mxu0 0
    %1808 = vmatpush1.bf16.msra.mxu0 0
    %1809 = vmatprep.subr.bf16.mxu0 0
    %1810 = vmatpush1.bf16.msra.mxu0 0
    %1811 = vmatprep.subr.bf16.mxu0 0
    %1812 = vmatpush1.bf16.msra.mxu0 0
    %1813 = vmatprep.mubr.bf16.mxu0 0
    %1814 = vmatmul.mubr.bf16.gmra.mrb[0].mxu0 %v1779
    %v1815 = vpop.f32.mrb[0].mxu0
    %v1816 = vadd.f32 0.0, %v1815
    %v1817 = vpop.f32.mrb[0].mxu0
    %v1818 = vadd.f32 0.0, %v1817
    %v1819 = vpop.f32.mrb[0].mxu0
    %v1820 = vadd.f32 0.0, %v1819
    %v1821 = vpop.f32.mrb[0].mxu0
    %v1822 = vadd.f32 0.0, %v1821
    %1823 = vdwg.mxu0
    %v1824 = vadd.f32 %v1816, %v1269
    %v1825 = vadd.f32 %v1820, %v1270
    %v1826 = vxor.u32 %v1824, 2147483648
    %v1827 = vxor.u32 %v1825, 2147483648
    %v1828 = vmul.f32 %v1826, 1.442695
    %v1829 = vpow.pop %v1828
    %v1830 = vmul.f32 %v1827, 1.442695
    %v1831 = vpow.pop %v1830
    %v1832 = vadd.f32 %v1829, 1.0
    %v1833 = vadd.f32 %v1831, 1.0
    %v1834 = vrcp.pop %v1832
    %v1835 = vmul.f32 1.0, %v1834
    %v1836 = vrcp.pop %v1833
    %v1837 = vmul.f32 1.0, %v1836
    %v1838 = vadd.f32 %v1818, %v1398
    %v1839 = vadd.f32 %v1822, %v1398
    %v1840 = vmul.f32 %v1835, %v1838
    %v1841 = vmul.f32 %v1837, %v1839
    %v1842 = vadd.f32 %v1287, %v1840
    %v1843 = vadd.f32 %v1288, %v1841
    %v1844 = vtanh.pop %v1842
    %v1845 = vtanh.pop %v1843
    %1848 = vrot.lane.b32.xlu0 %v1844, 64
    %v1849 = vpop.permute.xlu0 %1848
    %1850 = vrot.lane.b32.xlu0 %v1845, 64
    %v1851 = vpop.permute.xlu0 %1850
    %v1854 = vsub.f32 %v1772, %v1849
    %v1855 = vsub.f32 %v1773, %v1851
    %v1856 = vmul.f32 %v1835, %v1854
    %v1857 = vmul.f32 %v1837, %v1855
    %v1858 = vadd.f32 %v1856, %v1849
    %v1859 = vadd.f32 %v1857, %v1851
    %v1860 = vpack.c.bf16 %v1859, %v1858
    %1862 = vrot.lane.b32.xlu0 %v1860, 64
    %v1863 = vpop.permute.xlu0 %1862
    %v1865 = vsel %vm1333, %v1863, 0
    %1867 = vmatprep.subr.bf16.mxu0 %v1318
    %1868 = vmatpush1.bf16.msra.mxu0 %v1317
    %1869 = vmatprep.subr.bf16.mxu0 %v1320
    %1870 = vmatpush1.bf16.msra.mxu0 %v1319
    %1871 = vmatprep.subr.bf16.mxu0 %v1322
    %1872 = vmatpush1.bf16.msra.mxu0 %v1321
    %1873 = vmatprep.subr.bf16.mxu0 %v1324
    %1874 = vmatpush1.bf16.msra.mxu0 %v1323
    %1875 = vmatprep.subr.bf16.mxu0 0
    %1876 = vmatpush1.bf16.msra.mxu0 0
    %1877 = vmatprep.subr.bf16.mxu0 0
    %1878 = vmatpush1.bf16.msra.mxu0 0
    %1879 = vmatprep.subr.bf16.mxu0 0
    %1880 = vmatpush1.bf16.msra.mxu0 0
    %1881 = vmatprep.subr.bf16.mxu0 0
    %1882 = vmatpush1.bf16.msra.mxu0 0
    %1883 = vmatprep.subr.bf16.mxu0 0
    %1884 = vmatpush1.bf16.msra.mxu0 0
    %1885 = vmatprep.subr.bf16.mxu0 0
    %1886 = vmatpush1.bf16.msra.mxu0 0
    %1887 = vmatprep.subr.bf16.mxu0 0
    %1888 = vmatpush1.bf16.msra.mxu0 0
    %1889 = vmatprep.subr.bf16.mxu0 0
    %1890 = vmatpush1.bf16.msra.mxu0 0
    %1891 = vmatprep.subr.bf16.mxu0 0
    %1892 = vmatpush1.bf16.msra.mxu0 0
    %1893 = vmatprep.subr.bf16.mxu0 0
    %1894 = vmatpush1.bf16.msra.mxu0 0
    %1895 = vmatprep.subr.bf16.mxu0 0
    %1896 = vmatpush1.bf16.msra.mxu0 0
    %1897 = vmatprep.subr.bf16.mxu0 0
    %1898 = vmatpush1.bf16.msra.mxu0 0
    %1899 = vmatprep.mubr.bf16.mxu0 0
    %1900 = vmatmul.mubr.bf16.gmra.mrb[0].mxu0 %v1865
    %v1901 = vpop.f32.mrb[0].mxu0
    %v1902 = vadd.f32 0.0, %v1901
    %v1903 = vpop.f32.mrb[0].mxu0
    %v1904 = vadd.f32 0.0, %v1903
    %v1905 = vpop.f32.mrb[0].mxu0
    %v1906 = vadd.f32 0.0, %v1905
    %v1907 = vpop.f32.mrb[0].mxu0
    %v1908 = vadd.f32 0.0, %v1907
    %1909 = vdwg.mxu0
    %v1910 = vadd.f32 %v1902, %v1271
    %v1911 = vadd.f32 %v1906, %v1272
    %v1912 = vxor.u32 %v1910, 2147483648
    %v1913 = vxor.u32 %v1911, 2147483648
    %v1914 = vmul.f32 %v1912, 1.442695
    %v1915 = vpow.pop %v1914
    %v1916 = vmul.f32 %v1913, 1.442695
    %v1917 = vpow.pop %v1916
    %v1918 = vadd.f32 %v1915, 1.0
    %v1919 = vadd.f32 %v1917, 1.0
    %v1920 = vrcp.pop %v1918
    %v1921 = vmul.f32 1.0, %v1920
    %v1922 = vrcp.pop %v1919
    %v1923 = vmul.f32 1.0, %v1922
    %v1924 = vadd.f32 %v1904, %v1398
    %v1925 = vadd.f32 %v1908, %v1398
    %v1926 = vmul.f32 %v1921, %v1924
    %v1927 = vmul.f32 %v1923, %v1925
    %v1928 = vadd.f32 %v1289, %v1926
    %v1929 = vadd.f32 %v1290, %v1927
    %v1930 = vtanh.pop %v1928
    %v1931 = vtanh.pop %v1929
    %1934 = vrot.lane.b32.xlu0 %v1930, 64
    %v1935 = vpop.permute.xlu0 %1934
    %1936 = vrot.lane.b32.xlu0 %v1931, 64
    %v1937 = vpop.permute.xlu0 %1936
    %v1940 = vsub.f32 %v1858, %v1935
    %v1941 = vsub.f32 %v1859, %v1937
    %v1942 = vmul.f32 %v1921, %v1940
    %v1943 = vmul.f32 %v1923, %v1941
    %v1944 = vadd.f32 %v1942, %v1935
    %v1945 = vadd.f32 %v1943, %v1937
    %v1946 = vpack.c.bf16 %v1945, %v1944
    %1948 = vrot.lane.b32.xlu0 %v1946, 64
    %v1949 = vpop.permute.xlu0 %1948
    %v1951 = vsel %vm1333, %v1949, 0
    %1953 = vmatprep.subr.bf16.mxu0 %v1318
    %1954 = vmatpush1.bf16.msra.mxu0 %v1317
    %1955 = vmatprep.subr.bf16.mxu0 %v1320
    %1956 = vmatpush1.bf16.msra.mxu0 %v1319
    %1957 = vmatprep.subr.bf16.mxu0 %v1322
    %1958 = vmatpush1.bf16.msra.mxu0 %v1321
    %1959 = vmatprep.subr.bf16.mxu0 %v1324
    %1960 = vmatpush1.bf16.msra.mxu0 %v1323
    %1961 = vmatprep.subr.bf16.mxu0 0
    %1962 = vmatpush1.bf16.msra.mxu0 0
    %1963 = vmatprep.subr.bf16.mxu0 0
    %1964 = vmatpush1.bf16.msra.mxu0 0
    %1965 = vmatprep.subr.bf16.mxu0 0
    %1966 = vmatpush1.bf16.msra.mxu0 0
    %1967 = vmatprep.subr.bf16.mxu0 0
    %1968 = vmatpush1.bf16.msra.mxu0 0
    %1969 = vmatprep.subr.bf16.mxu0 0
    %1970 = vmatpush1.bf16.msra.mxu0 0
    %1971 = vmatprep.subr.bf16.mxu0 0
    %1972 = vmatpush1.bf16.msra.mxu0 0
    %1973 = vmatprep.subr.bf16.mxu0 0
    %1974 = vmatpush1.bf16.msra.mxu0 0
    %1975 = vmatprep.subr.bf16.mxu0 0
    %1976 = vmatpush1.bf16.msra.mxu0 0
    %1977 = vmatprep.subr.bf16.mxu0 0
    %1978 = vmatpush1.bf16.msra.mxu0 0
    %1979 = vmatprep.subr.bf16.mxu0 0
    %1980 = vmatpush1.bf16.msra.mxu0 0
    %1981 = vmatprep.subr.bf16.mxu0 0
    %1982 = vmatpush1.bf16.msra.mxu0 0
    %1983 = vmatprep.subr.bf16.mxu0 0
    %1984 = vmatpush1.bf16.msra.mxu0 0
    %1985 = vmatprep.mubr.bf16.mxu0 0
    %1986 = vmatmul.mubr.bf16.gmra.mrb[0].mxu0 %v1951
    %v1987 = vpop.f32.mrb[0].mxu0
    %v1988 = vadd.f32 0.0, %v1987
    %v1989 = vpop.f32.mrb[0].mxu0
    %v1990 = vadd.f32 0.0, %v1989
    %v1991 = vpop.f32.mrb[0].mxu0
    %v1992 = vadd.f32 0.0, %v1991
    %v1993 = vpop.f32.mrb[0].mxu0
    %v1994 = vadd.f32 0.0, %v1993
    %1995 = vdwg.mxu0
    %v1996 = vadd.f32 %v1988, %v1273
    %v1997 = vadd.f32 %v1992, %v1274
    %v1998 = vxor.u32 %v1996, 2147483648
    %v1999 = vxor.u32 %v1997, 2147483648
    %v2000 = vmul.f32 %v1998, 1.442695
    %v2001 = vpow.pop %v2000
    %v2002 = vmul.f32 %v1999, 1.442695
    %v2003 = vpow.pop %v2002
    %v2004 = vadd.f32 %v2001, 1.0
    %v2005 = vadd.f32 %v2003, 1.0
    %v2006 = vrcp.pop %v2004
    %v2007 = vmul.f32 1.0, %v2006
    %v2008 = vrcp.pop %v2005
    %v2009 = vmul.f32 1.0, %v2008
    %v2010 = vadd.f32 %v1990, %v1398
    %v2011 = vadd.f32 %v1994, %v1398
    %v2012 = vmul.f32 %v2007, %v2010
    %v2013 = vmul.f32 %v2009, %v2011
    %v2014 = vadd.f32 %v1291, %v2012
    %v2015 = vadd.f32 %v1292, %v2013
    %v2016 = vtanh.pop %v2014
    %v2017 = vtanh.pop %v2015
    %2020 = vrot.lane.b32.xlu0 %v2016, 64
    %v2021 = vpop.permute.xlu0 %2020
    %2022 = vrot.lane.b32.xlu0 %v2017, 64
    %v2023 = vpop.permute.xlu0 %2022
    %v2026 = vsub.f32 %v1944, %v2021
    %v2027 = vsub.f32 %v1945, %v2023
    %v2028 = vmul.f32 %v2007, %v2026
    %v2029 = vmul.f32 %v2009, %v2027
    %v2030 = vadd.f32 %v2028, %v2021
    %v2031 = vadd.f32 %v2029, %v2023
    %2034 = vrot.lane.b32.xlu0 %v2030, 96
    %v2035 = vpop.permute.xlu0 %2034
    %2036 = vrot.lane.b32.xlu0 %v2031, 96
    %v2037 = vpop.permute.xlu0 %2036
    %v2040 = vadd.f32 %v1428, %v2035
    %v2041 = vadd.f32 %v1429, %v2037
    %v2042 = vmul.f32 %v2040, 0.5
    %v2043 = vmul.f32 %v2041, 0.5
    %2046 = vrot.lane.b32.xlu0 %v1944, 96
    %v2047 = vpop.permute.xlu0 %2046
    %2048 = vrot.lane.b32.xlu0 %v1945, 96
    %v2049 = vpop.permute.xlu0 %2048
    %v2052 = vadd.f32 %v1514, %v2047
    %v2053 = vadd.f32 %v1515, %v2049
    %v2054 = vmul.f32 %v2052, 0.5
    %v2055 = vmul.f32 %v2053, 0.5
    %2058 = vrot.lane.b32.xlu0 %v1858, 96
    %v2059 = vpop.permute.xlu0 %2058
    %2060 = vrot.lane.b32.xlu0 %v1859, 96
    %v2061 = vpop.permute.xlu0 %2060
    %v2064 = vadd.f32 %v1600, %v2059
    %v2065 = vadd.f32 %v1601, %v2061
    %v2066 = vmul.f32 %v2064, 0.5
    %v2067 = vmul.f32 %v2065, 0.5
    %2070 = vrot.lane.b32.xlu0 %v1772, 96
    %v2071 = vpop.permute.xlu0 %2070
    %2072 = vrot.lane.b32.xlu0 %v1773, 96
    %v2073 = vpop.permute.xlu0 %2072
    %v2076 = vadd.f32 %v1686, %v2071
    %v2077 = vadd.f32 %v1687, %v2073
    %v2078 = vmul.f32 %v2076, 0.5
    %v2079 = vmul.f32 %v2077, 0.5
    %2082 = vrot.lane.b32.xlu0 %v1686, 96
    %v2083 = vpop.permute.xlu0 %2082
    %2084 = vrot.lane.b32.xlu0 %v1687, 96
    %v2085 = vpop.permute.xlu0 %2084
    %v2088 = vadd.f32 %v1772, %v2083
    %v2089 = vadd.f32 %v1773, %v2085
    %v2090 = vmul.f32 %v2088, 0.5
    %v2091 = vmul.f32 %v2089, 0.5
    %2094 = vrot.lane.b32.xlu0 %v1600, 96
    %v2095 = vpop.permute.xlu0 %2094
    %2096 = vrot.lane.b32.xlu0 %v1601, 96
    %v2097 = vpop.permute.xlu0 %2096
    %v2100 = vadd.f32 %v1858, %v2095
    %v2101 = vadd.f32 %v1859, %v2097
    %v2102 = vmul.f32 %v2100, 0.5
    %v2103 = vmul.f32 %v2101, 0.5
    %2106 = vrot.lane.b32.xlu0 %v1514, 96
    %v2107 = vpop.permute.xlu0 %2106
    %2108 = vrot.lane.b32.xlu0 %v1515, 96
    %v2109 = vpop.permute.xlu0 %2108
    %v2112 = vadd.f32 %v1944, %v2107
    %v2113 = vadd.f32 %v1945, %v2109
    %v2114 = vmul.f32 %v2112, 0.5
    %v2115 = vmul.f32 %v2113, 0.5
    %2118 = vrot.lane.b32.xlu0 %v1428, 96
    %v2119 = vpop.permute.xlu0 %2118
    %2120 = vrot.lane.b32.xlu0 %v1429, 96
    %v2121 = vpop.permute.xlu0 %2120
    %v2124 = vadd.f32 %v2030, %v2119
    %v2125 = vadd.f32 %v2031, %v2121
    %v2126 = vmul.f32 %v2124, 0.5
    %v2127 = vmul.f32 %v2125, 0.5
    %v2128 = vpack.c.bf16 %v2043, %v2042
    %v2129 = vpack.c.bf16 %v2055, %v2054
    %v2130 = vpack.c.bf16 %v2067, %v2066
    %v2131 = vpack.c.bf16 %v2079, %v2078
    %v2132 = vpack.c.bf16 %v2091, %v2090
    %v2133 = vpack.c.bf16 %v2103, %v2102
    %v2134 = vpack.c.bf16 %v2115, %v2114
    %v2135 = vpack.c.bf16 %v2127, %v2126
    %v2137 = vlaneseq
    %v2138 = vshrl.u32 %v2137, 7
    %v2139 = vsub.s32 0, %v2138
    %v2140 = vrot.slane %v93, %v2139
    %2150 = vrot.lane.b32.xlu0 %v2128, 64
    %v2151 = vpop.permute.xlu0 %2150
    %2152 = vrot.lane.b32.xlu0 %v2129, 64
    %v2153 = vpop.permute.xlu0 %2152
    %2154 = vrot.lane.b32.xlu0 %v2130, 64
    %v2155 = vpop.permute.xlu0 %2154
    %2156 = vrot.lane.b32.xlu0 %v2131, 64
    %v2157 = vpop.permute.xlu0 %2156
    %2158 = vrot.lane.b32.xlu0 %v2132, 64
    %v2159 = vpop.permute.xlu0 %2158
    %2160 = vrot.lane.b32.xlu0 %v2133, 64
    %v2161 = vpop.permute.xlu0 %2160
    %2162 = vrot.lane.b32.xlu0 %v2134, 64
    %v2163 = vpop.permute.xlu0 %2162
    %2164 = vrot.lane.b32.xlu0 %v2135, 64
    %v2165 = vpop.permute.xlu0 %2164
    %v2170 = vunpack.c.l.b16 %v89
    %v2171 = vunpack.c.l.b16 %v90
    %v2172 = vunpack.c.l.b16 %v91
    %v2173 = vunpack.c.l.b16 %v92
    %v2174 = vpack.c.b16 %v2171, %v2170
    %v2175 = vpack.c.b16 %v2173, %v2172
    %vm2178 = vcmask 261120
    %v2180 = vsel %vm2178, %v2151, 0
    %v2183 = vsel %vm2178, %v2153, 0
    %v2186 = vsel %vm2178, %v2155, 0
    %v2189 = vsel %vm2178, %v2157, 0
    %v2192 = vsel %vm2178, %v2159, 0
    %v2195 = vsel %vm2178, %v2161, 0
    %v2198 = vsel %vm2178, %v2163, 0
    %v2201 = vsel %vm2178, %v2165, 0
    %2203 = vmatprep.subr.bf16.mxu0 0
    %2204 = vmatpush1.bf16.msra.mxu0 %v2174
    %2205 = vmatprep.subr.bf16.mxu0 0
    %2206 = vmatpush1.bf16.msra.mxu0 %v2175
    %2207 = vmatprep.subr.bf16.mxu0 0
    %2208 = vmatpush1.bf16.msra.mxu0 0
    %2209 = vmatprep.subr.bf16.mxu0 0
    %2210 = vmatpush1.bf16.msra.mxu0 0
    %2211 = vmatprep.subr.bf16.mxu0 0
    %2212 = vmatpush1.bf16.msra.mxu0 0
    %2213 = vmatprep.subr.bf16.mxu0 0
    %2214 = vmatpush1.bf16.msra.mxu0 0
    %2215 = vmatprep.subr.bf16.mxu0 0
    %2216 = vmatpush1.bf16.msra.mxu0 0
    %2217 = vmatprep.subr.bf16.mxu0 0
    %2218 = vmatpush1.bf16.msra.mxu0 0
    %2219 = vmatprep.subr.bf16.mxu0 0
    %2220 = vmatpush1.bf16.msra.mxu0 0
    %2221 = vmatprep.subr.bf16.mxu0 0
    %2222 = vmatpush1.bf16.msra.mxu0 0
    %2223 = vmatprep.subr.bf16.mxu0 0
    %2224 = vmatpush1.bf16.msra.mxu0 0
    %2225 = vmatprep.subr.bf16.mxu0 0
    %2226 = vmatpush1.bf16.msra.mxu0 0
    %2227 = vmatprep.subr.bf16.mxu0 0
    %2228 = vmatpush1.bf16.msra.mxu0 0
    %2229 = vmatprep.subr.bf16.mxu0 0
    %2230 = vmatpush1.bf16.msra.mxu0 0
    %2231 = vmatprep.subr.bf16.mxu0 0
    %2232 = vmatpush1.bf16.msra.mxu0 0
    %2233 = vmatprep.subr.bf16.mxu0 0
    %2234 = vmatpush1.bf16.msra.mxu0 0
    %2235 = vmatprep.mubr.bf16.mxu0 0
    %2236 = vmatmul.mubr.bf16.gmra.mrb[0].mxu0 %v2180
    %v2237 = vpop.f32.mrb[0].mxu0
    %v2238 = vadd.f32 %v2140, %v2237
    %v2239 = vpop.f32.mrb[0].mxu0
    %v2240 = vpop.f32.mrb[0].mxu0
    %v2241 = vadd.f32 %v2140, %v2240
    %v2242 = vpop.f32.mrb[0].mxu0
    %2243 = vmatprep.mubr.bf16.mxu0 0
    %2244 = vmatmul.mubr.bf16.gmra.mrb[0].mxu0 %v2183
    %v2245 = vpop.f32.mrb[0].mxu0
    %v2246 = vadd.f32 %v2140, %v2245
    %v2247 = vpop.f32.mrb[0].mxu0
    %v2248 = vpop.f32.mrb[0].mxu0
    %v2249 = vadd.f32 %v2140, %v2248
    %v2250 = vpop.f32.mrb[0].mxu0
    %2251 = vmatprep.mubr.bf16.mxu0 0
    %2252 = vmatmul.mubr.bf16.gmra.mrb[0].mxu0 %v2186
    %v2253 = vpop.f32.mrb[0].mxu0
    %v2254 = vadd.f32 %v2140, %v2253
    %v2255 = vpop.f32.mrb[0].mxu0
    %v2256 = vpop.f32.mrb[0].mxu0
    %v2257 = vadd.f32 %v2140, %v2256
    %v2258 = vpop.f32.mrb[0].mxu0
    %2259 = vmatprep.mubr.bf16.mxu0 0
    %2260 = vmatmul.mubr.bf16.gmra.mrb[0].mxu0 %v2189
    %v2261 = vpop.f32.mrb[0].mxu0
    %v2262 = vadd.f32 %v2140, %v2261
    %v2263 = vpop.f32.mrb[0].mxu0
    %v2264 = vpop.f32.mrb[0].mxu0
    %v2265 = vadd.f32 %v2140, %v2264
    %v2266 = vpop.f32.mrb[0].mxu0
    %2267 = vmatprep.mubr.bf16.mxu0 0
    %2268 = vmatmul.mubr.bf16.gmra.mrb[0].mxu0 %v2192
    %v2269 = vpop.f32.mrb[0].mxu0
    %v2270 = vadd.f32 %v2140, %v2269
    %v2271 = vpop.f32.mrb[0].mxu0
    %v2272 = vpop.f32.mrb[0].mxu0
    %v2273 = vadd.f32 %v2140, %v2272
    %v2274 = vpop.f32.mrb[0].mxu0
    %2275 = vmatprep.mubr.bf16.mxu0 0
    %2276 = vmatmul.mubr.bf16.gmra.mrb[0].mxu0 %v2195
    %v2277 = vpop.f32.mrb[0].mxu0
    %v2278 = vadd.f32 %v2140, %v2277
    %v2279 = vpop.f32.mrb[0].mxu0
    %v2280 = vpop.f32.mrb[0].mxu0
    %v2281 = vadd.f32 %v2140, %v2280
    %v2282 = vpop.f32.mrb[0].mxu0
    %2283 = vmatprep.mubr.bf16.mxu0 0
    %2284 = vmatmul.mubr.bf16.gmra.mrb[0].mxu0 %v2198
    %v2285 = vpop.f32.mrb[0].mxu0
    %v2286 = vadd.f32 %v2140, %v2285
    %v2287 = vpop.f32.mrb[0].mxu0
    %v2288 = vpop.f32.mrb[0].mxu0
    %v2289 = vadd.f32 %v2140, %v2288
    %v2290 = vpop.f32.mrb[0].mxu0
    %2291 = vmatprep.mubr.bf16.mxu0 0
    %2292 = vmatmul.mubr.bf16.gmra.mrb[0].mxu0 %v2201
    %v2293 = vpop.f32.mrb[0].mxu0
    %v2294 = vadd.f32 %v2140, %v2293
    %v2295 = vpop.f32.mrb[0].mxu0
    %v2296 = vpop.f32.mrb[0].mxu0
    %v2297 = vadd.f32 %v2140, %v2296
    %v2298 = vpop.f32.mrb[0].mxu0
    %2299 = vdwg.mxu0
    %v2300 = vmax.f32 %v2238, 0.0
    %v2301 = vmax.f32 %v2241, 0.0
    %v2302 = vmax.f32 %v2246, 0.0
    %v2303 = vmax.f32 %v2249, 0.0
    %v2304 = vmax.f32 %v2254, 0.0
    %v2305 = vmax.f32 %v2257, 0.0
    %v2306 = vmax.f32 %v2262, 0.0
    %v2307 = vmax.f32 %v2265, 0.0
    %v2308 = vmax.f32 %v2270, 0.0
    %v2309 = vmax.f32 %v2273, 0.0
    %v2310 = vmax.f32 %v2278, 0.0
    %v2311 = vmax.f32 %v2281, 0.0
    %v2312 = vmax.f32 %v2286, 0.0
    %v2313 = vmax.f32 %v2289, 0.0
    %v2314 = vmax.f32 %v2294, 0.0
    %v2315 = vmax.f32 %v2297, 0.0
    %v2316 = vmul.f32 %v2300, %v677
    %v2317 = vmul.f32 %v2301, %v680
    %v2318 = vsub.f32 1.0, %v677
    %v2319 = vsub.f32 1.0, %v680
    %v2320 = vsub.f32 %v2316, %v2318
    %v2321 = vsub.f32 %v2317, %v2319
    %v2322 = vmul.f32 %v2302, %v683
    %v2323 = vmul.f32 %v2303, %v686
    %v2324 = vsub.f32 1.0, %v683
    %v2325 = vsub.f32 1.0, %v686
    %v2326 = vsub.f32 %v2322, %v2324
    %v2327 = vsub.f32 %v2323, %v2325
    %v2328 = vmax.f32 %v2320, %v2326
    %v2329 = vmax.f32 %v2321, %v2327
    %v2330 = vmul.f32 %v2304, %v689
    %v2331 = vmul.f32 %v2305, %v692
    %v2332 = vsub.f32 1.0, %v689
    %v2333 = vsub.f32 1.0, %v692
    %v2334 = vsub.f32 %v2330, %v2332
    %v2335 = vsub.f32 %v2331, %v2333
    %v2336 = vmax.f32 %v2328, %v2334
    %v2337 = vmax.f32 %v2329, %v2335
    %v2338 = vmul.f32 %v2306, %v695
    %v2339 = vmul.f32 %v2307, %v698
    %v2340 = vsub.f32 1.0, %v695
    %v2341 = vsub.f32 1.0, %v698
    %v2342 = vsub.f32 %v2338, %v2340
    %v2343 = vsub.f32 %v2339, %v2341
    %v2344 = vmax.f32 %v2336, %v2342
    %v2345 = vmax.f32 %v2337, %v2343
    %v2346 = vmul.f32 %v2308, %v701
    %v2347 = vmul.f32 %v2309, %v704
    %v2348 = vsub.f32 1.0, %v701
    %v2349 = vsub.f32 1.0, %v704
    %v2350 = vsub.f32 %v2346, %v2348
    %v2351 = vsub.f32 %v2347, %v2349
    %v2352 = vmax.f32 %v2344, %v2350
    %v2353 = vmax.f32 %v2345, %v2351
    %v2354 = vmul.f32 %v2310, %v707
    %v2355 = vmul.f32 %v2311, %v710
    %v2356 = vsub.f32 1.0, %v707
    %v2357 = vsub.f32 1.0, %v710
    %v2358 = vsub.f32 %v2354, %v2356
    %v2359 = vsub.f32 %v2355, %v2357
    %v2360 = vmax.f32 %v2352, %v2358
    %v2361 = vmax.f32 %v2353, %v2359
    %v2362 = vmul.f32 %v2312, %v713
    %v2363 = vmul.f32 %v2313, %v716
    %v2364 = vsub.f32 1.0, %v713
    %v2365 = vsub.f32 1.0, %v716
    %v2366 = vsub.f32 %v2362, %v2364
    %v2367 = vsub.f32 %v2363, %v2365
    %v2368 = vmax.f32 %v2360, %v2366
    %v2369 = vmax.f32 %v2361, %v2367
    %v2370 = vmul.f32 %v2314, %v719
    %v2371 = vmul.f32 %v2315, %v722
    %v2372 = vsub.f32 1.0, %v719
    %v2373 = vsub.f32 1.0, %v722
    %v2374 = vsub.f32 %v2370, %v2372
    %v2375 = vsub.f32 %v2371, %v2373
    %v2376 = vmax.f32 %v2368, %v2374
    %v2377 = vmax.f32 %v2369, %v2375
    %v2380 = vcombine.high %v2376, %v2376
    %v2381 = vcombine.high %v2377, %v2377
    %vm2384 = vcmp.ne.f32.partialorder %v2376, -1.0
    %vm2385 = vcmp.ne.f32.partialorder %v2380, -1.0
    %vm2386 = vcmp.ne.f32.partialorder %v2377, -1.0
    %vm2387 = vcmp.ne.f32.partialorder %v2381, -1.0
    %v2388 = vsel %vm2384, 1.0, 0.0
    %v2389 = vsel %vm2385, 1.0, 0.0
    %v2390 = vsel %vm2386, 1.0, 0.0
    %v2391 = vsel %vm2387, 1.0, 0.0
    %vm2392 = vcmask 257024
    %v2393 = vsel %vm2392, %v2388, inf
    %2394 = vmin.xlane.f32.xlu0 %v2393
    %v2395 = vpop.xlane.xlu0 %2394
    %v2396 = vsel %vm2392, %v2389, inf
    %2397 = vmin.xlane.f32.xlu0 %v2396
    %v2398 = vpop.xlane.xlu0 %2397
    %v2399 = vsel %vm2392, %v2390, inf
    %2400 = vmin.xlane.f32.xlu0 %v2399
    %v2401 = vpop.xlane.xlu0 %2400
    %v2402 = vsel %vm2392, %v2391, inf
    %2403 = vmin.xlane.f32.xlu0 %v2402
    %v2404 = vpop.xlane.xlu0 %2403
    %v2405 = vpack.c.bf16 %v2377, %v2376
    %v2407 = vlaneseq
    %v2408 = vshrl.u32 %v2407, 7
    %v2409 = vsub.s32 0, %v2408
    %v2410 = vrot.slane %v106, %v2409
    %v2411 = vlaneseq
    %v2412 = vshrl.u32 %v2411, 7
    %v2413 = vsub.s32 1, %v2412
    %v2414 = vrot.slane %v106, %v2413
    %v2421 = vunpack.c.l.b16 %v94
    %v2422 = vunpack.c.h.b16 %v94
    %v2423 = vunpack.c.l.b16 %v95
    %v2424 = vunpack.c.h.b16 %v95
    %v2425 = vunpack.c.l.b16 %v96
    %v2426 = vunpack.c.h.b16 %v96
    %v2427 = vunpack.c.l.b16 %v97
    %v2428 = vunpack.c.h.b16 %v97
    %v2429 = vpack.c.b16 %v2423, %v2421
    %v2430 = vpack.c.b16 %v2424, %v2422
    %v2431 = vpack.c.b16 %v2427, %v2425
    %v2432 = vpack.c.b16 %v2428, %v2426
    %v2438 = vsel %vm2178, %v2405, 0
    %2440 = vmatprep.subr.bf16.mxu0 %v2430
    %2441 = vmatpush1.bf16.msra.mxu0 %v2429
    %2442 = vmatprep.subr.bf16.mxu0 %v2432
    %2443 = vmatpush1.bf16.msra.mxu0 %v2431
    %2444 = vmatprep.subr.bf16.mxu0 0
    %2445 = vmatpush1.bf16.msra.mxu0 0
    %2446 = vmatprep.subr.bf16.mxu0 0
    %2447 = vmatpush1.bf16.msra.mxu0 0
    %2448 = vmatprep.subr.bf16.mxu0 0
    %2449 = vmatpush1.bf16.msra.mxu0 0
    %2450 = vmatprep.subr.bf16.mxu0 0
    %2451 = vmatpush1.bf16.msra.mxu0 0
    %2452 = vmatprep.subr.bf16.mxu0 0
    %2453 = vmatpush1.bf16.msra.mxu0 0
    %2454 = vmatprep.subr.bf16.mxu0 0
    %2455 = vmatpush1.bf16.msra.mxu0 0
    %2456 = vmatprep.subr.bf16.mxu0 0
    %2457 = vmatpush1.bf16.msra.mxu0 0
    %2458 = vmatprep.subr.bf16.mxu0 0
    %2459 = vmatpush1.bf16.msra.mxu0 0
    %2460 = vmatprep.subr.bf16.mxu0 0
    %2461 = vmatpush1.bf16.msra.mxu0 0
    %2462 = vmatprep.subr.bf16.mxu0 0
    %2463 = vmatpush1.bf16.msra.mxu0 0
    %2464 = vmatprep.subr.bf16.mxu0 0
    %2465 = vmatpush1.bf16.msra.mxu0 0
    %2466 = vmatprep.subr.bf16.mxu0 0
    %2467 = vmatpush1.bf16.msra.mxu0 0
    %2468 = vmatprep.subr.bf16.mxu0 0
    %2469 = vmatpush1.bf16.msra.mxu0 0
    %2470 = vmatprep.subr.bf16.mxu0 0
    %2471 = vmatpush1.bf16.msra.mxu0 0
    %2472 = vmatprep.mubr.bf16.mxu0 0
    %2473 = vmatmul.mubr.bf16.gmra.mrb[0].mxu0 %v2438
    %v2474 = vpop.f32.mrb[0].mxu0
    %v2475 = vadd.f32 %v2410, %v2474
    %v2476 = vpop.f32.mrb[0].mxu0
    %v2477 = vadd.f32 %v2414, %v2476
    %v2478 = vpop.f32.mrb[0].mxu0
    %v2479 = vadd.f32 %v2410, %v2478
    %v2480 = vpop.f32.mrb[0].mxu0
    %v2481 = vadd.f32 %v2414, %v2480
    %2482 = vdwg.mxu0
    %v2487 = vcombine.low %v2475, %v2477
    %v2488 = vcombine.high %v2475, %v2477
    %v2489 = vcombine.low %v2479, %v2481
    %v2490 = vcombine.high %v2479, %v2481
    %v2495 = vsel %vm1258, %v2487, %v2490
    %v2496 = vsel %vm1258, %v2488, %v2489
    %v2497 = vsel %vm1258, %v2489, %v2488
    %v2498 = vsel %vm1258, %v2490, %v2487
    %v2499 = vrot.slane %v2487, 4
    %v2501 = vrot.slane %v2490, 4
    %v2503 = vsel %vm1276, %v2499, %v2501
    %v2504 = vrot.slane %v2488, 4
    %v2506 = vrot.slane %v2489, 4
    %v2508 = vsel %vm1276, %v2504, %v2506
    %v2509 = vsel %vm1276, %v2506, %v2504
    %v2510 = vsel %vm1276, %v2501, %v2499
    %v2519 = vunpack.c.l.b16 %v98
    %v2520 = vunpack.c.h.b16 %v98
    %v2521 = vunpack.c.l.b16 %v99
    %v2522 = vunpack.c.h.b16 %v99
    %v2523 = vunpack.c.l.b16 %v100
    %v2524 = vunpack.c.h.b16 %v100
    %v2525 = vunpack.c.l.b16 %v101
    %v2526 = vunpack.c.h.b16 %v101
    %v2527 = vunpack.c.l.b16 %v102
    %v2528 = vunpack.c.h.b16 %v102
    %v2529 = vunpack.c.l.b16 %v103
    %v2530 = vunpack.c.h.b16 %v103
    %v2531 = vunpack.c.l.b16 %v104
    %v2532 = vunpack.c.h.b16 %v104
    %v2533 = vunpack.c.l.b16 %v105
    %v2534 = vunpack.c.h.b16 %v105
    %v2535 = vpack.c.b16 %v2521, %v2519
    %v2536 = vpack.c.b16 %v2522, %v2520
    %v2537 = vpack.c.b16 %v2525, %v2523
    %v2538 = vpack.c.b16 %v2526, %v2524
    %v2539 = vpack.c.b16 %v2529, %v2527
    %v2540 = vpack.c.b16 %v2530, %v2528
    %v2541 = vpack.c.b16 %v2533, %v2531
    %v2542 = vpack.c.b16 %v2534, %v2532
    %2551 = vmatprep.subr.bf16.mxu0 %v2536
    %2552 = vmatpush1.bf16.msra.mxu0 %v2535
    %2553 = vmatprep.subr.bf16.mxu0 %v2538
    %2554 = vmatpush1.bf16.msra.mxu0 %v2537
    %2555 = vmatprep.subr.bf16.mxu0 %v2540
    %2556 = vmatpush1.bf16.msra.mxu0 %v2539
    %2557 = vmatprep.subr.bf16.mxu0 %v2542
    %2558 = vmatpush1.bf16.msra.mxu0 %v2541
    %2559 = vmatprep.subr.bf16.mxu0 0
    %2560 = vmatpush1.bf16.msra.mxu0 0
    %2561 = vmatprep.subr.bf16.mxu0 0
    %2562 = vmatpush1.bf16.msra.mxu0 0
    %2563 = vmatprep.subr.bf16.mxu0 0
    %2564 = vmatpush1.bf16.msra.mxu0 0
    %2565 = vmatprep.subr.bf16.mxu0 0
    %2566 = vmatpush1.bf16.msra.mxu0 0
    %2567 = vmatprep.subr.bf16.mxu0 0
    %2568 = vmatpush1.bf16.msra.mxu0 0
    %2569 = vmatprep.subr.bf16.mxu0 0
    %2570 = vmatpush1.bf16.msra.mxu0 0
    %2571 = vmatprep.subr.bf16.mxu0 0
    %2572 = vmatpush1.bf16.msra.mxu0 0
    %2573 = vmatprep.subr.bf16.mxu0 0
    %2574 = vmatpush1.bf16.msra.mxu0 0
    %2575 = vmatprep.subr.bf16.mxu0 0
    %2576 = vmatpush1.bf16.msra.mxu0 0
    %2577 = vmatprep.subr.bf16.mxu0 0
    %2578 = vmatpush1.bf16.msra.mxu0 0
    %2579 = vmatprep.subr.bf16.mxu0 0
    %2580 = vmatpush1.bf16.msra.mxu0 0
    %2581 = vmatprep.subr.bf16.mxu0 0
    %2582 = vmatpush1.bf16.msra.mxu0 0
    %2583 = vmatprep.mubr.bf16.mxu0 0
    %2584 = vmatmul.mubr.bf16.gmra.mrb[0].mxu0 %v1335
    %v2585 = vpop.f32.mrb[0].mxu0
    %v2586 = vadd.f32 0.0, %v2585
    %v2587 = vpop.f32.mrb[0].mxu0
    %v2588 = vadd.f32 0.0, %v2587
    %v2589 = vpop.f32.mrb[0].mxu0
    %v2590 = vpop.f32.mrb[0].mxu0
    %2591 = vdwg.mxu0
    %v2592 = vadd.f32 %v2586, %v2495
    %v2593 = vxor.u32 %v2592, 2147483648
    %v2594 = vmul.f32 %v2593, 1.442695
    %v2595 = vpow.pop %v2594
    %v2596 = vadd.f32 %v2595, 1.0
    %v2597 = vrcp.pop %v2596
    %v2598 = vmul.f32 1.0, %v2597
    %v2600 = vlaneseq
    %v2601 = vshrl.u32 %v2600, 7
    %v2602 = vsub.s32 0, %v2601
    %v2603 = vrot.slane %v107, %v2602
    %v2605 = vadd.f32 %v2588, %v2603
    %v2606 = vmul.f32 %v2598, %v2605
    %v2607 = vadd.f32 %v2503, %v2606
    %v2608 = vtanh.pop %v2607
    %v2609 = vsub.f32 0.0, %v2608
    %2611 = vrot.lane.b32.xlu0 %v2609, 64
    %v2612 = vpop.permute.xlu0 %2611
    %v2614 = vmul.f32 %v2598, %v2612
    %2616 = vrot.lane.b32.xlu0 %v2608, 64
    %v2617 = vpop.permute.xlu0 %2616
    %v2619 = vadd.f32 %v2614, %v2617
    %v2620 = vpack.c.bf16 %v2619, %v2619
    %2622 = vrot.lane.b32.xlu0 %v2620, 64
    %v2623 = vpop.permute.xlu0 %2622
    %v2625 = vsel %vm1333, %v2623, 0
    %2627 = vmatprep.subr.bf16.mxu0 %v2536
    %2628 = vmatpush1.bf16.msra.mxu0 %v2535
    %2629 = vmatprep.subr.bf16.mxu0 %v2538
    %2630 = vmatpush1.bf16.msra.mxu0 %v2537
    %2631 = vmatprep.subr.bf16.mxu0 %v2540
    %2632 = vmatpush1.bf16.msra.mxu0 %v2539
    %2633 = vmatprep.subr.bf16.mxu0 %v2542
    %2634 = vmatpush1.bf16.msra.mxu0 %v2541
    %2635 = vmatprep.subr.bf16.mxu0 0
    %2636 = vmatpush1.bf16.msra.mxu0 0
    %2637 = vmatprep.subr.bf16.mxu0 0
    %2638 = vmatpush1.bf16.msra.mxu0 0
    %2639 = vmatprep.subr.bf16.mxu0 0
    %2640 = vmatpush1.bf16.msra.mxu0 0
    %2641 = vmatprep.subr.bf16.mxu0 0
    %2642 = vmatpush1.bf16.msra.mxu0 0
    %2643 = vmatprep.subr.bf16.mxu0 0
    %2644 = vmatpush1.bf16.msra.mxu0 0
    %2645 = vmatprep.subr.bf16.mxu0 0
    %2646 = vmatpush1.bf16.msra.mxu0 0
    %2647 = vmatprep.subr.bf16.mxu0 0
    %2648 = vmatpush1.bf16.msra.mxu0 0
    %2649 = vmatprep.subr.bf16.mxu0 0
    %2650 = vmatpush1.bf16.msra.mxu0 0
    %2651 = vmatprep.subr.bf16.mxu0 0
    %2652 = vmatpush1.bf16.msra.mxu0 0
    %2653 = vmatprep.subr.bf16.mxu0 0
    %2654 = vmatpush1.bf16.msra.mxu0 0
    %2655 = vmatprep.subr.bf16.mxu0 0
    %2656 = vmatpush1.bf16.msra.mxu0 0
    %2657 = vmatprep.subr.bf16.mxu0 0
    %2658 = vmatpush1.bf16.msra.mxu0 0
    %2659 = vmatprep.mubr.bf16.mxu0 0
    %2660 = vmatmul.mubr.bf16.gmra.mrb[0].mxu0 %v2625
    %v2661 = vpop.f32.mrb[0].mxu0
    %v2662 = vadd.f32 0.0, %v2661
    %v2663 = vpop.f32.mrb[0].mxu0
    %v2664 = vadd.f32 0.0, %v2663
    %v2665 = vpop.f32.mrb[0].mxu0
    %v2666 = vpop.f32.mrb[0].mxu0
    %2667 = vdwg.mxu0
    %v2668 = vadd.f32 %v2662, %v2496
    %v2669 = vxor.u32 %v2668, 2147483648
    %v2670 = vmul.f32 %v2669, 1.442695
    %v2671 = vpow.pop %v2670
    %v2672 = vadd.f32 %v2671, 1.0
    %v2673 = vrcp.pop %v2672
    %v2674 = vmul.f32 1.0, %v2673
    %v2675 = vadd.f32 %v2664, %v2603
    %v2676 = vmul.f32 %v2674, %v2675
    %v2677 = vadd.f32 %v2508, %v2676
    %v2678 = vtanh.pop %v2677
    %2680 = vrot.lane.b32.xlu0 %v2678, 64
    %v2681 = vpop.permute.xlu0 %2680
    %v2683 = vsub.f32 %v2619, %v2681
    %v2684 = vmul.f32 %v2674, %v2683
    %v2685 = vadd.f32 %v2684, %v2681
    %v2686 = vpack.c.bf16 %v2685, %v2685
    %2688 = vrot.lane.b32.xlu0 %v2686, 64
    %v2689 = vpop.permute.xlu0 %2688
    %v2691 = vsel %vm1333, %v2689, 0
    %2693 = vmatprep.subr.bf16.mxu0 %v2536
    %2694 = vmatpush1.bf16.msra.mxu0 %v2535
    %2695 = vmatprep.subr.bf16.mxu0 %v2538
    %2696 = vmatpush1.bf16.msra.mxu0 %v2537
    %2697 = vmatprep.subr.bf16.mxu0 %v2540
    %2698 = vmatpush1.bf16.msra.mxu0 %v2539
    %2699 = vmatprep.subr.bf16.mxu0 %v2542
    %2700 = vmatpush1.bf16.msra.mxu0 %v2541
    %2701 = vmatprep.subr.bf16.mxu0 0
    %2702 = vmatpush1.bf16.msra.mxu0 0
    %2703 = vmatprep.subr.bf16.mxu0 0
    %2704 = vmatpush1.bf16.msra.mxu0 0
    %2705 = vmatprep.subr.bf16.mxu0 0
    %2706 = vmatpush1.bf16.msra.mxu0 0
    %2707 = vmatprep.subr.bf16.mxu0 0
    %2708 = vmatpush1.bf16.msra.mxu0 0
    %2709 = vmatprep.subr.bf16.mxu0 0
    %2710 = vmatpush1.bf16.msra.mxu0 0
    %2711 = vmatprep.subr.bf16.mxu0 0
    %2712 = vmatpush1.bf16.msra.mxu0 0
    %2713 = vmatprep.subr.bf16.mxu0 0
    %2714 = vmatpush1.bf16.msra.mxu0 0
    %2715 = vmatprep.subr.bf16.mxu0 0
    %2716 = vmatpush1.bf16.msra.mxu0 0
    %2717 = vmatprep.subr.bf16.mxu0 0
    %2718 = vmatpush1.bf16.msra.mxu0 0
    %2719 = vmatprep.subr.bf16.mxu0 0
    %2720 = vmatpush1.bf16.msra.mxu0 0
    %2721 = vmatprep.subr.bf16.mxu0 0
    %2722 = vmatpush1.bf16.msra.mxu0 0
    %2723 = vmatprep.subr.bf16.mxu0 0
    %2724 = vmatpush1.bf16.msra.mxu0 0
    %2725 = vmatprep.mubr.bf16.mxu0 0
    %2726 = vmatmul.mubr.bf16.gmra.mrb[0].mxu0 %v2691
    %v2727 = vpop.f32.mrb[0].mxu0
    %v2728 = vadd.f32 0.0, %v2727
    %v2729 = vpop.f32.mrb[0].mxu0
    %v2730 = vadd.f32 0.0, %v2729
    %v2731 = vpop.f32.mrb[0].mxu0
    %v2732 = vpop.f32.mrb[0].mxu0
    %2733 = vdwg.mxu0
    %v2734 = vadd.f32 %v2728, %v2497
    %v2735 = vxor.u32 %v2734, 2147483648
    %v2736 = vmul.f32 %v2735, 1.442695
    %v2737 = vpow.pop %v2736
    %v2738 = vadd.f32 %v2737, 1.0
    %v2739 = vrcp.pop %v2738
    %v2740 = vmul.f32 1.0, %v2739
    %v2741 = vadd.f32 %v2730, %v2603
    %v2742 = vmul.f32 %v2740, %v2741
    %v2743 = vadd.f32 %v2509, %v2742
    %v2744 = vtanh.pop %v2743
    %2746 = vrot.lane.b32.xlu0 %v2744, 64
    %v2747 = vpop.permute.xlu0 %2746
    %v2749 = vsub.f32 %v2685, %v2747
    %v2750 = vmul.f32 %v2740, %v2749
    %v2751 = vadd.f32 %v2750, %v2747
    %v2752 = vpack.c.bf16 %v2751, %v2751
    %2754 = vrot.lane.b32.xlu0 %v2752, 64
    %v2755 = vpop.permute.xlu0 %2754
    %v2757 = vsel %vm1333, %v2755, 0
    %2759 = vmatprep.subr.bf16.mxu0 %v2536
    %2760 = vmatpush1.bf16.msra.mxu0 %v2535
    %2761 = vmatprep.subr.bf16.mxu0 %v2538
    %2762 = vmatpush1.bf16.msra.mxu0 %v2537
    %2763 = vmatprep.subr.bf16.mxu0 %v2540
    %2764 = vmatpush1.bf16.msra.mxu0 %v2539
    %2765 = vmatprep.subr.bf16.mxu0 %v2542
    %2766 = vmatpush1.bf16.msra.mxu0 %v2541
    %2767 = vmatprep.subr.bf16.mxu0 0
    %2768 = vmatpush1.bf16.msra.mxu0 0
    %2769 = vmatprep.subr.bf16.mxu0 0
    %2770 = vmatpush1.bf16.msra.mxu0 0
    %2771 = vmatprep.subr.bf16.mxu0 0
    %2772 = vmatpush1.bf16.msra.mxu0 0
    %2773 = vmatprep.subr.bf16.mxu0 0
    %2774 = vmatpush1.bf16.msra.mxu0 0
    %2775 = vmatprep.subr.bf16.mxu0 0
    %2776 = vmatpush1.bf16.msra.mxu0 0
    %2777 = vmatprep.subr.bf16.mxu0 0
    %2778 = vmatpush1.bf16.msra.mxu0 0
    %2779 = vmatprep.subr.bf16.mxu0 0
    %2780 = vmatpush1.bf16.msra.mxu0 0
    %2781 = vmatprep.subr.bf16.mxu0 0
    %2782 = vmatpush1.bf16.msra.mxu0 0
    %2783 = vmatprep.subr.bf16.mxu0 0
    %2784 = vmatpush1.bf16.msra.mxu0 0
    %2785 = vmatprep.subr.bf16.mxu0 0
    %2786 = vmatpush1.bf16.msra.mxu0 0
    %2787 = vmatprep.subr.bf16.mxu0 0
    %2788 = vmatpush1.bf16.msra.mxu0 0
    %2789 = vmatprep.subr.bf16.mxu0 0
    %2790 = vmatpush1.bf16.msra.mxu0 0
    %2791 = vmatprep.mubr.bf16.mxu0 0
    %2792 = vmatmul.mubr.bf16.gmra.mrb[0].mxu0 %v2757
    %v2793 = vpop.f32.mrb[0].mxu0
    %v2794 = vadd.f32 0.0, %v2793
    %v2795 = vpop.f32.mrb[0].mxu0
    %v2796 = vadd.f32 0.0, %v2795
    %v2797 = vpop.f32.mrb[0].mxu0
    %v2798 = vpop.f32.mrb[0].mxu0
    %2799 = vdwg.mxu0
    %v2800 = vadd.f32 %v2794, %v2498
    %v2801 = vxor.u32 %v2800, 2147483648
    %v2802 = vmul.f32 %v2801, 1.442695
    %v2803 = vpow.pop %v2802
    %v2804 = vadd.f32 %v2803, 1.0
    %v2805 = vrcp.pop %v2804
    %v2806 = vmul.f32 1.0, %v2805
    %v2807 = vadd.f32 %v2796, %v2603
    %v2808 = vmul.f32 %v2806, %v2807
    %v2809 = vadd.f32 %v2510, %v2808
    %v2810 = vtanh.pop %v2809
    %2812 = vrot.lane.b32.xlu0 %v2810, 64
    %v2813 = vpop.permute.xlu0 %2812
    %v2815 = vsub.f32 %v2751, %v2813
    %v2816 = vmul.f32 %v2806, %v2815
    %v2817 = vadd.f32 %v2816, %v2813
    %2819 = vrot.lane.b32.xlu0 %v2817, 96
    %v2820 = vpop.permute.xlu0 %2819
    %v2822 = vadd.f32 %v2619, %v2820
    %v2823 = vmul.f32 %v2822, 0.5
    %2825 = vrot.lane.b32.xlu0 %v2751, 96
    %v2826 = vpop.permute.xlu0 %2825
    %v2828 = vadd.f32 %v2685, %v2826
    %v2829 = vmul.f32 %v2828, 0.5
    %2831 = vrot.lane.b32.xlu0 %v2685, 96
    %v2832 = vpop.permute.xlu0 %2831
    %v2834 = vadd.f32 %v2751, %v2832
    %v2835 = vmul.f32 %v2834, 0.5
    %2837 = vrot.lane.b32.xlu0 %v2619, 96
    %v2838 = vpop.permute.xlu0 %2837
    %v2840 = vadd.f32 %v2817, %v2838
    %v2841 = vmul.f32 %v2840, 0.5
    %v2842 = vmul.f32 %v2823, %v2395
    %v2843 = vsub.f32 1.0, %v2395
    %v2844 = vsub.f32 %v2842, %v2843
    %v2845 = vmul.f32 %v2829, %v2398
    %v2846 = vsub.f32 1.0, %v2398
    %v2847 = vsub.f32 %v2845, %v2846
    %v2848 = vmax.f32 %v2844, %v2847
    %v2849 = vmul.f32 %v2835, %v2401
    %v2850 = vsub.f32 1.0, %v2401
    %v2851 = vsub.f32 %v2849, %v2850
    %v2852 = vmax.f32 %v2848, %v2851
    %v2853 = vmul.f32 %v2841, %v2404
    %v2854 = vsub.f32 1.0, %v2404
    %v2855 = vsub.f32 %v2853, %v2854
    %v2856 = vmax.f32 %v2852, %v2855
    %v2859 = vunpack.c.l.s4 1983009808
    %v2860 = vunpack.c.0.s8 %v2859
    %v2861 = vlaneseq
    %v2862 = vshrl.u32 %v2861, 7
    %v2863 = vsub.s32 %v2860, %v2862
    %v2864 = vrot.slane %v2856, %v2863
    %v2865 = vcombine.high %v2864, %v2864
    %vm2868 = vcmp.ne.f32.partialorder %v2864, -1.0
    %vm2869 = vcmp.ne.f32.partialorder %v2865, -1.0
    %v2870 = vsel %vm2868, 1.0, 0.0
    %v2871 = vsel %vm2869, 1.0, 0.0
    %vm2872 = vcmask 779776
    %v2873 = vsel %vm2872, %v2870, inf
    %2874 = vmin.xlane.f32.xlu0 %v2873
    %v2875 = vpop.xlane.xlu0 %2874
    %v2876 = vsel %vm2872, %v2871, inf
    %2877 = vmin.xlane.f32.xlu0 %v2876
    %v2878 = vpop.xlane.xlu0 %2877
    %v2879 = vpack.c.bf16 %v2856, %v2856
    %v2881 = vlaneseq
    %v2882 = vshrl.u32 %v2881, 7
    %v2883 = vsub.s32 0, %v2882
    %v2884 = vrot.slane %v120, %v2883
    %v2885 = vlaneseq
    %v2886 = vshrl.u32 %v2885, 7
    %v2887 = vsub.s32 1, %v2886
    %v2888 = vrot.slane %v120, %v2887
    %2892 = vrot.lane.b32.xlu0 %v2879, 64
    %v2893 = vpop.permute.xlu0 %2892
    %v2898 = vunpack.c.l.b16 %v108
    %v2899 = vunpack.c.h.b16 %v108
    %v2900 = vunpack.c.l.b16 %v109
    %v2901 = vunpack.c.h.b16 %v109
    %v2902 = vunpack.c.l.b16 %v110
    %v2903 = vunpack.c.h.b16 %v110
    %v2904 = vunpack.c.l.b16 %v111
    %v2905 = vunpack.c.h.b16 %v111
    %v2906 = vpack.c.b16 %v2900, %v2898
    %v2907 = vpack.c.b16 %v2901, %v2899
    %v2908 = vpack.c.b16 %v2904, %v2902
    %v2909 = vpack.c.b16 %v2905, %v2903
    %v2915 = vsel %vm2178, %v2893, 0
    %2917 = vmatprep.subr.bf16.mxu0 %v2907
    %2918 = vmatpush1.bf16.msra.mxu0 %v2906
    %2919 = vmatprep.subr.bf16.mxu0 %v2909
    %2920 = vmatpush1.bf16.msra.mxu0 %v2908
    %2921 = vmatprep.subr.bf16.mxu0 0
    %2922 = vmatpush1.bf16.msra.mxu0 0
    %2923 = vmatprep.subr.bf16.mxu0 0
    %2924 = vmatpush1.bf16.msra.mxu0 0
    %2925 = vmatprep.subr.bf16.mxu0 0
    %2926 = vmatpush1.bf16.msra.mxu0 0
    %2927 = vmatprep.subr.bf16.mxu0 0
    %2928 = vmatpush1.bf16.msra.mxu0 0
    %2929 = vmatprep.subr.bf16.mxu0 0
    %2930 = vmatpush1.bf16.msra.mxu0 0
    %2931 = vmatprep.subr.bf16.mxu0 0
    %2932 = vmatpush1.bf16.msra.mxu0 0
    %2933 = vmatprep.subr.bf16.mxu0 0
    %2934 = vmatpush1.bf16.msra.mxu0 0
    %2935 = vmatprep.subr.bf16.mxu0 0
    %2936 = vmatpush1.bf16.msra.mxu0 0
    %2937 = vmatprep.subr.bf16.mxu0 0
    %2938 = vmatpush1.bf16.msra.mxu0 0
    %2939 = vmatprep.subr.bf16.mxu0 0
    %2940 = vmatpush1.bf16.msra.mxu0 0
    %2941 = vmatprep.subr.bf16.mxu0 0
    %2942 = vmatpush1.bf16.msra.mxu0 0
    %2943 = vmatprep.subr.bf16.mxu0 0
    %2944 = vmatpush1.bf16.msra.mxu0 0
    %2945 = vmatprep.subr.bf16.mxu0 0
    %2946 = vmatpush1.bf16.msra.mxu0 0
    %2947 = vmatprep.subr.bf16.mxu0 0
    %2948 = vmatpush1.bf16.msra.mxu0 0
    %2949 = vmatprep.mubr.bf16.mxu0 0
    %2950 = vmatmul.mubr.bf16.gmra.mrb[0].mxu0 %v2915
    %v2951 = vpop.f32.mrb[0].mxu0
    %v2952 = vadd.f32 %v2884, %v2951
    %v2953 = vpop.f32.mrb[0].mxu0
    %v2954 = vadd.f32 %v2888, %v2953
    %v2955 = vpop.f32.mrb[0].mxu0
    %v2956 = vpop.f32.mrb[0].mxu0
    %2957 = vdwg.mxu0
    %v2960 = vcombine.low %v2952, %v2954
    %v2962 = vunpack.c.l.s4 1983009808
    %v2963 = vunpack.c.0.s8 %v2962
    %v2964 = vlaneseq
    %v2965 = vshrl.u32 %v2964, 7
    %v2966 = vsub.s32 %v2963, %v2965
    %v2967 = vrot.slane %v2960, %v2966
    %v2968 = vcombine.high %v2967, %v2967
    %v2971 = vsel %vm1258, %v2967, %v2968
    %v2972 = vsel %vm1258, %v2968, %v2967
    %v2973 = vrot.slane %v2967, 2
    %v2975 = vrot.slane %v2968, 2
    %v2977 = vsel %vm1276, %v2973, %v2975
    %v2978 = vsel %vm1276, %v2975, %v2973
    %v2987 = vunpack.c.l.b16 %v112
    %v2988 = vunpack.c.h.b16 %v112
    %v2989 = vunpack.c.l.b16 %v113
    %v2990 = vunpack.c.h.b16 %v113
    %v2991 = vunpack.c.l.b16 %v114
    %v2992 = vunpack.c.h.b16 %v114
    %v2993 = vunpack.c.l.b16 %v115
    %v2994 = vunpack.c.h.b16 %v115
    %v2995 = vunpack.c.l.b16 %v116
    %v2996 = vunpack.c.h.b16 %v116
    %v2997 = vunpack.c.l.b16 %v117
    %v2998 = vunpack.c.h.b16 %v117
    %v2999 = vunpack.c.l.b16 %v118
    %v3000 = vunpack.c.h.b16 %v118
    %v3001 = vunpack.c.l.b16 %v119
    %v3002 = vunpack.c.h.b16 %v119
    %v3003 = vpack.c.b16 %v2989, %v2987
    %v3004 = vpack.c.b16 %v2990, %v2988
    %v3005 = vpack.c.b16 %v2993, %v2991
    %v3006 = vpack.c.b16 %v2994, %v2992
    %v3007 = vpack.c.b16 %v2997, %v2995
    %v3008 = vpack.c.b16 %v2998, %v2996
    %v3009 = vpack.c.b16 %v3001, %v2999
    %v3010 = vpack.c.b16 %v3002, %v3000
    %3019 = vmatprep.subr.bf16.mxu0 %v3004
    %3020 = vmatpush1.bf16.msra.mxu0 %v3003
    %3021 = vmatprep.subr.bf16.mxu0 %v3006
    %3022 = vmatpush1.bf16.msra.mxu0 %v3005
    %3023 = vmatprep.subr.bf16.mxu0 %v3008
    %3024 = vmatpush1.bf16.msra.mxu0 %v3007
    %3025 = vmatprep.subr.bf16.mxu0 %v3010
    %3026 = vmatpush1.bf16.msra.mxu0 %v3009
    %3027 = vmatprep.subr.bf16.mxu0 0
    %3028 = vmatpush1.bf16.msra.mxu0 0
    %3029 = vmatprep.subr.bf16.mxu0 0
    %3030 = vmatpush1.bf16.msra.mxu0 0
    %3031 = vmatprep.subr.bf16.mxu0 0
    %3032 = vmatpush1.bf16.msra.mxu0 0
    %3033 = vmatprep.subr.bf16.mxu0 0
    %3034 = vmatpush1.bf16.msra.mxu0 0
    %3035 = vmatprep.subr.bf16.mxu0 0
    %3036 = vmatpush1.bf16.msra.mxu0 0
    %3037 = vmatprep.subr.bf16.mxu0 0
    %3038 = vmatpush1.bf16.msra.mxu0 0
    %3039 = vmatprep.subr.bf16.mxu0 0
    %3040 = vmatpush1.bf16.msra.mxu0 0
    %3041 = vmatprep.subr.bf16.mxu0 0
    %3042 = vmatpush1.bf16.msra.mxu0 0
    %3043 = vmatprep.subr.bf16.mxu0 0
    %3044 = vmatpush1.bf16.msra.mxu0 0
    %3045 = vmatprep.subr.bf16.mxu0 0
    %3046 = vmatpush1.bf16.msra.mxu0 0
    %3047 = vmatprep.subr.bf16.mxu0 0
    %3048 = vmatpush1.bf16.msra.mxu0 0
    %3049 = vmatprep.subr.bf16.mxu0 0
    %3050 = vmatpush1.bf16.msra.mxu0 0
    %3051 = vmatprep.mubr.bf16.mxu0 0
    %3052 = vmatmul.mubr.bf16.gmra.mrb[0].mxu0 %v1335
    %v3053 = vpop.f32.mrb[0].mxu0
    %v3054 = vadd.f32 0.0, %v3053
    %v3055 = vpop.f32.mrb[0].mxu0
    %v3056 = vadd.f32 0.0, %v3055
    %v3057 = vpop.f32.mrb[0].mxu0
    %v3058 = vpop.f32.mrb[0].mxu0
    %3059 = vdwg.mxu0
    %v3060 = vadd.f32 %v3054, %v2971
    %v3061 = vxor.u32 %v3060, 2147483648
    %v3062 = vmul.f32 %v3061, 1.442695
    %v3063 = vpow.pop %v3062
    %v3064 = vadd.f32 %v3063, 1.0
    %v3065 = vrcp.pop %v3064
    %v3066 = vmul.f32 1.0, %v3065
    %v3068 = vlaneseq
    %v3069 = vshrl.u32 %v3068, 7
    %v3070 = vsub.s32 0, %v3069
    %v3071 = vrot.slane %v121, %v3070
    %v3073 = vadd.f32 %v3056, %v3071
    %v3074 = vmul.f32 %v3066, %v3073
    %v3075 = vadd.f32 %v2977, %v3074
    %v3076 = vtanh.pop %v3075
    %v3077 = vsub.f32 0.0, %v3076
    %3079 = vrot.lane.b32.xlu0 %v3077, 64
    %v3080 = vpop.permute.xlu0 %3079
    %v3082 = vmul.f32 %v3066, %v3080
    %3084 = vrot.lane.b32.xlu0 %v3076, 64
    %v3085 = vpop.permute.xlu0 %3084
    %v3087 = vadd.f32 %v3082, %v3085
    %v3088 = vpack.c.bf16 %v3087, %v3087
    %3090 = vrot.lane.b32.xlu0 %v3088, 64
    %v3091 = vpop.permute.xlu0 %3090
    %v3093 = vsel %vm1333, %v3091, 0
    %3095 = vmatprep.subr.bf16.mxu0 %v3004
    %3096 = vmatpush1.bf16.msra.mxu0 %v3003
    %3097 = vmatprep.subr.bf16.mxu0 %v3006
    %3098 = vmatpush1.bf16.msra.mxu0 %v3005
    %3099 = vmatprep.subr.bf16.mxu0 %v3008
    %3100 = vmatpush1.bf16.msra.mxu0 %v3007
    %3101 = vmatprep.subr.bf16.mxu0 %v3010
    %3102 = vmatpush1.bf16.msra.mxu0 %v3009
    %3103 = vmatprep.subr.bf16.mxu0 0
    %3104 = vmatpush1.bf16.msra.mxu0 0
    %3105 = vmatprep.subr.bf16.mxu0 0
    %3106 = vmatpush1.bf16.msra.mxu0 0
    %3107 = vmatprep.subr.bf16.mxu0 0
    %3108 = vmatpush1.bf16.msra.mxu0 0
    %3109 = vmatprep.subr.bf16.mxu0 0
    %3110 = vmatpush1.bf16.msra.mxu0 0
    %3111 = vmatprep.subr.bf16.mxu0 0
    %3112 = vmatpush1.bf16.msra.mxu0 0
    %3113 = vmatprep.subr.bf16.mxu0 0
    %3114 = vmatpush1.bf16.msra.mxu0 0
    %3115 = vmatprep.subr.bf16.mxu0 0
    %3116 = vmatpush1.bf16.msra.mxu0 0
    %3117 = vmatprep.subr.bf16.mxu0 0
    %3118 = vmatpush1.bf16.msra.mxu0 0
    %3119 = vmatprep.subr.bf16.mxu0 0
    %3120 = vmatpush1.bf16.msra.mxu0 0
    %3121 = vmatprep.subr.bf16.mxu0 0
    %3122 = vmatpush1.bf16.msra.mxu0 0
    %3123 = vmatprep.subr.bf16.mxu0 0
    %3124 = vmatpush1.bf16.msra.mxu0 0
    %3125 = vmatprep.subr.bf16.mxu0 0
    %3126 = vmatpush1.bf16.msra.mxu0 0
    %3127 = vmatprep.mubr.bf16.mxu0 0
    %3128 = vmatmul.mubr.bf16.gmra.mrb[0].mxu0 %v3093
    %v3129 = vpop.f32.mrb[0].mxu0
    %v3130 = vadd.f32 0.0, %v3129
    %v3131 = vpop.f32.mrb[0].mxu0
    %v3132 = vadd.f32 0.0, %v3131
    %v3133 = vpop.f32.mrb[0].mxu0
    %v3134 = vpop.f32.mrb[0].mxu0
    %3135 = vdwg.mxu0
    %v3136 = vadd.f32 %v3130, %v2972
    %v3137 = vxor.u32 %v3136, 2147483648
    %v3138 = vmul.f32 %v3137, 1.442695
    %v3139 = vpow.pop %v3138
    %v3140 = vadd.f32 %v3139, 1.0
    %v3141 = vrcp.pop %v3140
    %v3142 = vmul.f32 1.0, %v3141
    %v3143 = vadd.f32 %v3132, %v3071
    %v3144 = vmul.f32 %v3142, %v3143
    %v3145 = vadd.f32 %v2978, %v3144
    %v3146 = vtanh.pop %v3145
    %3148 = vrot.lane.b32.xlu0 %v3146, 64
    %v3149 = vpop.permute.xlu0 %3148
    %v3151 = vsub.f32 %v3087, %v3149
    %v3152 = vmul.f32 %v3142, %v3151
    %v3153 = vadd.f32 %v3152, %v3149
    %3155 = vrot.lane.b32.xlu0 %v3153, 96
    %v3156 = vpop.permute.xlu0 %3155
    %v3158 = vadd.f32 %v3087, %v3156
    %v3159 = vmul.f32 %v3158, 0.5
    %3161 = vrot.lane.b32.xlu0 %v3087, 96
    %v3162 = vpop.permute.xlu0 %3161
    %v3164 = vadd.f32 %v3153, %v3162
    %v3165 = vmul.f32 %v3164, 0.5
    %v3166 = vmul.f32 %v3159, %v2875
    %v3167 = vsub.f32 1.0, %v2875
    %v3168 = vsub.f32 %v3166, %v3167
    %v3169 = vmul.f32 %v3165, %v2878
    %v3170 = vsub.f32 1.0, %v2878
    %v3171 = vsub.f32 %v3169, %v3170
    %v3172 = vmax.f32 %v3168, %v3171
    %v3173 = vpack.c.bf16 %v3172, %v3172
    %v3175 = vlaneseq
    %v3176 = vshrl.u32 %v3175, 7
    %v3177 = vsub.s32 0, %v3176
    %v3178 = vrot.slane %v126, %v3177
    %3181 = vrot.lane.b32.xlu0 %v3173, 64
    %v3182 = vpop.permute.xlu0 %3181
    %v3187 = vunpack.c.l.b16 %v122
    %v3188 = vunpack.c.l.b16 %v123
    %v3189 = vunpack.c.l.b16 %v124
    %v3190 = vunpack.c.l.b16 %v125
    %v3191 = vpack.c.b16 %v3188, %v3187
    %v3192 = vpack.c.b16 %v3190, %v3189
    %v3196 = vsel %vm2178, %v3182, 0
    %3198 = vmatprep.subr.bf16.mxu0 0
    %3199 = vmatpush1.bf16.msra.mxu0 %v3191
    %3200 = vmatprep.subr.bf16.mxu0 0
    %3201 = vmatpush1.bf16.msra.mxu0 %v3192
    %3202 = vmatprep.subr.bf16.mxu0 0
    %3203 = vmatpush1.bf16.msra.mxu0 0
    %3204 = vmatprep.subr.bf16.mxu0 0
    %3205 = vmatpush1.bf16.msra.mxu0 0
    %3206 = vmatprep.subr.bf16.mxu0 0
    %3207 = vmatpush1.bf16.msra.mxu0 0
    %3208 = vmatprep.subr.bf16.mxu0 0
    %3209 = vmatpush1.bf16.msra.mxu0 0
    %3210 = vmatprep.subr.bf16.mxu0 0
    %3211 = vmatpush1.bf16.msra.mxu0 0
    %3212 = vmatprep.subr.bf16.mxu0 0
    %3213 = vmatpush1.bf16.msra.mxu0 0
    %3214 = vmatprep.subr.bf16.mxu0 0
    %3215 = vmatpush1.bf16.msra.mxu0 0
    %3216 = vmatprep.subr.bf16.mxu0 0
    %3217 = vmatpush1.bf16.msra.mxu0 0
    %3218 = vmatprep.subr.bf16.mxu0 0
    %3219 = vmatpush1.bf16.msra.mxu0 0
    %3220 = vmatprep.subr.bf16.mxu0 0
    %3221 = vmatpush1.bf16.msra.mxu0 0
    %3222 = vmatprep.subr.bf16.mxu0 0
    %3223 = vmatpush1.bf16.msra.mxu0 0
    %3224 = vmatprep.subr.bf16.mxu0 0
    %3225 = vmatpush1.bf16.msra.mxu0 0
    %3226 = vmatprep.subr.bf16.mxu0 0
    %3227 = vmatpush1.bf16.msra.mxu0 0
    %3228 = vmatprep.subr.bf16.mxu0 0
    %3229 = vmatpush1.bf16.msra.mxu0 0
    %3230 = vmatprep.mubr.bf16.mxu0 0
    %3231 = vmatmul.mubr.bf16.gmra.mrb[0].mxu0 %v3196
    %v3232 = vpop.f32.mrb[0].mxu0
    %v3233 = vadd.f32 %v3178, %v3232
    %v3234 = vpop.f32.mrb[0].mxu0
    %v3235 = vpop.f32.mrb[0].mxu0
    %v3236 = vpop.f32.mrb[0].mxu0
    %3237 = vdwg.mxu0
    %v3238 = vmax.f32 %v3233, 0.0
    %v3239 = vpack.c.bf16 %v3238, %v3238
    %v3241 = vlaneseq
    %v3242 = vshrl.u32 %v3241, 7
    %v3243 = vsub.s32 0, %v3242
    %v3244 = vrot.slane %v129, %v3243
    %v3248 = vunpack.c.l.b16 %v127
    %v3249 = vunpack.c.l.b16 %v128
    %v3250 = vpack.c.b16 %v3249, %v3248
    %v3253 = vsel %vm674, %v3239, 0
    %3255 = vmatprep.subr.bf16.mxu0 0
    %3256 = vmatpush1.bf16.msra.mxu0 %v3250
    %3257 = vmatprep.subr.bf16.mxu0 0
    %3258 = vmatpush1.bf16.msra.mxu0 0
    %3259 = vmatprep.subr.bf16.mxu0 0
    %3260 = vmatpush1.bf16.msra.mxu0 0
    %3261 = vmatprep.subr.bf16.mxu0 0
    %3262 = vmatpush1.bf16.msra.mxu0 0
    %3263 = vmatprep.subr.bf16.mxu0 0
    %3264 = vmatpush1.bf16.msra.mxu0 0
    %3265 = vmatprep.subr.bf16.mxu0 0
    %3266 = vmatpush1.bf16.msra.mxu0 0
    %3267 = vmatprep.subr.bf16.mxu0 0
    %3268 = vmatpush1.bf16.msra.mxu0 0
    %3269 = vmatprep.subr.bf16.mxu0 0
    %3270 = vmatpush1.bf16.msra.mxu0 0
    %3271 = vmatprep.subr.bf16.mxu0 0
    %3272 = vmatpush1.bf16.msra.mxu0 0
    %3273 = vmatprep.subr.bf16.mxu0 0
    %3274 = vmatpush1.bf16.msra.mxu0 0
    %3275 = vmatprep.subr.bf16.mxu0 0
    %3276 = vmatpush1.bf16.msra.mxu0 0
    %3277 = vmatprep.subr.bf16.mxu0 0
    %3278 = vmatpush1.bf16.msra.mxu0 0
    %3279 = vmatprep.subr.bf16.mxu0 0
    %3280 = vmatpush1.bf16.msra.mxu0 0
    %3281 = vmatprep.subr.bf16.mxu0 0
    %3282 = vmatpush1.bf16.msra.mxu0 0
    %3283 = vmatprep.subr.bf16.mxu0 0
    %3284 = vmatpush1.bf16.msra.mxu0 0
    %3285 = vmatprep.subr.bf16.mxu0 0
    %3286 = vmatpush1.bf16.msra.mxu0 0
    %3287 = vmatprep.mubr.bf16.mxu0 0
    %3288 = vmatmul.mubr.bf16.gmra.mrb[0].mxu0 %v3253
    %v3289 = vpop.f32.mrb[0].mxu0
    %v3290 = vadd.f32 %v3244, %v3289
    %v3291 = vpop.f32.mrb[0].mxu0
    %v3292 = vpop.f32.mrb[0].mxu0
    %v3293 = vpop.f32.mrb[0].mxu0
    %3294 = vdwg.mxu0
    %v3295 = vxor.u32 %v3290, 2147483648
    %v3296 = vmul.f32 %v3295, 1.442695
    %v3297 = vpow.pop %v3296
    %v3298 = vadd.f32 %v3297, 1.0
    %v3299 = vrcp.pop %v3298
    %v3300 = vmul.f32 1.0, %v3299
    %vm3301 = vcmask 1024
    %3302 = vst.msk [vmem:[%s19] sm:$0x3] %vm3301, %v3300
    // Predicated region
    $region82: #{_lambda_.1} parent=1 // pred_check
      _
    $region83: #{_lambda_.1} parent=1 // pred_check_branch
      %3304 = sbr.rel (0) target = $region85
    $region84: #{_lambda_.1} parent=1 // pred_region
      _
    $region85: #{_lambda_.1} parent=1 // pred_fallthru
      _
    // Predicated region
    $region86: #{_lambda_.1} parent=1 // pred_check
      _
    $region87: #{_lambda_.1} parent=1 // pred_check_branch
      %3306 = sbr.rel (0) target = $region89
    $region88: #{_lambda_.1} parent=1 // pred_region
      _
    $region89: #{_lambda_.1} parent=1 // pred_fallthru
      _
    %3307 = vsyncpa [#allocation4], 1

</llo_original>
